<compile_context>
chip_gen: v7x
topology: tpu7x:2x2x1
jax: 0.10.0
libtpu: 0.0.40
codegen_flags: <defaults>
</compile_context>

<pallas_src>
import math
import functools

import jax
import jax.numpy as jnp
from jax import lax
from jax.experimental import pallas as pl
from jax.experimental.pallas import tpu as pltpu


# ----------------------------- Pallas kernel ------------------------------ #

def sakt_kernel(kv_ref, qu_ref, wpkv_ref, wstk_ref, b_ref, out_ref, *,
                heads: int, head_dim: int, window: int, tb: int, dim: int,
                compute_dtype):
    W, D = window, dim
    rows = tb * W

    kv = kv_ref[...].reshape(rows, D)          # (TB*W, D)
    qu = qu_ref[...].reshape(rows, D)          # (TB*W, D)

    gamma = b_ref[0:1, :]                      # (1, D)
    beta = b_ref[1:2, :]
    bq, bk, bv = b_ref[2:3, :], b_ref[3:4, :], b_ref[4:5, :]
    bo, bf1, bf2 = b_ref[5:6, :], b_ref[6:7, :], b_ref[7:8, :]
    wpr_row = b_ref[8:9, :]                    # (1, D)  prediction weight row
    bpr = b_ref[9:10, 0:1]                     # (1, 1)  prediction bias

    def mm(x, w):
        return jnp.dot(x.astype(compute_dtype), w.astype(compute_dtype),
                       preferred_element_type=jnp.float32)

    def layernorm(x):
        mu = jnp.mean(x, axis=-1, keepdims=True)
        var = jnp.mean((x - mu) ** 2, axis=-1, keepdims=True)
        return (x - mu) * lax.rsqrt(var + 1e-5) * gamma + beta

    # Fused kv projections (wider MXU N): [pre_value | pre_key] = kv @ [wp0|wp1]
    vk = mm(kv, wpkv_ref[...])                 # (rows, 2D)
    value = layernorm(vk[:, :D])
    key = layernorm(vk[:, D:])
    query = layernorm(mm(qu, wstk_ref[0]))     # wp2

    # MultiheadAttention in-projections (1/sqrt(hd) folded into wq / bq).
    q_p = mm(query, wstk_ref[1]) + bq
    k_p = mm(key, wstk_ref[2]) + bk
    v_p = mm(value, wstk_ref[3]) + bv
    wo = wstk_ref[4]                           # (D, D)

    q3 = q_p.reshape(tb, W, D)                 # leading-dim split only
    k3 = k_p.reshape(tb, W, D)
    v3 = v_p.reshape(tb, W, D)

    row = lax.broadcasted_iota(jnp.int32, (W, W), 0)
    col = lax.broadcasted_iota(jnp.int32, (W, W), 1)
    causal = (col > row)[None, :, :]           # (1, W, W), True = masked

    # Per-head attention, batched over the batch block with 3-D einsums.
    # heads is a small static unroll; no concatenate (out-proj accumulated).
    atn = jnp.zeros((rows, D), jnp.float32)
    for h in range(heads):
        lo = h * head_dim
        hi = lo + head_dim
        q_h = q3[:, :, lo:hi]
        k_h = k3[:, :, lo:hi]
        v_h = v3[:, :, lo:hi]
        s = jnp.einsum('bqd,bkd->bqk',
                       q_h.astype(compute_dtype), k_h.astype(compute_dtype),
                       preferred_element_type=jnp.float32)
        s = jnp.where(causal, -1e30, s)
        s = s - jnp.max(s, axis=-1, keepdims=True)
        p = jnp.exp(s)
        p = p * pl.reciprocal(jnp.sum(p, axis=-1, keepdims=True), approx=True)
        ctx = jnp.einsum('bqk,bkd->bqd',
                         p.astype(compute_dtype), v_h.astype(compute_dtype),
                         preferred_element_type=jnp.float32)
        atn = atn + mm(ctx.reshape(rows, head_dim), wo[lo:hi, :])
    atn = atn + bo

    # Residual with the (layer-normed) query.
    res = layernorm(atn) + query

    # Feed-forward (Linear -> ReLU -> Linear; dropout = identity in eval).
    h1 = jnp.maximum(mm(res, wstk_ref[5]) + bf1, 0.0)
    ffn = mm(h1, wstk_ref[6]) + bf2

    # Prediction head as VPU multiply + lane reduction (no N=1 MXU matmul),
    # lane-dense (TB, W) output store.
    x2 = ffn + res                                           # (rows, D)
    logits = jnp.sum(x2.reshape(tb, W, D) * wpr_row, axis=-1) + bpr   # (TB, W)
    out_ref[...] = jax.nn.sigmoid(logits)


# ------------------------------ JAX wrapper -------------------------------- #

def pack_params(params, *, dim, heads):
    """One-time parameter packing: fused / stacked weights, scale folded in."""
    head_dim = dim // heads
    scale = 1.0 / math.sqrt(head_dim)
    wpkv = jnp.concatenate([params["wp0"], params["wp1"]], axis=1)     # (D, 2D)
    w_stack = jnp.stack([params["wp2"],
                         params["wq"] * scale,
                         params["wk"],
                         params["wv"],
                         params["wo"],
                         params["wf1"],
                         params["wf2"]], axis=0)                       # (7, D, D)
    bpr_row = jnp.full((1, dim), params["bpr"][0, 0], dtype=jnp.float32)
    b_all = jnp.concatenate([params["ln_g"], params["ln_b"],
                             params["bq"] * scale, params["bk"], params["bv"],
                             params["bo"], params["bf1"], params["bf2"],
                             params["wpr"].T,                          # (1, D)
                             bpr_row], axis=0)                         # (10, D)
    return {"emb_inter": params["emb_inter"],
            "emb_ques": params["emb_ques"],
            "emb_pos": params["emb_pos"],
            "wpkv": wpkv, "w_stack": w_stack, "b_all": b_all}


def sakt_forward(input_in, input_ex, packed, *, window, dim, heads,
                 batch_block=8, compute_dtype=jnp.float32):
    """input_in, input_ex: int32 [B, W].  Returns float32 [B, W, 1]."""
    B, W = input_in.shape
    head_dim = dim // heads

    # --- embedding gathers (glue, plain JAX) ---
    pos_idx = jnp.arange(window) + 1
    position = packed["emb_pos"][pos_idx][None, :, :]                  # (1, W, D)
    interaction = packed["emb_inter"][input_in]                        # (B, W, D)
    key_value = interaction + (interaction != 0).astype(jnp.float32) * position
    question = packed["emb_ques"][input_ex]                            # (B, W, D)

    # Batch blocking: one grid step handles TB batch rows at once.
    tb = B if B <= batch_block else batch_block
    assert B % tb == 0, "batch must be divisible by the batch block"
    grid = (B // tb,)

    # MXU operands optionally pre-cast to bf16 (f32 accumulation in-kernel).
    wpkv = packed["wpkv"].astype(compute_dtype)
    w_stack = packed["w_stack"].astype(compute_dtype)
    b_all = packed["b_all"]                                            # f32

    kernel = functools.partial(sakt_kernel, heads=heads, head_dim=head_dim,
                               window=window, tb=tb, dim=dim,
                               compute_dtype=compute_dtype)

    out2d = pl.pallas_call(
        kernel,
        out_shape=jax.ShapeDtypeStruct((B, W), jnp.float32),
        grid_spec=pltpu.PrefetchScalarGridSpec(
            num_scalar_prefetch=0,
            grid=grid,
            in_specs=[
                pl.BlockSpec((tb, W, dim), lambda b: (b, 0, 0)),
                pl.BlockSpec((tb, W, dim), lambda b: (b, 0, 0)),
                pl.BlockSpec(wpkv.shape, lambda b: (0, 0)),
                pl.BlockSpec(w_stack.shape, lambda b: (0, 0, 0)),
                pl.BlockSpec(b_all.shape, lambda b: (0, 0)),
            ],
            out_specs=pl.BlockSpec((tb, W), lambda b: (b, 0)),
        ),
        compiler_params=pltpu.CompilerParams(
            dimension_semantics=("parallel",)),
    )(key_value, question, wpkv, w_stack, b_all)

    return out2d[..., None]                                            # (B, W, 1)


# --------------------------- reference (pure JAX) -------------------------- #

def sakt_reference(input_in, input_ex, params, *, window, dim, heads):
    head_dim = dim // heads
    pos_idx = jnp.arange(window) + 1
    position = params["emb_pos"][pos_idx][None, :, :]
    interaction = params["emb_inter"][input_in]
    key_value = interaction + (interaction != 0).astype(jnp.float32) * position
    question = params["emb_ques"][input_ex]

    g, b = params["ln_g"], params["ln_b"]

    def ln(x):
        mu = jnp.mean(x, axis=-1, keepdims=True)
        var = jnp.mean((x - mu) ** 2, axis=-1, keepdims=True)
        return (x - mu) * lax.rsqrt(var + 1e-5) * g + b

    mask = jnp.triu(jnp.ones((window, window), bool), k=1)

    def per_batch(kv, qu):
        value = ln(kv @ params["wp0"])
        key = ln(kv @ params["wp1"])
        query = ln(qu @ params["wp2"])
        q_p = query @ params["wq"] + params["bq"]
        k_p = key @ params["wk"] + params["bk"]
        v_p = value @ params["wv"] + params["bv"]
        outs = []
        for h in range(heads):
            sl = slice(h * head_dim, (h + 1) * head_dim)
            s = (q_p[:, sl] @ k_p[:, sl].T) / math.sqrt(head_dim)
            s = jnp.where(mask, -1e30, s)
            p = jax.nn.softmax(s, axis=-1)
            outs.append(p @ v_p[:, sl])
        atn = jnp.concatenate(outs, axis=-1) @ params["wo"] + params["bo"]
        res = ln(atn) + query
        h1 = jnp.maximum(res @ params["wf1"] + params["bf1"], 0.0)
        ffn = h1 @ params["wf2"] + params["bf2"]
        return jax.nn.sigmoid((ffn + res) @ params["wpr"] + params["bpr"])

    return jax.vmap(per_batch)(key_value, question)


# ---------------------------------- main ----------------------------------- #

if __name__ == "__main__":
    # Small, MHA-compatible configuration.
    B, W, D, H = 2, 8, 32, 4
    NUM_SKILLS = 16

    key = jax.random.PRNGKey(0)
    ks = jax.random.split(key, 24)

    def randn(k, shape, scale=0.1):
        return jax.random.normal(k, shape, dtype=jnp.float32) * scale

    # Embedding tables (padding_idx=0 -> zero row).
    emb_inter = randn(ks[0], (2 * NUM_SKILLS + 1, D)).at[0].set(0.0)
    emb_ques = randn(ks[1], (NUM_SKILLS + 1, D)).at[0].set(0.0)
    emb_pos = randn(ks[2], (W + 1, D)).at[0].set(0.0)

    params = {
        "emb_inter": emb_inter,
        "emb_ques": emb_ques,
        "emb_pos": emb_pos,
        # Projection[0..2]: Linear(dim, dim, bias=False); stored as (in, out).
        "wp0": randn(ks[3], (D, D)),
        "wp1": randn(ks[4], (D, D)),
        "wp2": randn(ks[5], (D, D)),
        # shared LayerNorm affine params (randomized for a nontrivial check)
        "ln_g": 1.0 + randn(ks[6], (1, D)),
        "ln_b": randn(ks[7], (1, D)),
        # MultiheadAttention in_proj (split into q/k/v) and out_proj, (in,out).
        "wq": randn(ks[8], (D, D)), "bq": randn(ks[9], (1, D)),
        "wk": randn(ks[10], (D, D)), "bk": randn(ks[11], (1, D)),
        "wv": randn(ks[12], (D, D)), "bv": randn(ks[13], (1, D)),
        "wo": randn(ks[14], (D, D)), "bo": randn(ks[15], (1, D)),
        # Feed-forward.
        "wf1": randn(ks[16], (D, D)), "bf1": randn(ks[17], (1, D)),
        "wf2": randn(ks[18], (D, D)), "bf2": randn(ks[19], (1, D)),
        # Prediction head.
        "wpr": randn(ks[20], (D, 1)), "bpr": randn(ks[21], (1, 1)),
    }

    # Integer inputs (include some padding zeros).
    input_in = jax.random.randint(ks[22], (B, W), 0, 2 * NUM_SKILLS + 1,
                                  dtype=jnp.int32)
    input_ex = jax.random.randint(ks[23], (B, W), 0, NUM_SKILLS + 1,
                                  dtype=jnp.int32)

    packed = pack_params(params, dim=D, heads=H)

    ref = sakt_reference(input_in, input_ex, params, window=W, dim=D, heads=H)
    ref = jax.block_until_ready(ref)

    # f32 matmul operands (tight-ish check; approx-reciprocal softmax norm).
    out_f32 = sakt_forward(input_in, input_ex, packed, window=W, dim=D,
                           heads=H, compute_dtype=jnp.float32)
    out_f32 = jax.block_until_ready(out_f32)
    assert out_f32.shape == (B, W, 1), out_f32.shape
    assert jnp.all(jnp.isfinite(out_f32))
    assert jnp.allclose(out_f32, ref, atol=5e-3, rtol=5e-3), \
        float(jnp.max(jnp.abs(out_f32 - ref)))

    # bf16 matmul operands with f32 accumulate (v6e/v7x fast path).
    out_bf16 = sakt_forward(input_in, input_ex, packed, window=W, dim=D,
                            heads=H, compute_dtype=jnp.bfloat16)
    out_bf16 = jax.block_until_ready(out_bf16)
    assert out_bf16.shape == (B, W, 1), out_bf16.shape
    assert jnp.all(jnp.isfinite(out_bf16))
    assert jnp.allclose(out_bf16, ref, atol=5e-2, rtol=5e-2), \
        float(jnp.max(jnp.abs(out_bf16 - ref)))

    print("KERNEL_OK")
</pallas_src>

<mosaic_0001>
module attributes {stable_mosaic.version = 11 : i64} {
  func.func @sakt_kernel(%arg0: i32, %arg1: memref<2x8x32xf32, #tpu.memory_space<vmem>>, %arg2: memref<2x8x32xf32, #tpu.memory_space<vmem>>, %arg3: memref<32x64xf32, #tpu.memory_space<vmem>>, %arg4: memref<7x32x32xf32, #tpu.memory_space<vmem>>, %arg5: memref<10x32xf32, #tpu.memory_space<vmem>>, %arg6: memref<2x8xf32, #tpu.memory_space<vmem>>) attributes {dimension_semantics = [#tpu.dimension_semantics<parallel>], iteration_bounds = array<i64: 1>, scalar_prefetch = 0 : i64, scratch_operands = 0 : i64, tpu.core_type = #tpu.core_type<tc>, window_params = [{transform_indices = @transform_0, window_bounds = array<i64: 2, 8, 32>}, {transform_indices = @transform_1, window_bounds = array<i64: 2, 8, 32>}, {pipeline_mode = #tpu.pipeline_mode<synchronous>, transform_indices = @transform_2, window_bounds = array<i64: 32, 64>}, {pipeline_mode = #tpu.pipeline_mode<synchronous>, transform_indices = @transform_3, window_bounds = array<i64: 7, 32, 32>}, {pipeline_mode = #tpu.pipeline_mode<synchronous>, transform_indices = @transform_4, window_bounds = array<i64: 10, 32>}, {transform_indices = @transform_5, window_bounds = array<i64: 2, 8>}]} {
    %c0 = arith.constant 0 : index
    %c0_0 = arith.constant 0 : index
    %c0_1 = arith.constant 0 : index
    %0 = vector.load %arg1[%c0, %c0_0, %c0_1] : memref<2x8x32xf32, #tpu.memory_space<vmem>>, vector<2x8x32xf32>
    %1 = vector.shape_cast %0 : vector<2x8x32xf32> to vector<16x32xf32>
    %c0_2 = arith.constant 0 : index
    %c0_3 = arith.constant 0 : index
    %c0_4 = arith.constant 0 : index
    %2 = vector.load %arg2[%c0_2, %c0_3, %c0_4] : memref<2x8x32xf32, #tpu.memory_space<vmem>>, vector<2x8x32xf32>
    %3 = vector.shape_cast %2 : vector<2x8x32xf32> to vector<16x32xf32>
    %c0_5 = arith.constant 0 : index
    %c0_6 = arith.constant 0 : index
    %4 = vector.load %arg5[%c0_5, %c0_6] : memref<10x32xf32, #tpu.memory_space<vmem>>, vector<1x32xf32>
    %c1 = arith.constant 1 : index
    %c0_7 = arith.constant 0 : index
    %5 = vector.load %arg5[%c1, %c0_7] : memref<10x32xf32, #tpu.memory_space<vmem>>, vector<1x32xf32>
    %c2 = arith.constant 2 : index
    %c0_8 = arith.constant 0 : index
    %6 = vector.load %arg5[%c2, %c0_8] : memref<10x32xf32, #tpu.memory_space<vmem>>, vector<1x32xf32>
    %c3 = arith.constant 3 : index
    %c0_9 = arith.constant 0 : index
    %7 = vector.load %arg5[%c3, %c0_9] : memref<10x32xf32, #tpu.memory_space<vmem>>, vector<1x32xf32>
    %c4 = arith.constant 4 : index
    %c0_10 = arith.constant 0 : index
    %8 = vector.load %arg5[%c4, %c0_10] : memref<10x32xf32, #tpu.memory_space<vmem>>, vector<1x32xf32>
    %c5 = arith.constant 5 : index
    %c0_11 = arith.constant 0 : index
    %9 = vector.load %arg5[%c5, %c0_11] : memref<10x32xf32, #tpu.memory_space<vmem>>, vector<1x32xf32>
    %c6 = arith.constant 6 : index
    %c0_12 = arith.constant 0 : index
    %10 = vector.load %arg5[%c6, %c0_12] : memref<10x32xf32, #tpu.memory_space<vmem>>, vector<1x32xf32>
    %c7 = arith.constant 7 : index
    %c0_13 = arith.constant 0 : index
    %11 = vector.load %arg5[%c7, %c0_13] : memref<10x32xf32, #tpu.memory_space<vmem>>, vector<1x32xf32>
    %c8 = arith.constant 8 : index
    %c0_14 = arith.constant 0 : index
    %12 = vector.load %arg5[%c8, %c0_14] : memref<10x32xf32, #tpu.memory_space<vmem>>, vector<1x32xf32>
    %c9 = arith.constant 9 : index
    %c0_15 = arith.constant 0 : index
    %13 = vector.load %arg5[%c9, %c0_15] : memref<10x32xf32, #tpu.memory_space<vmem>>, vector<1x1xf32>
    %c0_16 = arith.constant 0 : index
    %c0_17 = arith.constant 0 : index
    %14 = vector.load %arg3[%c0_16, %c0_17] : memref<32x64xf32, #tpu.memory_space<vmem>>, vector<32x64xf32>
    %cst = arith.constant dense<0.000000e+00> : vector<16x64xf32>
    %15 = tpu.matmul %1, %14, %cst {dimension_numbers = #tpu.dot_dimension_numbers<[1], [0], [0], [1], [0, 0, 1, 1], [], []>} : vector<16x32xf32>, vector<32x64xf32>, vector<16x64xf32> -> vector<16x64xf32>
    %16 = vector.extract_strided_slice %15 {offsets = [0, 0], sizes = [16, 32], strides = [1, 1]} : vector<16x64xf32> to vector<16x32xf32>
    %cst_18 = arith.constant dense<0.000000e+00> : vector<16xf32>
    %17 = vector.multi_reduction <add>, %16, %cst_18 [1] : vector<16x32xf32> to vector<16xf32>
    %18 = vector.shape_cast %17 : vector<16xf32> to vector<16x1xf32>
    %cst_19 = arith.constant 3.200000e+01 : f32
    %19 = vector.broadcast %cst_19 : f32 to vector<16x1xf32>
    %20 = arith.divf %18, %19 : vector<16x1xf32>
    %21 = vector.broadcast %20 : vector<16x1xf32> to vector<16x32xf32>
    %22 = arith.subf %16, %21 : vector<16x32xf32>
    %23 = arith.mulf %22, %22 : vector<16x32xf32>
    %cst_20 = arith.constant dense<0.000000e+00> : vector<16xf32>
    %24 = vector.multi_reduction <add>, %23, %cst_20 [1] : vector<16x32xf32> to vector<16xf32>
    %25 = vector.shape_cast %24 : vector<16xf32> to vector<16x1xf32>
    %cst_21 = arith.constant 3.200000e+01 : f32
    %26 = vector.broadcast %cst_21 : f32 to vector<16x1xf32>
    %27 = arith.divf %25, %26 : vector<16x1xf32>
    %28 = vector.broadcast %20 : vector<16x1xf32> to vector<16x32xf32>
    %29 = arith.subf %16, %28 : vector<16x32xf32>
    %cst_22 = arith.constant 9.99999974E-6 : f32
    %30 = vector.broadcast %cst_22 : f32 to vector<16x1xf32>
    %31 = arith.addf %27, %30 : vector<16x1xf32>
    %32 = math.rsqrt %31 : vector<16x1xf32>
    %33 = vector.broadcast %32 : vector<16x1xf32> to vector<16x32xf32>
    %34 = arith.mulf %29, %33 : vector<16x32xf32>
    %35 = vector.broadcast %4 : vector<1x32xf32> to vector<16x32xf32>
    %36 = arith.mulf %34, %35 : vector<16x32xf32>
    %37 = vector.broadcast %5 : vector<1x32xf32> to vector<16x32xf32>
    %38 = arith.addf %36, %37 : vector<16x32xf32>
    %39 = vector.extract_strided_slice %15 {offsets = [0, 32], sizes = [16, 32], strides = [1, 1]} : vector<16x64xf32> to vector<16x32xf32>
    %cst_23 = arith.constant dense<0.000000e+00> : vector<16xf32>
    %40 = vector.multi_reduction <add>, %39, %cst_23 [1] : vector<16x32xf32> to vector<16xf32>
    %41 = vector.shape_cast %40 : vector<16xf32> to vector<16x1xf32>
    %cst_24 = arith.constant 3.200000e+01 : f32
    %42 = vector.broadcast %cst_24 : f32 to vector<16x1xf32>
    %43 = arith.divf %41, %42 : vector<16x1xf32>
    %44 = vector.broadcast %43 : vector<16x1xf32> to vector<16x32xf32>
    %45 = arith.subf %39, %44 : vector<16x32xf32>
    %46 = arith.mulf %45, %45 : vector<16x32xf32>
    %cst_25 = arith.constant dense<0.000000e+00> : vector<16xf32>
    %47 = vector.multi_reduction <add>, %46, %cst_25 [1] : vector<16x32xf32> to vector<16xf32>
    %48 = vector.shape_cast %47 : vector<16xf32> to vector<16x1xf32>
    %cst_26 = arith.constant 3.200000e+01 : f32
    %49 = vector.broadcast %cst_26 : f32 to vector<16x1xf32>
    %50 = arith.divf %48, %49 : vector<16x1xf32>
    %51 = vector.broadcast %43 : vector<16x1xf32> to vector<16x32xf32>
    %52 = arith.subf %39, %51 : vector<16x32xf32>
    %cst_27 = arith.constant 9.99999974E-6 : f32
    %53 = vector.broadcast %cst_27 : f32 to vector<16x1xf32>
    %54 = arith.addf %50, %53 : vector<16x1xf32>
    %55 = math.rsqrt %54 : vector<16x1xf32>
    %56 = vector.broadcast %55 : vector<16x1xf32> to vector<16x32xf32>
    %57 = arith.mulf %52, %56 : vector<16x32xf32>
    %58 = vector.broadcast %4 : vector<1x32xf32> to vector<16x32xf32>
    %59 = arith.mulf %57, %58 : vector<16x32xf32>
    %60 = vector.broadcast %5 : vector<1x32xf32> to vector<16x32xf32>
    %61 = arith.addf %59, %60 : vector<16x32xf32>
    %c0_28 = arith.constant 0 : index
    %c0_29 = arith.constant 0 : index
    %c0_30 = arith.constant 0 : index
    %62 = vector.load %arg4[%c0_28, %c0_29, %c0_30] : memref<7x32x32xf32, #tpu.memory_space<vmem>>, vector<1x32x32xf32>
    %63 = vector.shape_cast %62 : vector<1x32x32xf32> to vector<32x32xf32>
    %cst_31 = arith.constant dense<0.000000e+00> : vector<16x32xf32>
    %64 = tpu.matmul %3, %63, %cst_31 {dimension_numbers = #tpu.dot_dimension_numbers<[1], [0], [0], [1], [0, 0, 1, 1], [], []>} : vector<16x32xf32>, vector<32x32xf32>, vector<16x32xf32> -> vector<16x32xf32>
    %cst_32 = arith.constant dense<0.000000e+00> : vector<16xf32>
    %65 = vector.multi_reduction <add>, %64, %cst_32 [1] : vector<16x32xf32> to vector<16xf32>
    %66 = vector.shape_cast %65 : vector<16xf32> to vector<16x1xf32>
    %cst_33 = arith.constant 3.200000e+01 : f32
    %67 = vector.broadcast %cst_33 : f32 to vector<16x1xf32>
    %68 = arith.divf %66, %67 : vector<16x1xf32>
    %69 = vector.broadcast %68 : vector<16x1xf32> to vector<16x32xf32>
    %70 = arith.subf %64, %69 : vector<16x32xf32>
    %71 = arith.mulf %70, %70 : vector<16x32xf32>
    %cst_34 = arith.constant dense<0.000000e+00> : vector<16xf32>
    %72 = vector.multi_reduction <add>, %71, %cst_34 [1] : vector<16x32xf32> to vector<16xf32>
    %73 = vector.shape_cast %72 : vector<16xf32> to vector<16x1xf32>
    %cst_35 = arith.constant 3.200000e+01 : f32
    %74 = vector.broadcast %cst_35 : f32 to vector<16x1xf32>
    %75 = arith.divf %73, %74 : vector<16x1xf32>
    %76 = vector.broadcast %68 : vector<16x1xf32> to vector<16x32xf32>
    %77 = arith.subf %64, %76 : vector<16x32xf32>
    %cst_36 = arith.constant 9.99999974E-6 : f32
    %78 = vector.broadcast %cst_36 : f32 to vector<16x1xf32>
    %79 = arith.addf %75, %78 : vector<16x1xf32>
    %80 = math.rsqrt %79 : vector<16x1xf32>
    %81 = vector.broadcast %80 : vector<16x1xf32> to vector<16x32xf32>
    %82 = arith.mulf %77, %81 : vector<16x32xf32>
    %83 = vector.broadcast %4 : vector<1x32xf32> to vector<16x32xf32>
    %84 = arith.mulf %82, %83 : vector<16x32xf32>
    %85 = vector.broadcast %5 : vector<1x32xf32> to vector<16x32xf32>
    %86 = arith.addf %84, %85 : vector<16x32xf32>
    %c1_37 = arith.constant 1 : index
    %c0_38 = arith.constant 0 : index
    %c0_39 = arith.constant 0 : index
    %87 = vector.load %arg4[%c1_37, %c0_38, %c0_39] : memref<7x32x32xf32, #tpu.memory_space<vmem>>, vector<1x32x32xf32>
    %88 = vector.shape_cast %87 : vector<1x32x32xf32> to vector<32x32xf32>
    %cst_40 = arith.constant dense<0.000000e+00> : vector<16x32xf32>
    %89 = tpu.matmul %86, %88, %cst_40 {dimension_numbers = #tpu.dot_dimension_numbers<[1], [0], [0], [1], [0, 0, 1, 1], [], []>} : vector<16x32xf32>, vector<32x32xf32>, vector<16x32xf32> -> vector<16x32xf32>
    %90 = vector.broadcast %6 : vector<1x32xf32> to vector<16x32xf32>
    %91 = arith.addf %89, %90 : vector<16x32xf32>
    %c2_41 = arith.constant 2 : index
    %c0_42 = arith.constant 0 : index
    %c0_43 = arith.constant 0 : index
    %92 = vector.load %arg4[%c2_41, %c0_42, %c0_43] : memref<7x32x32xf32, #tpu.memory_space<vmem>>, vector<1x32x32xf32>
    %93 = vector.shape_cast %92 : vector<1x32x32xf32> to vector<32x32xf32>
    %cst_44 = arith.constant dense<0.000000e+00> : vector<16x32xf32>
    %94 = tpu.matmul %61, %93, %cst_44 {dimension_numbers = #tpu.dot_dimension_numbers<[1], [0], [0], [1], [0, 0, 1, 1], [], []>} : vector<16x32xf32>, vector<32x32xf32>, vector<16x32xf32> -> vector<16x32xf32>
    %95 = vector.broadcast %7 : vector<1x32xf32> to vector<16x32xf32>
    %96 = arith.addf %94, %95 : vector<16x32xf32>
    %c3_45 = arith.constant 3 : index
    %c0_46 = arith.constant 0 : index
    %c0_47 = arith.constant 0 : index
    %97 = vector.load %arg4[%c3_45, %c0_46, %c0_47] : memref<7x32x32xf32, #tpu.memory_space<vmem>>, vector<1x32x32xf32>
    %98 = vector.shape_cast %97 : vector<1x32x32xf32> to vector<32x32xf32>
    %cst_48 = arith.constant dense<0.000000e+00> : vector<16x32xf32>
    %99 = tpu.matmul %38, %98, %cst_48 {dimension_numbers = #tpu.dot_dimension_numbers<[1], [0], [0], [1], [0, 0, 1, 1], [], []>} : vector<16x32xf32>, vector<32x32xf32>, vector<16x32xf32> -> vector<16x32xf32>
    %100 = vector.broadcast %8 : vector<1x32xf32> to vector<16x32xf32>
    %101 = arith.addf %99, %100 : vector<16x32xf32>
    %c4_49 = arith.constant 4 : index
    %c0_50 = arith.constant 0 : index
    %c0_51 = arith.constant 0 : index
    %102 = vector.load %arg4[%c4_49, %c0_50, %c0_51] : memref<7x32x32xf32, #tpu.memory_space<vmem>>, vector<1x32x32xf32>
    %103 = vector.shape_cast %102 : vector<1x32x32xf32> to vector<32x32xf32>
    %104 = vector.shape_cast %91 : vector<16x32xf32> to vector<2x8x32xf32>
    %105 = vector.shape_cast %96 : vector<16x32xf32> to vector<2x8x32xf32>
    %106 = vector.shape_cast %101 : vector<16x32xf32> to vector<2x8x32xf32>
    %107 = tpu.iota {dimensions = array<i32: 0>} : vector<8x8xi32>
    %108 = tpu.iota {dimensions = array<i32: 1>} : vector<8x8xi32>
    %109 = arith.cmpi sgt, %108, %107 : vector<8x8xi32>
    %110 = vector.shape_cast %109 : vector<8x8xi1> to vector<1x8x8xi1>
    %cst_52 = arith.constant 0.000000e+00 : f32
    %111 = vector.broadcast %cst_52 : f32 to vector<16x32xf32>
    %112 = vector.extract_strided_slice %104 {offsets = [0, 0, 0], sizes = [2, 8, 8], strides = [1, 1, 1]} : vector<2x8x32xf32> to vector<2x8x8xf32>
    %113 = vector.extract_strided_slice %105 {offsets = [0, 0, 0], sizes = [2, 8, 8], strides = [1, 1, 1]} : vector<2x8x32xf32> to vector<2x8x8xf32>
    %114 = vector.extract_strided_slice %106 {offsets = [0, 0, 0], sizes = [2, 8, 8], strides = [1, 1, 1]} : vector<2x8x32xf32> to vector<2x8x8xf32>
    "tpu.trace_start"() <{level = 10 : i32, message = "bqd,bkd->bqk"}> : () -> ()
    %cst_53 = arith.constant dense<0.000000e+00> : vector<2x8x8xf32>
    %115 = tpu.matmul %112, %113, %cst_53 {dimension_numbers = #tpu.dot_dimension_numbers<[2], [2], [1], [1], [0, 0, 0, 1, 1, 1], [0], [0]>} : vector<2x8x8xf32>, vector<2x8x8xf32>, vector<2x8x8xf32> -> vector<2x8x8xf32>
    %cst_54 = arith.constant -1.000000e+30 : f32
    "tpu.trace_stop"() : () -> ()
    %116 = vector.shape_cast %110 : vector<1x8x8xi1> to vector<1x8x8xi1>
    %117 = vector.broadcast %116 : vector<1x8x8xi1> to vector<2x8x8xi1>
    %118 = vector.broadcast %cst_54 : f32 to vector<2x8x8xf32>
    %119 = arith.select %117, %118, %115 : vector<2x8x8xi1>, vector<2x8x8xf32>
    %cst_55 = arith.constant dense<0xFF800000> : vector<2x8xf32>
    %120 = vector.multi_reduction <maximumf>, %119, %cst_55 [2] : vector<2x8x8xf32> to vector<2x8xf32>
    %121 = vector.shape_cast %120 : vector<2x8xf32> to vector<2x8x1xf32>
    %122 = vector.broadcast %121 : vector<2x8x1xf32> to vector<2x8x8xf32>
    %123 = arith.subf %119, %122 : vector<2x8x8xf32>
    %124 = math.exp %123 : vector<2x8x8xf32>
    %cst_56 = arith.constant dense<0.000000e+00> : vector<2x8xf32>
    %125 = vector.multi_reduction <add>, %124, %cst_56 [2] : vector<2x8x8xf32> to vector<2x8xf32>
    %126 = vector.shape_cast %125 : vector<2x8xf32> to vector<2x8x1xf32>
    %127 = tpu.reciprocal %126 {approx = true} : vector<2x8x1xf32> -> vector<2x8x1xf32>
    %128 = vector.broadcast %127 : vector<2x8x1xf32> to vector<2x8x8xf32>
    %129 = arith.mulf %124, %128 : vector<2x8x8xf32>
    "tpu.trace_start"() <{level = 10 : i32, message = "bqk,bkd->bqd"}> : () -> ()
    %cst_57 = arith.constant dense<0.000000e+00> : vector<2x8x8xf32>
    %130 = tpu.matmul %129, %114, %cst_57 {dimension_numbers = #tpu.dot_dimension_numbers<[2], [1], [1], [2], [0, 0, 0, 1, 1, 2], [0], [0]>} : vector<2x8x8xf32>, vector<2x8x8xf32>, vector<2x8x8xf32> -> vector<2x8x8xf32>
    "tpu.trace_stop"() : () -> ()
    %131 = vector.shape_cast %130 : vector<2x8x8xf32> to vector<16x8xf32>
    %132 = vector.extract_strided_slice %103 {offsets = [0, 0], sizes = [8, 32], strides = [1, 1]} : vector<32x32xf32> to vector<8x32xf32>
    %cst_58 = arith.constant dense<0.000000e+00> : vector<16x32xf32>
    %133 = tpu.matmul %131, %132, %cst_58 {dimension_numbers = #tpu.dot_dimension_numbers<[1], [0], [0], [1], [0, 0, 1, 1], [], []>} : vector<16x8xf32>, vector<8x32xf32>, vector<16x32xf32> -> vector<16x32xf32>
    %134 = arith.addf %111, %133 : vector<16x32xf32>
    %135 = vector.extract_strided_slice %104 {offsets = [0, 0, 8], sizes = [2, 8, 8], strides = [1, 1, 1]} : vector<2x8x32xf32> to vector<2x8x8xf32>
    %136 = vector.extract_strided_slice %105 {offsets = [0, 0, 8], sizes = [2, 8, 8], strides = [1, 1, 1]} : vector<2x8x32xf32> to vector<2x8x8xf32>
    %137 = vector.extract_strided_slice %106 {offsets = [0, 0, 8], sizes = [2, 8, 8], strides = [1, 1, 1]} : vector<2x8x32xf32> to vector<2x8x8xf32>
    "tpu.trace_start"() <{level = 10 : i32, message = "bqd,bkd->bqk"}> : () -> ()
    %cst_59 = arith.constant dense<0.000000e+00> : vector<2x8x8xf32>
    %138 = tpu.matmul %135, %136, %cst_59 {dimension_numbers = #tpu.dot_dimension_numbers<[2], [2], [1], [1], [0, 0, 0, 1, 1, 1], [0], [0]>} : vector<2x8x8xf32>, vector<2x8x8xf32>, vector<2x8x8xf32> -> vector<2x8x8xf32>
    %cst_60 = arith.constant -1.000000e+30 : f32
    "tpu.trace_stop"() : () -> ()
    %139 = vector.shape_cast %110 : vector<1x8x8xi1> to vector<1x8x8xi1>
    %140 = vector.broadcast %139 : vector<1x8x8xi1> to vector<2x8x8xi1>
    %141 = vector.broadcast %cst_60 : f32 to vector<2x8x8xf32>
    %142 = arith.select %140, %141, %138 : vector<2x8x8xi1>, vector<2x8x8xf32>
    %cst_61 = arith.constant dense<0xFF800000> : vector<2x8xf32>
    %143 = vector.multi_reduction <maximumf>, %142, %cst_61 [2] : vector<2x8x8xf32> to vector<2x8xf32>
    %144 = vector.shape_cast %143 : vector<2x8xf32> to vector<2x8x1xf32>
    %145 = vector.broadcast %144 : vector<2x8x1xf32> to vector<2x8x8xf32>
    %146 = arith.subf %142, %145 : vector<2x8x8xf32>
    %147 = math.exp %146 : vector<2x8x8xf32>
    %cst_62 = arith.constant dense<0.000000e+00> : vector<2x8xf32>
    %148 = vector.multi_reduction <add>, %147, %cst_62 [2] : vector<2x8x8xf32> to vector<2x8xf32>
    %149 = vector.shape_cast %148 : vector<2x8xf32> to vector<2x8x1xf32>
    %150 = tpu.reciprocal %149 {approx = true} : vector<2x8x1xf32> -> vector<2x8x1xf32>
    %151 = vector.broadcast %150 : vector<2x8x1xf32> to vector<2x8x8xf32>
    %152 = arith.mulf %147, %151 : vector<2x8x8xf32>
    "tpu.trace_start"() <{level = 10 : i32, message = "bqk,bkd->bqd"}> : () -> ()
    %cst_63 = arith.constant dense<0.000000e+00> : vector<2x8x8xf32>
    %153 = tpu.matmul %152, %137, %cst_63 {dimension_numbers = #tpu.dot_dimension_numbers<[2], [1], [1], [2], [0, 0, 0, 1, 1, 2], [0], [0]>} : vector<2x8x8xf32>, vector<2x8x8xf32>, vector<2x8x8xf32> -> vector<2x8x8xf32>
    "tpu.trace_stop"() : () -> ()
    %154 = vector.shape_cast %153 : vector<2x8x8xf32> to vector<16x8xf32>
    %155 = vector.extract_strided_slice %103 {offsets = [8, 0], sizes = [8, 32], strides = [1, 1]} : vector<32x32xf32> to vector<8x32xf32>
    %cst_64 = arith.constant dense<0.000000e+00> : vector<16x32xf32>
    %156 = tpu.matmul %154, %155, %cst_64 {dimension_numbers = #tpu.dot_dimension_numbers<[1], [0], [0], [1], [0, 0, 1, 1], [], []>} : vector<16x8xf32>, vector<8x32xf32>, vector<16x32xf32> -> vector<16x32xf32>
    %157 = arith.addf %134, %156 : vector<16x32xf32>
    %158 = vector.extract_strided_slice %104 {offsets = [0, 0, 16], sizes = [2, 8, 8], strides = [1, 1, 1]} : vector<2x8x32xf32> to vector<2x8x8xf32>
    %159 = vector.extract_strided_slice %105 {offsets = [0, 0, 16], sizes = [2, 8, 8], strides = [1, 1, 1]} : vector<2x8x32xf32> to vector<2x8x8xf32>
    %160 = vector.extract_strided_slice %106 {offsets = [0, 0, 16], sizes = [2, 8, 8], strides = [1, 1, 1]} : vector<2x8x32xf32> to vector<2x8x8xf32>
    "tpu.trace_start"() <{level = 10 : i32, message = "bqd,bkd->bqk"}> : () -> ()
    %cst_65 = arith.constant dense<0.000000e+00> : vector<2x8x8xf32>
    %161 = tpu.matmul %158, %159, %cst_65 {dimension_numbers = #tpu.dot_dimension_numbers<[2], [2], [1], [1], [0, 0, 0, 1, 1, 1], [0], [0]>} : vector<2x8x8xf32>, vector<2x8x8xf32>, vector<2x8x8xf32> -> vector<2x8x8xf32>
    %cst_66 = arith.constant -1.000000e+30 : f32
    "tpu.trace_stop"() : () -> ()
    %162 = vector.shape_cast %110 : vector<1x8x8xi1> to vector<1x8x8xi1>
    %163 = vector.broadcast %162 : vector<1x8x8xi1> to vector<2x8x8xi1>
    %164 = vector.broadcast %cst_66 : f32 to vector<2x8x8xf32>
    %165 = arith.select %163, %164, %161 : vector<2x8x8xi1>, vector<2x8x8xf32>
    %cst_67 = arith.constant dense<0xFF800000> : vector<2x8xf32>
    %166 = vector.multi_reduction <maximumf>, %165, %cst_67 [2] : vector<2x8x8xf32> to vector<2x8xf32>
    %167 = vector.shape_cast %166 : vector<2x8xf32> to vector<2x8x1xf32>
    %168 = vector.broadcast %167 : vector<2x8x1xf32> to vector<2x8x8xf32>
    %169 = arith.subf %165, %168 : vector<2x8x8xf32>
    %170 = math.exp %169 : vector<2x8x8xf32>
    %cst_68 = arith.constant dense<0.000000e+00> : vector<2x8xf32>
    %171 = vector.multi_reduction <add>, %170, %cst_68 [2] : vector<2x8x8xf32> to vector<2x8xf32>
    %172 = vector.shape_cast %171 : vector<2x8xf32> to vector<2x8x1xf32>
    %173 = tpu.reciprocal %172 {approx = true} : vector<2x8x1xf32> -> vector<2x8x1xf32>
    %174 = vector.broadcast %173 : vector<2x8x1xf32> to vector<2x8x8xf32>
    %175 = arith.mulf %170, %174 : vector<2x8x8xf32>
    "tpu.trace_start"() <{level = 10 : i32, message = "bqk,bkd->bqd"}> : () -> ()
    %cst_69 = arith.constant dense<0.000000e+00> : vector<2x8x8xf32>
    %176 = tpu.matmul %175, %160, %cst_69 {dimension_numbers = #tpu.dot_dimension_numbers<[2], [1], [1], [2], [0, 0, 0, 1, 1, 2], [0], [0]>} : vector<2x8x8xf32>, vector<2x8x8xf32>, vector<2x8x8xf32> -> vector<2x8x8xf32>
    "tpu.trace_stop"() : () -> ()
    %177 = vector.shape_cast %176 : vector<2x8x8xf32> to vector<16x8xf32>
    %178 = vector.extract_strided_slice %103 {offsets = [16, 0], sizes = [8, 32], strides = [1, 1]} : vector<32x32xf32> to vector<8x32xf32>
    %cst_70 = arith.constant dense<0.000000e+00> : vector<16x32xf32>
    %179 = tpu.matmul %177, %178, %cst_70 {dimension_numbers = #tpu.dot_dimension_numbers<[1], [0], [0], [1], [0, 0, 1, 1], [], []>} : vector<16x8xf32>, vector<8x32xf32>, vector<16x32xf32> -> vector<16x32xf32>
    %180 = arith.addf %157, %179 : vector<16x32xf32>
    %181 = vector.extract_strided_slice %104 {offsets = [0, 0, 24], sizes = [2, 8, 8], strides = [1, 1, 1]} : vector<2x8x32xf32> to vector<2x8x8xf32>
    %182 = vector.extract_strided_slice %105 {offsets = [0, 0, 24], sizes = [2, 8, 8], strides = [1, 1, 1]} : vector<2x8x32xf32> to vector<2x8x8xf32>
    %183 = vector.extract_strided_slice %106 {offsets = [0, 0, 24], sizes = [2, 8, 8], strides = [1, 1, 1]} : vector<2x8x32xf32> to vector<2x8x8xf32>
    "tpu.trace_start"() <{level = 10 : i32, message = "bqd,bkd->bqk"}> : () -> ()
    %cst_71 = arith.constant dense<0.000000e+00> : vector<2x8x8xf32>
    %184 = tpu.matmul %181, %182, %cst_71 {dimension_numbers = #tpu.dot_dimension_numbers<[2], [2], [1], [1], [0, 0, 0, 1, 1, 1], [0], [0]>} : vector<2x8x8xf32>, vector<2x8x8xf32>, vector<2x8x8xf32> -> vector<2x8x8xf32>
    %cst_72 = arith.constant -1.000000e+30 : f32
    "tpu.trace_stop"() : () -> ()
    %185 = vector.shape_cast %110 : vector<1x8x8xi1> to vector<1x8x8xi1>
    %186 = vector.broadcast %185 : vector<1x8x8xi1> to vector<2x8x8xi1>
    %187 = vector.broadcast %cst_72 : f32 to vector<2x8x8xf32>
    %188 = arith.select %186, %187, %184 : vector<2x8x8xi1>, vector<2x8x8xf32>
    %cst_73 = arith.constant dense<0xFF800000> : vector<2x8xf32>
    %189 = vector.multi_reduction <maximumf>, %188, %cst_73 [2] : vector<2x8x8xf32> to vector<2x8xf32>
    %190 = vector.shape_cast %189 : vector<2x8xf32> to vector<2x8x1xf32>
    %191 = vector.broadcast %190 : vector<2x8x1xf32> to vector<2x8x8xf32>
    %192 = arith.subf %188, %191 : vector<2x8x8xf32>
    %193 = math.exp %192 : vector<2x8x8xf32>
    %cst_74 = arith.constant dense<0.000000e+00> : vector<2x8xf32>
    %194 = vector.multi_reduction <add>, %193, %cst_74 [2] : vector<2x8x8xf32> to vector<2x8xf32>
    %195 = vector.shape_cast %194 : vector<2x8xf32> to vector<2x8x1xf32>
    %196 = tpu.reciprocal %195 {approx = true} : vector<2x8x1xf32> -> vector<2x8x1xf32>
    %197 = vector.broadcast %196 : vector<2x8x1xf32> to vector<2x8x8xf32>
    %198 = arith.mulf %193, %197 : vector<2x8x8xf32>
    "tpu.trace_start"() <{level = 10 : i32, message = "bqk,bkd->bqd"}> : () -> ()
    %cst_75 = arith.constant dense<0.000000e+00> : vector<2x8x8xf32>
    %199 = tpu.matmul %198, %183, %cst_75 {dimension_numbers = #tpu.dot_dimension_numbers<[2], [1], [1], [2], [0, 0, 0, 1, 1, 2], [0], [0]>} : vector<2x8x8xf32>, vector<2x8x8xf32>, vector<2x8x8xf32> -> vector<2x8x8xf32>
    "tpu.trace_stop"() : () -> ()
    %200 = vector.shape_cast %199 : vector<2x8x8xf32> to vector<16x8xf32>
    %201 = vector.extract_strided_slice %103 {offsets = [24, 0], sizes = [8, 32], strides = [1, 1]} : vector<32x32xf32> to vector<8x32xf32>
    %cst_76 = arith.constant dense<0.000000e+00> : vector<16x32xf32>
    %202 = tpu.matmul %200, %201, %cst_76 {dimension_numbers = #tpu.dot_dimension_numbers<[1], [0], [0], [1], [0, 0, 1, 1], [], []>} : vector<16x8xf32>, vector<8x32xf32>, vector<16x32xf32> -> vector<16x32xf32>
    %203 = arith.addf %180, %202 : vector<16x32xf32>
    %204 = vector.broadcast %9 : vector<1x32xf32> to vector<16x32xf32>
    %205 = arith.addf %203, %204 : vector<16x32xf32>
    %cst_77 = arith.constant dense<0.000000e+00> : vector<16xf32>
    %206 = vector.multi_reduction <add>, %205, %cst_77 [1] : vector<16x32xf32> to vector<16xf32>
    %207 = vector.shape_cast %206 : vector<16xf32> to vector<16x1xf32>
    %cst_78 = arith.constant 3.200000e+01 : f32
    %208 = vector.broadcast %cst_78 : f32 to vector<16x1xf32>
    %209 = arith.divf %207, %208 : vector<16x1xf32>
    %210 = vector.broadcast %209 : vector<16x1xf32> to vector<16x32xf32>
    %211 = arith.subf %205, %210 : vector<16x32xf32>
    %212 = arith.mulf %211, %211 : vector<16x32xf32>
    %cst_79 = arith.constant dense<0.000000e+00> : vector<16xf32>
    %213 = vector.multi_reduction <add>, %212, %cst_79 [1] : vector<16x32xf32> to vector<16xf32>
    %214 = vector.shape_cast %213 : vector<16xf32> to vector<16x1xf32>
    %cst_80 = arith.constant 3.200000e+01 : f32
    %215 = vector.broadcast %cst_80 : f32 to vector<16x1xf32>
    %216 = arith.divf %214, %215 : vector<16x1xf32>
    %217 = vector.broadcast %209 : vector<16x1xf32> to vector<16x32xf32>
    %218 = arith.subf %205, %217 : vector<16x32xf32>
    %cst_81 = arith.constant 9.99999974E-6 : f32
    %219 = vector.broadcast %cst_81 : f32 to vector<16x1xf32>
    %220 = arith.addf %216, %219 : vector<16x1xf32>
    %221 = math.rsqrt %220 : vector<16x1xf32>
    %222 = vector.broadcast %221 : vector<16x1xf32> to vector<16x32xf32>
    %223 = arith.mulf %218, %222 : vector<16x32xf32>
    %224 = vector.broadcast %4 : vector<1x32xf32> to vector<16x32xf32>
    %225 = arith.mulf %223, %224 : vector<16x32xf32>
    %226 = vector.broadcast %5 : vector<1x32xf32> to vector<16x32xf32>
    %227 = arith.addf %225, %226 : vector<16x32xf32>
    %228 = arith.addf %227, %86 : vector<16x32xf32>
    %c5_82 = arith.constant 5 : index
    %c0_83 = arith.constant 0 : index
    %c0_84 = arith.constant 0 : index
    %229 = vector.load %arg4[%c5_82, %c0_83, %c0_84] : memref<7x32x32xf32, #tpu.memory_space<vmem>>, vector<1x32x32xf32>
    %230 = vector.shape_cast %229 : vector<1x32x32xf32> to vector<32x32xf32>
    %cst_85 = arith.constant dense<0.000000e+00> : vector<16x32xf32>
    %231 = tpu.matmul %228, %230, %cst_85 {dimension_numbers = #tpu.dot_dimension_numbers<[1], [0], [0], [1], [0, 0, 1, 1], [], []>} : vector<16x32xf32>, vector<32x32xf32>, vector<16x32xf32> -> vector<16x32xf32>
    %232 = vector.broadcast %10 : vector<1x32xf32> to vector<16x32xf32>
    %233 = arith.addf %231, %232 : vector<16x32xf32>
    %cst_86 = arith.constant 0.000000e+00 : f32
    %234 = vector.broadcast %cst_86 : f32 to vector<16x32xf32>
    %235 = arith.maximumf %233, %234 : vector<16x32xf32>
    %c6_87 = arith.constant 6 : index
    %c0_88 = arith.constant 0 : index
    %c0_89 = arith.constant 0 : index
    %236 = vector.load %arg4[%c6_87, %c0_88, %c0_89] : memref<7x32x32xf32, #tpu.memory_space<vmem>>, vector<1x32x32xf32>
    %237 = vector.shape_cast %236 : vector<1x32x32xf32> to vector<32x32xf32>
    %cst_90 = arith.constant dense<0.000000e+00> : vector<16x32xf32>
    %238 = tpu.matmul %235, %237, %cst_90 {dimension_numbers = #tpu.dot_dimension_numbers<[1], [0], [0], [1], [0, 0, 1, 1], [], []>} : vector<16x32xf32>, vector<32x32xf32>, vector<16x32xf32> -> vector<16x32xf32>
    %239 = vector.broadcast %11 : vector<1x32xf32> to vector<16x32xf32>
    %240 = arith.addf %238, %239 : vector<16x32xf32>
    %241 = arith.addf %240, %228 : vector<16x32xf32>
    %242 = vector.shape_cast %241 : vector<16x32xf32> to vector<2x8x32xf32>
    %243 = vector.shape_cast %12 : vector<1x32xf32> to vector<1x1x32xf32>
    %244 = vector.broadcast %243 : vector<1x1x32xf32> to vector<2x8x32xf32>
    %245 = arith.mulf %242, %244 : vector<2x8x32xf32>
    %cst_91 = arith.constant dense<0.000000e+00> : vector<2x8xf32>
    %246 = vector.multi_reduction <add>, %245, %cst_91 [2] : vector<2x8x32xf32> to vector<2x8xf32>
    %247 = vector.broadcast %13 : vector<1x1xf32> to vector<2x8xf32>
    %248 = arith.addf %246, %247 : vector<2x8xf32>
    %249 = arith.negf %248 : vector<2x8xf32>
    %250 = math.exp %249 : vector<2x8xf32>
    %cst_92 = arith.constant 1.000000e+00 : f32
    %251 = vector.broadcast %cst_92 : f32 to vector<2x8xf32>
    %252 = arith.addf %251, %250 : vector<2x8xf32>
    %253 = arith.divf %251, %252 : vector<2x8xf32>
    %c0_93 = arith.constant 0 : index
    %c0_94 = arith.constant 0 : index
    %254 = vector.load %arg6[%c0_93, %c0_94] : memref<2x8xf32, #tpu.memory_space<vmem>>, vector<2x8xf32>
    tpu.vector_store %arg6[%c0_93, %c0_94], %253 {strides = array<i32>} : memref<2x8xf32, #tpu.memory_space<vmem>>, vector<2x8xf32>,
    return
  }
  func.func @transform_0(%arg0: i32) -> (i32, i32, i32) {
    %c0_i32 = arith.constant 0 : i32
    %c0_i32_0 = arith.constant 0 : i32
    %c0_i32_1 = arith.constant 0 : i32
    return %arg0, %c0_i32, %c0_i32_0 : i32, i32, i32
  }
  func.func @transform_1(%arg0: i32) -> (i32, i32, i32) {
    %c0_i32 = arith.constant 0 : i32
    %c0_i32_0 = arith.constant 0 : i32
    %c0_i32_1 = arith.constant 0 : i32
    return %arg0, %c0_i32, %c0_i32_0 : i32, i32, i32
  }
  func.func @transform_2(%arg0: i32) -> (i32, i32) {
    %c0_i32 = arith.constant 0 : i32
    %c0_i32_0 = arith.constant 0 : i32
    %c0_i32_1 = arith.constant 0 : i32
    return %c0_i32, %c0_i32_0 : i32, i32
  }
  func.func @transform_3(%arg0: i32) -> (i32, i32, i32) {
    %c0_i32 = arith.constant 0 : i32
    %c0_i32_0 = arith.constant 0 : i32
    %c0_i32_1 = arith.constant 0 : i32
    %c0_i32_2 = arith.constant 0 : i32
    return %c0_i32, %c0_i32_0, %c0_i32_1 : i32, i32, i32
  }
  func.func @transform_4(%arg0: i32) -> (i32, i32) {
    %c0_i32 = arith.constant 0 : i32
    %c0_i32_0 = arith.constant 0 : i32
    %c0_i32_1 = arith.constant 0 : i32
    return %c0_i32, %c0_i32_0 : i32, i32
  }
  func.func @transform_5(%arg0: i32) -> (i32, i32) {
    %c0_i32 = arith.constant 0 : i32
    %c0_i32_0 = arith.constant 0 : i32
    return %arg0, %c0_i32 : i32, i32
  }
}

</mosaic_0001>

<llo_original>
// kernel: tpu_custom_call.1
$region0: #{tpu_custom_call.1}
  #allocation0 [shape = 'u32[]', space=smem, size = 0x4, offset = 0x4, fixed_abs, tag = 'smem constant byte address 0x4 - core index']
  #allocation1 [shape = 'u32[144,128]{1,0:T(1,128)}', space=vmem, size = 0x12000, scoped, tag = 'internal scratch']
  %s0 = inlined_call_operand.hbm [shape: f32[2,8,32], index: 0, kind: input, shape index: {}]
  %s1 = inlined_call_operand.hbm [shape: f32[2,8,32], index: 1, kind: input, shape index: {}]
  %s2 = inlined_call_operand.hbm [shape: f32[32,64], index: 2, kind: input, shape index: {}]
  %s3 = inlined_call_operand.hbm [shape: f32[7,32,32], index: 3, kind: input, shape index: {}]
  %s4 = inlined_call_operand.hbm [shape: f32[10,32], index: 4, kind: input, shape index: {}]
  %s5 = inlined_call_operand.hbm [shape: f32[2,8], index: 5, kind: output, shape index: {}]
  %s6 = sld [smem:[#allocation0]]
  $region50: #{tpu_custom_call.1} parent=0
    _
  %s8 = ssub.s32 1, %s6
  %s9 = scalar_select 0, %s8, %s6
  $region1: #{tpu_custom_call.1} parent=0
    #allocation2 [shape = 'u8[8192]{0}', space=vmem, size = 0x2000, scoped, tag = 'input window, operand 0, single buffered']
    #allocation3 [shape = 's32[1]{0}', space=sflag, size = 0x4, scoped, tag = 'scoped memory for tpu_custom_call.1']
    #allocation4 [shape = 's32[1]{0}', space=sflag, size = 0x4, scoped, tag = 'scoped memory for tpu_custom_call.1']
    #allocation5 [shape = 'u8[8192]{0}', space=vmem, size = 0x2000, scoped, tag = 'input window, operand 1, single buffered']
    #allocation6 [shape = 's32[1]{0}', space=sflag, size = 0x4, scoped, tag = 'scoped memory for tpu_custom_call.1']
    #allocation7 [shape = 'u8[16384]{0}', space=vmem, size = 0x4000, scoped, tag = 'input window, operand 2, single buffered']
    #allocation8 [shape = 'u8[114688]{0}', space=vmem, size = 0x1c000, scoped, tag = 'input window, operand 3, single buffered']
    #allocation9 [shape = 's32[1]{0}', space=sflag, size = 0x4, scoped, tag = 'scoped memory for tpu_custom_call.1']
    #allocation10 [shape = 'u8[8192]{0}', space=vmem, size = 0x2000, scoped, tag = 'input window, operand 4, single buffered']
    #allocation11 [shape = 'u8[1024]{0}', space=vmem, size = 0x400, scoped, tag = 'output window, operand 0, single buffered']
    %10 = vsyncpa [#allocation3], 0
    %11 = vsyncpa [#allocation6], 0
    %12 = vsyncpa [#allocation9], 0
    %13 = vsyncpa [#allocation4], 0
    // Predicated region
    $region2: #{tpu_custom_call.1} parent=1 // pred_check
      _
    $region3: #{tpu_custom_call.1} parent=1 // pred_check_branch
      %15 = sbr.rel (0) target = $region5
    $region4: #{tpu_custom_call.1} parent=1 // pred_region
      %s17 = ssub.s32 256, 256
      %18 = vsyncadd [#allocation3], %s17
      %s19 = sshll.u32 [#allocation2], 4
      %s20 = int_to_ptr.vmem [resolvable:$true] %s19
      %25 = dma.hbm_to_vmem [thread:$0]  %s0, 256, %s20, [#allocation3], 128, 128, 8
    $region5: #{tpu_custom_call.1} parent=1 // pred_fallthru
      _
    // Predicated region
    $region6: #{tpu_custom_call.1} parent=1 // pred_check
      _
    $region7: #{tpu_custom_call.1} parent=1 // pred_check_branch
      %27 = sbr.rel (0) target = $region9
    $region8: #{tpu_custom_call.1} parent=1 // pred_region
      %s29 = ssub.s32 256, 256
      %30 = vsyncadd [#allocation6], %s29
      %s31 = sshll.u32 [#allocation5], 4
      %s32 = int_to_ptr.vmem [resolvable:$true] %s31
      %37 = dma.hbm_to_vmem [thread:$0]  %s1, 256, %s32, [#allocation6], 128, 128, 8
    $region9: #{tpu_custom_call.1} parent=1 // pred_fallthru
      _
    // Predicated region
    $region10: #{tpu_custom_call.1} parent=1 // pred_check
      _
    $region11: #{tpu_custom_call.1} parent=1 // pred_check_branch
      %39 = sbr.rel (0) target = $region13
    $region12: #{tpu_custom_call.1} parent=1 // pred_region
      %s41 = ssub.s32 512, 512
      %42 = vsyncadd [#allocation6], %s41
      %s43 = sshll.u32 [#allocation7], 4
      %s44 = int_to_ptr.vmem [resolvable:$true] %s43
      %49 = dma.hbm_to_vmem [thread:$0]  %s2, 512, %s44, [#allocation6], 128, 128, 8
    $region13: #{tpu_custom_call.1} parent=1 // pred_fallthru
      _
    // Predicated region
    $region14: #{tpu_custom_call.1} parent=1 // pred_check
      _
    $region15: #{tpu_custom_call.1} parent=1 // pred_check_branch
      %51 = sbr.rel (0) target = $region17
    $region16: #{tpu_custom_call.1} parent=1 // pred_region
      %s53 = ssub.s32 3584, 3584
      %54 = vsyncadd [#allocation9], %s53
      %s55 = sshll.u32 [#allocation8], 4
      %s56 = int_to_ptr.vmem [resolvable:$true] %s55
      %61 = dma.hbm_to_vmem [thread:$0]  %s3, 3584, %s56, [#allocation9], 128, 128, 8
    $region17: #{tpu_custom_call.1} parent=1 // pred_fallthru
      _
    // Predicated region
    $region18: #{tpu_custom_call.1} parent=1 // pred_check
      _
    $region19: #{tpu_custom_call.1} parent=1 // pred_check_branch
      %63 = sbr.rel (0) target = $region21
    $region20: #{tpu_custom_call.1} parent=1 // pred_region
      %s65 = ssub.s32 256, 256
      %66 = vsyncadd [#allocation9], %s65
      %s67 = sshll.u32 [#allocation10], 4
      %s68 = int_to_ptr.vmem [resolvable:$true] %s67
      %73 = dma.hbm_to_vmem [thread:$0]  %s4, 256, %s68, [#allocation9], 128, 128, 8
    $region21: #{tpu_custom_call.1} parent=1 // pred_fallthru
      _
    // Predicated region
    $region22: #{tpu_custom_call.1} parent=1 // pred_check
      _
    $region23: #{tpu_custom_call.1} parent=1 // pred_check_branch
      %75 = sbr.rel (0) target = $region25
    $region24: #{tpu_custom_call.1} parent=1 // pred_region
      %76 = dma.done [#allocation3], 256
    $region25: #{tpu_custom_call.1} parent=1 // pred_fallthru
      _
    // Predicated region
    $region26: #{tpu_custom_call.1} parent=1 // pred_check
      _
    $region27: #{tpu_custom_call.1} parent=1 // pred_check_branch
      %78 = sbr.rel (0) target = $region29
    $region28: #{tpu_custom_call.1} parent=1 // pred_region
      %79 = dma.done [#allocation6], 256
    $region29: #{tpu_custom_call.1} parent=1 // pred_fallthru
      _
    // Predicated region
    $region30: #{tpu_custom_call.1} parent=1 // pred_check
      _
    $region31: #{tpu_custom_call.1} parent=1 // pred_check_branch
      %81 = sbr.rel (0) target = $region33
    $region32: #{tpu_custom_call.1} parent=1 // pred_region
      %82 = dma.done [#allocation6], 512
    $region33: #{tpu_custom_call.1} parent=1 // pred_fallthru
      _
    // Predicated region
    $region34: #{tpu_custom_call.1} parent=1 // pred_check
      _
    $region35: #{tpu_custom_call.1} parent=1 // pred_check_branch
      %84 = sbr.rel (0) target = $region37
    $region36: #{tpu_custom_call.1} parent=1 // pred_region
      %85 = dma.done [#allocation9], 3584
    $region37: #{tpu_custom_call.1} parent=1 // pred_fallthru
      _
    // Predicated region
    $region38: #{tpu_custom_call.1} parent=1 // pred_check
      _
    $region39: #{tpu_custom_call.1} parent=1 // pred_check_branch
      %87 = sbr.rel (0) target = $region41
    $region40: #{tpu_custom_call.1} parent=1 // pred_region
      %88 = dma.done [#allocation9], 256
    $region41: #{tpu_custom_call.1} parent=1 // pred_fallthru
      _
    %v89 = vld [vmem:[#allocation2] sm:$0xff]
    %v90 = vld [vmem:[#allocation2 + $0x8] sm:$0xff]
    %v91 = vld [vmem:[#allocation5] sm:$0xff]
    %v92 = vld [vmem:[#allocation5 + $0x8] sm:$0xff]
    %v93 = vld [vmem:[#allocation10] sm:$0x1]
    %v94 = vld [vmem:[#allocation10 + $0x1] sm:$0x1]
    %v95 = vld [vmem:[#allocation10 + $0x2] sm:$0x1]
    %v96 = vld [vmem:[#allocation10 + $0x3] sm:$0x1]
    %v97 = vld [vmem:[#allocation10 + $0x4] sm:$0x1]
    %v98 = vld [vmem:[#allocation10 + $0x5] sm:$0x1]
    %v99 = vld [vmem:[#allocation10 + $0x6] sm:$0x1]
    %v100 = vld [vmem:[#allocation10 + $0x7] sm:$0x1]
    %v101 = vld [vmem:[#allocation10 + $0x8] sm:$0x1]
    %v102 = vld [vmem:[#allocation10 + $0x9] sm:$0x1]
    %v103 = vld [vmem:[#allocation7] sm:$0xff]
    %v104 = vld [vmem:[#allocation7 + $0x8] sm:$0xff]
    %v105 = vld [vmem:[#allocation7 + $0x10] sm:$0xff]
    %v106 = vld [vmem:[#allocation7 + $0x18] sm:$0xff]
    %vm107 = vcmask 261120
    %v109 = vsel %vm107, %v89, 0
    %v112 = vsel %vm107, %v90, 0
    %114 = vmatprep.subr.mxu0 0.0
    %115 = vmatpush1.msra.mxu0 %v103
    %116 = vmatprep.subr.mxu0 0.0
    %117 = vmatpush1.msra.mxu0 %v104
    %118 = vmatprep.subr.mxu0 0.0
    %119 = vmatpush1.msra.mxu0 %v105
    %120 = vmatprep.subr.mxu0 0.0
    %121 = vmatpush1.msra.mxu0 %v106
    %122 = vmatprep.subr.mxu0 0.0
    %123 = vmatpush1.msra.mxu0 0.0
    %124 = vmatprep.subr.mxu0 0.0
    %125 = vmatpush1.msra.mxu0 0.0
    %126 = vmatprep.subr.mxu0 0.0
    %127 = vmatpush1.msra.mxu0 0.0
    %128 = vmatprep.subr.mxu0 0.0
    %129 = vmatpush1.msra.mxu0 0.0
    %130 = vmatprep.subr.mxu0 0.0
    %131 = vmatpush1.msra.mxu0 0.0
    %132 = vmatprep.subr.mxu0 0.0
    %133 = vmatpush1.msra.mxu0 0.0
    %134 = vmatprep.subr.mxu0 0.0
    %135 = vmatpush1.msra.mxu0 0.0
    %136 = vmatprep.subr.mxu0 0.0
    %137 = vmatpush1.msra.mxu0 0.0
    %138 = vmatprep.subr.mxu0 0.0
    %139 = vmatpush1.msra.mxu0 0.0
    %140 = vmatprep.subr.mxu0 0.0
    %141 = vmatpush1.msra.mxu0 0.0
    %142 = vmatprep.subr.mxu0 0.0
    %143 = vmatpush1.msra.mxu0 0.0
    %144 = vmatprep.subr.mxu0 0.0
    %145 = vmatpush1.msra.mxu0 0.0
    %146 = vmatprep.subr.mxu0 0.0
    %147 = vmatpush1.msra.mxu0 0.0
    %148 = vmatprep.subr.mxu0 0.0
    %149 = vmatpush1.msra.mxu0 0.0
    %150 = vmatprep.subr.mxu0 0.0
    %151 = vmatpush1.msra.mxu0 0.0
    %152 = vmatprep.subr.mxu0 0.0
    %153 = vmatpush1.msra.mxu0 0.0
    %154 = vmatprep.subr.mxu0 0.0
    %155 = vmatpush1.msra.mxu0 0.0
    %156 = vmatprep.subr.mxu0 0.0
    %157 = vmatpush1.msra.mxu0 0.0
    %158 = vmatprep.subr.mxu0 0.0
    %159 = vmatpush1.msra.mxu0 0.0
    %160 = vmatprep.subr.mxu0 0.0
    %161 = vmatpush1.msra.mxu0 0.0
    %162 = vmatprep.subr.mxu0 0.0
    %163 = vmatpush1.msra.mxu0 0.0
    %164 = vmatprep.subr.mxu0 0.0
    %165 = vmatpush1.msra.mxu0 0.0
    %166 = vmatprep.subr.mxu0 0.0
    %167 = vmatpush1.msra.mxu0 0.0
    %168 = vmatprep.subr.mxu0 0.0
    %169 = vmatpush1.msra.mxu0 0.0
    %170 = vmatprep.subr.mxu0 0.0
    %171 = vmatpush1.msra.mxu0 0.0
    %172 = vmatprep.subr.mxu0 0.0
    %173 = vmatpush1.msra.mxu0 0.0
    %174 = vmatprep.subr.mxu0 0.0
    %175 = vmatpush1.msra.mxu0 0.0
    %176 = vmatprep.subr.mxu0 0.0
    %177 = vmatpush1.msra.mxu0 0.0
    %178 = vmatprep.mubr.f32.mxu0 0.0
    %179 = vmatmul.mubr.f32.gmra.mrb[0].mxu0 %v109
    %v180 = vpop.f32.mrb[0].mxu0
    %v181 = vadd.f32 0.0, %v180
    %v182 = vpop.f32.mrb[0].mxu0
    %183 = vmatprep.mubr.f32.mxu0 0.0
    %184 = vmatmul.mubr.f32.gmra.mrb[0].mxu0 %v112
    %v185 = vpop.f32.mrb[0].mxu0
    %v186 = vadd.f32 0.0, %v185
    %v187 = vpop.f32.mrb[0].mxu0
    %188 = vdwg.mxu0
    %v189 = vsel %vm107, %v181, 0.0
    %190 = vadd.xlane.f32.xlu0 %v189
    %v191 = vpop.xlane.xlu0 %190
    %v192 = vsel %vm107, %v186, 0.0
    %193 = vadd.xlane.f32.xlu0 %v192
    %v194 = vpop.xlane.xlu0 %193
    %v195 = vrcp.pop 32.0
    %v196 = vmul.f32 %v191, %v195
    %v197 = vmul.f32 %v194, %v195
    %v198 = vsub.f32 %v181, %v196
    %v199 = vsub.f32 %v186, %v197
    %v200 = vmul.f32 %v198, %v198
    %v201 = vmul.f32 %v199, %v199
    %v202 = vsel %vm107, %v200, 0.0
    %203 = vadd.xlane.f32.xlu0 %v202
    %v204 = vpop.xlane.xlu0 %203
    %v205 = vsel %vm107, %v201, 0.0
    %206 = vadd.xlane.f32.xlu0 %v205
    %v207 = vpop.xlane.xlu0 %206
    %v208 = vmul.f32 %v204, %v195
    %v209 = vmul.f32 %v207, %v195
    %v210 = vadd.f32 %v208, 1e-05
    %v211 = vadd.f32 %v209, 1e-05
    %v212 = vrsqrt.pop %v210
    %v213 = vrsqrt.pop %v211
    %v214 = vmul.f32 %v198, %v212
    %v215 = vmul.f32 %v199, %v213
    %v216 = vlaneseq
    %v217 = vshrl.u32 %v216, 7
    %v218 = vsub.s32 0, %v217
    %v219 = vrot.slane %v93, %v218
    %v220 = vmul.f32 %v214, %v219
    %v221 = vmul.f32 %v215, %v219
    %v222 = vlaneseq
    %v223 = vshrl.u32 %v222, 7
    %v224 = vsub.s32 0, %v223
    %v225 = vrot.slane %v94, %v224
    %v226 = vadd.f32 %v220, %v225
    %v227 = vadd.f32 %v221, %v225
    %230 = vrot.lane.b32.xlu0 %v181, 96
    %v231 = vpop.permute.xlu0 %230
    %232 = vrot.lane.b32.xlu0 %v186, 96
    %v233 = vpop.permute.xlu0 %232
    %v236 = vsel %vm107, %v231, 0.0
    %237 = vadd.xlane.f32.xlu0 %v236
    %v238 = vpop.xlane.xlu0 %237
    %v239 = vsel %vm107, %v233, 0.0
    %240 = vadd.xlane.f32.xlu0 %v239
    %v241 = vpop.xlane.xlu0 %240
    %v242 = vmul.f32 %v238, %v195
    %v243 = vmul.f32 %v241, %v195
    %v244 = vsub.f32 %v181, %v242
    %v245 = vsub.f32 %v186, %v243
    %v246 = vmul.f32 %v244, %v244
    %v247 = vmul.f32 %v245, %v245
    %250 = vrot.lane.b32.xlu0 %v246, 96
    %v251 = vpop.permute.xlu0 %250
    %252 = vrot.lane.b32.xlu0 %v247, 96
    %v253 = vpop.permute.xlu0 %252
    %v256 = vsel %vm107, %v251, 0.0
    %257 = vadd.xlane.f32.xlu0 %v256
    %v258 = vpop.xlane.xlu0 %257
    %v259 = vsel %vm107, %v253, 0.0
    %260 = vadd.xlane.f32.xlu0 %v259
    %v261 = vpop.xlane.xlu0 %260
    %v262 = vmul.f32 %v258, %v195
    %v263 = vmul.f32 %v261, %v195
    %v264 = vadd.f32 %v262, 1e-05
    %v265 = vadd.f32 %v263, 1e-05
    %v266 = vrsqrt.pop %v264
    %v267 = vrsqrt.pop %v265
    %v268 = vmul.f32 %v244, %v266
    %v269 = vmul.f32 %v245, %v267
    %271 = vrot.lane.b32.xlu0 %v219, 32
    %v272 = vpop.permute.xlu0 %271
    %v274 = vmul.f32 %v268, %v272
    %v275 = vmul.f32 %v269, %v272
    %277 = vrot.lane.b32.xlu0 %v225, 32
    %v278 = vpop.permute.xlu0 %277
    %v280 = vadd.f32 %v274, %v278
    %v281 = vadd.f32 %v275, %v278
    %v282 = vld [vmem:[#allocation8] sm:$0xff]
    %v283 = vld [vmem:[#allocation8 + $0x8] sm:$0xff]
    %v284 = vld [vmem:[#allocation8 + $0x10] sm:$0xff]
    %v285 = vld [vmem:[#allocation8 + $0x18] sm:$0xff]
    %v287 = vsel %vm107, %v91, 0
    %v290 = vsel %vm107, %v92, 0
    %292 = vmatprep.subr.mxu0 0.0
    %293 = vmatpush1.msra.mxu0 %v282
    %294 = vmatprep.subr.mxu0 0.0
    %295 = vmatpush1.msra.mxu0 %v283
    %296 = vmatprep.subr.mxu0 0.0
    %297 = vmatpush1.msra.mxu0 %v284
    %298 = vmatprep.subr.mxu0 0.0
    %299 = vmatpush1.msra.mxu0 %v285
    %300 = vmatprep.subr.mxu0 0.0
    %301 = vmatpush1.msra.mxu0 0.0
    %302 = vmatprep.subr.mxu0 0.0
    %303 = vmatpush1.msra.mxu0 0.0
    %304 = vmatprep.subr.mxu0 0.0
    %305 = vmatpush1.msra.mxu0 0.0
    %306 = vmatprep.subr.mxu0 0.0
    %307 = vmatpush1.msra.mxu0 0.0
    %308 = vmatprep.subr.mxu0 0.0
    %309 = vmatpush1.msra.mxu0 0.0
    %310 = vmatprep.subr.mxu0 0.0
    %311 = vmatpush1.msra.mxu0 0.0
    %312 = vmatprep.subr.mxu0 0.0
    %313 = vmatpush1.msra.mxu0 0.0
    %314 = vmatprep.subr.mxu0 0.0
    %315 = vmatpush1.msra.mxu0 0.0
    %316 = vmatprep.subr.mxu0 0.0
    %317 = vmatpush1.msra.mxu0 0.0
    %318 = vmatprep.subr.mxu0 0.0
    %319 = vmatpush1.msra.mxu0 0.0
    %320 = vmatprep.subr.mxu0 0.0
    %321 = vmatpush1.msra.mxu0 0.0
    %322 = vmatprep.subr.mxu0 0.0
    %323 = vmatpush1.msra.mxu0 0.0
    %324 = vmatprep.subr.mxu0 0.0
    %325 = vmatpush1.msra.mxu0 0.0
    %326 = vmatprep.subr.mxu0 0.0
    %327 = vmatpush1.msra.mxu0 0.0
    %328 = vmatprep.subr.mxu0 0.0
    %329 = vmatpush1.msra.mxu0 0.0
    %330 = vmatprep.subr.mxu0 0.0
    %331 = vmatpush1.msra.mxu0 0.0
    %332 = vmatprep.subr.mxu0 0.0
    %333 = vmatpush1.msra.mxu0 0.0
    %334 = vmatprep.subr.mxu0 0.0
    %335 = vmatpush1.msra.mxu0 0.0
    %336 = vmatprep.subr.mxu0 0.0
    %337 = vmatpush1.msra.mxu0 0.0
    %338 = vmatprep.subr.mxu0 0.0
    %339 = vmatpush1.msra.mxu0 0.0
    %340 = vmatprep.subr.mxu0 0.0
    %341 = vmatpush1.msra.mxu0 0.0
    %342 = vmatprep.subr.mxu0 0.0
    %343 = vmatpush1.msra.mxu0 0.0
    %344 = vmatprep.subr.mxu0 0.0
    %345 = vmatpush1.msra.mxu0 0.0
    %346 = vmatprep.subr.mxu0 0.0
    %347 = vmatpush1.msra.mxu0 0.0
    %348 = vmatprep.subr.mxu0 0.0
    %349 = vmatpush1.msra.mxu0 0.0
    %350 = vmatprep.subr.mxu0 0.0
    %351 = vmatpush1.msra.mxu0 0.0
    %352 = vmatprep.subr.mxu0 0.0
    %353 = vmatpush1.msra.mxu0 0.0
    %354 = vmatprep.subr.mxu0 0.0
    %355 = vmatpush1.msra.mxu0 0.0
    %356 = vmatprep.mubr.f32.mxu0 0.0
    %357 = vmatmul.mubr.f32.gmra.mrb[0].mxu0 %v287
    %v358 = vpop.f32.mrb[0].mxu0
    %v359 = vadd.f32 0.0, %v358
    %v360 = vpop.f32.mrb[0].mxu0
    %361 = vmatprep.mubr.f32.mxu0 0.0
    %362 = vmatmul.mubr.f32.gmra.mrb[0].mxu0 %v290
    %v363 = vpop.f32.mrb[0].mxu0
    %v364 = vadd.f32 0.0, %v363
    %v365 = vpop.f32.mrb[0].mxu0
    %366 = vdwg.mxu0
    %v367 = vsel %vm107, %v359, 0.0
    %368 = vadd.xlane.f32.xlu0 %v367
    %v369 = vpop.xlane.xlu0 %368
    %v370 = vsel %vm107, %v364, 0.0
    %371 = vadd.xlane.f32.xlu0 %v370
    %v372 = vpop.xlane.xlu0 %371
    %v373 = vmul.f32 %v369, %v195
    %v374 = vmul.f32 %v372, %v195
    %v375 = vsub.f32 %v359, %v373
    %v376 = vsub.f32 %v364, %v374
    %v377 = vmul.f32 %v375, %v375
    %v378 = vmul.f32 %v376, %v376
    %v379 = vsel %vm107, %v377, 0.0
    %380 = vadd.xlane.f32.xlu0 %v379
    %v381 = vpop.xlane.xlu0 %380
    %v382 = vsel %vm107, %v378, 0.0
    %383 = vadd.xlane.f32.xlu0 %v382
    %v384 = vpop.xlane.xlu0 %383
    %v385 = vmul.f32 %v381, %v195
    %v386 = vmul.f32 %v384, %v195
    %v387 = vadd.f32 %v385, 1e-05
    %v388 = vadd.f32 %v386, 1e-05
    %v389 = vrsqrt.pop %v387
    %v390 = vrsqrt.pop %v388
    %v391 = vmul.f32 %v375, %v389
    %v392 = vmul.f32 %v376, %v390
    %v393 = vmul.f32 %v391, %v219
    %v394 = vmul.f32 %v392, %v219
    %v395 = vadd.f32 %v393, %v225
    %v396 = vadd.f32 %v394, %v225
    %s397 = scalar_lea.vmem [#allocation8], 32
    %v398 = vld [vmem:[%s397] sm:$0xff]
    %v399 = vld [vmem:[%s397 + $0x8] sm:$0xff]
    %v400 = vld [vmem:[%s397 + $0x10] sm:$0xff]
    %v401 = vld [vmem:[%s397 + $0x18] sm:$0xff]
    %v402 = vlaneseq
    %v403 = vshrl.u32 %v402, 7
    %v404 = vsub.s32 0, %v403
    %v405 = vrot.slane %v95, %v404
    %v407 = vsel %vm107, %v395, 0
    %v410 = vsel %vm107, %v396, 0
    %412 = vmatprep.subr.mxu0 0.0
    %413 = vmatpush1.msra.mxu0 %v398
    %414 = vmatprep.subr.mxu0 0.0
    %415 = vmatpush1.msra.mxu0 %v399
    %416 = vmatprep.subr.mxu0 0.0
    %417 = vmatpush1.msra.mxu0 %v400
    %418 = vmatprep.subr.mxu0 0.0
    %419 = vmatpush1.msra.mxu0 %v401
    %420 = vmatprep.subr.mxu0 0.0
    %421 = vmatpush1.msra.mxu0 0.0
    %422 = vmatprep.subr.mxu0 0.0
    %423 = vmatpush1.msra.mxu0 0.0
    %424 = vmatprep.subr.mxu0 0.0
    %425 = vmatpush1.msra.mxu0 0.0
    %426 = vmatprep.subr.mxu0 0.0
    %427 = vmatpush1.msra.mxu0 0.0
    %428 = vmatprep.subr.mxu0 0.0
    %429 = vmatpush1.msra.mxu0 0.0
    %430 = vmatprep.subr.mxu0 0.0
    %431 = vmatpush1.msra.mxu0 0.0
    %432 = vmatprep.subr.mxu0 0.0
    %433 = vmatpush1.msra.mxu0 0.0
    %434 = vmatprep.subr.mxu0 0.0
    %435 = vmatpush1.msra.mxu0 0.0
    %436 = vmatprep.subr.mxu0 0.0
    %437 = vmatpush1.msra.mxu0 0.0
    %438 = vmatprep.subr.mxu0 0.0
    %439 = vmatpush1.msra.mxu0 0.0
    %440 = vmatprep.subr.mxu0 0.0
    %441 = vmatpush1.msra.mxu0 0.0
    %442 = vmatprep.subr.mxu0 0.0
    %443 = vmatpush1.msra.mxu0 0.0
    %444 = vmatprep.subr.mxu0 0.0
    %445 = vmatpush1.msra.mxu0 0.0
    %446 = vmatprep.subr.mxu0 0.0
    %447 = vmatpush1.msra.mxu0 0.0
    %448 = vmatprep.subr.mxu0 0.0
    %449 = vmatpush1.msra.mxu0 0.0
    %450 = vmatprep.subr.mxu0 0.0
    %451 = vmatpush1.msra.mxu0 0.0
    %452 = vmatprep.subr.mxu0 0.0
    %453 = vmatpush1.msra.mxu0 0.0
    %454 = vmatprep.subr.mxu0 0.0
    %455 = vmatpush1.msra.mxu0 0.0
    %456 = vmatprep.subr.mxu0 0.0
    %457 = vmatpush1.msra.mxu0 0.0
    %458 = vmatprep.subr.mxu0 0.0
    %459 = vmatpush1.msra.mxu0 0.0
    %460 = vmatprep.subr.mxu0 0.0
    %461 = vmatpush1.msra.mxu0 0.0
    %462 = vmatprep.subr.mxu0 0.0
    %463 = vmatpush1.msra.mxu0 0.0
    %464 = vmatprep.subr.mxu0 0.0
    %465 = vmatpush1.msra.mxu0 0.0
    %466 = vmatprep.subr.mxu0 0.0
    %467 = vmatpush1.msra.mxu0 0.0
    %468 = vmatprep.subr.mxu0 0.0
    %469 = vmatpush1.msra.mxu0 0.0
    %470 = vmatprep.subr.mxu0 0.0
    %471 = vmatpush1.msra.mxu0 0.0
    %472 = vmatprep.subr.mxu0 0.0
    %473 = vmatpush1.msra.mxu0 0.0
    %474 = vmatprep.subr.mxu0 0.0
    %475 = vmatpush1.msra.mxu0 0.0
    %476 = vmatprep.mubr.f32.mxu0 0.0
    %477 = vmatmul.mubr.f32.gmra.mrb[0].mxu0 %v407
    %v478 = vpop.f32.mrb[0].mxu0
    %v479 = vadd.f32 %v405, %v478
    %v480 = vpop.f32.mrb[0].mxu0
    %481 = vmatprep.mubr.f32.mxu0 0.0
    %482 = vmatmul.mubr.f32.gmra.mrb[0].mxu0 %v410
    %v483 = vpop.f32.mrb[0].mxu0
    %v484 = vadd.f32 %v405, %v483
    %v485 = vpop.f32.mrb[0].mxu0
    %486 = vdwg.mxu0
    %s487 = scalar_lea.vmem [#allocation8], 64
    %v488 = vld [vmem:[%s487] sm:$0xff]
    %v489 = vld [vmem:[%s487 + $0x8] sm:$0xff]
    %v490 = vld [vmem:[%s487 + $0x10] sm:$0xff]
    %v491 = vld [vmem:[%s487 + $0x18] sm:$0xff]
    %v492 = vlaneseq
    %v493 = vshrl.u32 %v492, 7
    %v494 = vsub.s32 0, %v493
    %v495 = vrot.slane %v96, %v494
    %498 = vrot.lane.b32.xlu0 %v280, 96
    %v499 = vpop.permute.xlu0 %498
    %500 = vrot.lane.b32.xlu0 %v281, 96
    %v501 = vpop.permute.xlu0 %500
    %v502 = vsel %vm107, %v499, 0
    %v504 = vsel %vm107, %v501, 0
    %506 = vmatprep.subr.mxu0 0.0
    %507 = vmatpush1.msra.mxu0 %v488
    %508 = vmatprep.subr.mxu0 0.0
    %509 = vmatpush1.msra.mxu0 %v489
    %510 = vmatprep.subr.mxu0 0.0
    %511 = vmatpush1.msra.mxu0 %v490
    %512 = vmatprep.subr.mxu0 0.0
    %513 = vmatpush1.msra.mxu0 %v491
    %514 = vmatprep.subr.mxu0 0.0
    %515 = vmatpush1.msra.mxu0 0.0
    %516 = vmatprep.subr.mxu0 0.0
    %517 = vmatpush1.msra.mxu0 0.0
    %518 = vmatprep.subr.mxu0 0.0
    %519 = vmatpush1.msra.mxu0 0.0
    %520 = vmatprep.subr.mxu0 0.0
    %521 = vmatpush1.msra.mxu0 0.0
    %522 = vmatprep.subr.mxu0 0.0
    %523 = vmatpush1.msra.mxu0 0.0
    %524 = vmatprep.subr.mxu0 0.0
    %525 = vmatpush1.msra.mxu0 0.0
    %526 = vmatprep.subr.mxu0 0.0
    %527 = vmatpush1.msra.mxu0 0.0
    %528 = vmatprep.subr.mxu0 0.0
    %529 = vmatpush1.msra.mxu0 0.0
    %530 = vmatprep.subr.mxu0 0.0
    %531 = vmatpush1.msra.mxu0 0.0
    %532 = vmatprep.subr.mxu0 0.0
    %533 = vmatpush1.msra.mxu0 0.0
    %534 = vmatprep.subr.mxu0 0.0
    %535 = vmatpush1.msra.mxu0 0.0
    %536 = vmatprep.subr.mxu0 0.0
    %537 = vmatpush1.msra.mxu0 0.0
    %538 = vmatprep.subr.mxu0 0.0
    %539 = vmatpush1.msra.mxu0 0.0
    %540 = vmatprep.subr.mxu0 0.0
    %541 = vmatpush1.msra.mxu0 0.0
    %542 = vmatprep.subr.mxu0 0.0
    %543 = vmatpush1.msra.mxu0 0.0
    %544 = vmatprep.subr.mxu0 0.0
    %545 = vmatpush1.msra.mxu0 0.0
    %546 = vmatprep.subr.mxu0 0.0
    %547 = vmatpush1.msra.mxu0 0.0
    %548 = vmatprep.subr.mxu0 0.0
    %549 = vmatpush1.msra.mxu0 0.0
    %550 = vmatprep.subr.mxu0 0.0
    %551 = vmatpush1.msra.mxu0 0.0
    %552 = vmatprep.subr.mxu0 0.0
    %553 = vmatpush1.msra.mxu0 0.0
    %554 = vmatprep.subr.mxu0 0.0
    %555 = vmatpush1.msra.mxu0 0.0
    %556 = vmatprep.subr.mxu0 0.0
    %557 = vmatpush1.msra.mxu0 0.0
    %558 = vmatprep.subr.mxu0 0.0
    %559 = vmatpush1.msra.mxu0 0.0
    %560 = vmatprep.subr.mxu0 0.0
    %561 = vmatpush1.msra.mxu0 0.0
    %562 = vmatprep.subr.mxu0 0.0
    %563 = vmatpush1.msra.mxu0 0.0
    %564 = vmatprep.subr.mxu0 0.0
    %565 = vmatpush1.msra.mxu0 0.0
    %566 = vmatprep.subr.mxu0 0.0
    %567 = vmatpush1.msra.mxu0 0.0
    %568 = vmatprep.subr.mxu0 0.0
    %569 = vmatpush1.msra.mxu0 0.0
    %570 = vmatprep.mubr.f32.mxu0 0.0
    %571 = vmatmul.mubr.f32.gmra.mrb[0].mxu0 %v502
    %v572 = vpop.f32.mrb[0].mxu0
    %v573 = vadd.f32 %v495, %v572
    %v574 = vpop.f32.mrb[0].mxu0
    %575 = vmatprep.mubr.f32.mxu0 0.0
    %576 = vmatmul.mubr.f32.gmra.mrb[0].mxu0 %v504
    %v577 = vpop.f32.mrb[0].mxu0
    %v578 = vadd.f32 %v495, %v577
    %v579 = vpop.f32.mrb[0].mxu0
    %580 = vdwg.mxu0
    %s581 = scalar_lea.vmem [#allocation8], 96
    %v582 = vld [vmem:[%s581] sm:$0xff]
    %v583 = vld [vmem:[%s581 + $0x8] sm:$0xff]
    %v584 = vld [vmem:[%s581 + $0x10] sm:$0xff]
    %v585 = vld [vmem:[%s581 + $0x18] sm:$0xff]
    %v586 = vlaneseq
    %v587 = vshrl.u32 %v586, 7
    %v588 = vsub.s32 0, %v587
    %v589 = vrot.slane %v97, %v588
    %v591 = vsel %vm107, %v226, 0
    %v594 = vsel %vm107, %v227, 0
    %596 = vmatprep.subr.mxu0 0.0
    %597 = vmatpush1.msra.mxu0 %v582
    %598 = vmatprep.subr.mxu0 0.0
    %599 = vmatpush1.msra.mxu0 %v583
    %600 = vmatprep.subr.mxu0 0.0
    %601 = vmatpush1.msra.mxu0 %v584
    %602 = vmatprep.subr.mxu0 0.0
    %603 = vmatpush1.msra.mxu0 %v585
    %604 = vmatprep.subr.mxu0 0.0
    %605 = vmatpush1.msra.mxu0 0.0
    %606 = vmatprep.subr.mxu0 0.0
    %607 = vmatpush1.msra.mxu0 0.0
    %608 = vmatprep.subr.mxu0 0.0
    %609 = vmatpush1.msra.mxu0 0.0
    %610 = vmatprep.subr.mxu0 0.0
    %611 = vmatpush1.msra.mxu0 0.0
    %612 = vmatprep.subr.mxu0 0.0
    %613 = vmatpush1.msra.mxu0 0.0
    %614 = vmatprep.subr.mxu0 0.0
    %615 = vmatpush1.msra.mxu0 0.0
    %616 = vmatprep.subr.mxu0 0.0
    %617 = vmatpush1.msra.mxu0 0.0
    %618 = vmatprep.subr.mxu0 0.0
    %619 = vmatpush1.msra.mxu0 0.0
    %620 = vmatprep.subr.mxu0 0.0
    %621 = vmatpush1.msra.mxu0 0.0
    %622 = vmatprep.subr.mxu0 0.0
    %623 = vmatpush1.msra.mxu0 0.0
    %624 = vmatprep.subr.mxu0 0.0
    %625 = vmatpush1.msra.mxu0 0.0
    %626 = vmatprep.subr.mxu0 0.0
    %627 = vmatpush1.msra.mxu0 0.0
    %628 = vmatprep.subr.mxu0 0.0
    %629 = vmatpush1.msra.mxu0 0.0
    %630 = vmatprep.subr.mxu0 0.0
    %631 = vmatpush1.msra.mxu0 0.0
    %632 = vmatprep.subr.mxu0 0.0
    %633 = vmatpush1.msra.mxu0 0.0
    %634 = vmatprep.subr.mxu0 0.0
    %635 = vmatpush1.msra.mxu0 0.0
    %636 = vmatprep.subr.mxu0 0.0
    %637 = vmatpush1.msra.mxu0 0.0
    %638 = vmatprep.subr.mxu0 0.0
    %639 = vmatpush1.msra.mxu0 0.0
    %640 = vmatprep.subr.mxu0 0.0
    %641 = vmatpush1.msra.mxu0 0.0
    %642 = vmatprep.subr.mxu0 0.0
    %643 = vmatpush1.msra.mxu0 0.0
    %644 = vmatprep.subr.mxu0 0.0
    %645 = vmatpush1.msra.mxu0 0.0
    %646 = vmatprep.subr.mxu0 0.0
    %647 = vmatpush1.msra.mxu0 0.0
    %648 = vmatprep.subr.mxu0 0.0
    %649 = vmatpush1.msra.mxu0 0.0
    %650 = vmatprep.subr.mxu0 0.0
    %651 = vmatpush1.msra.mxu0 0.0
    %652 = vmatprep.subr.mxu0 0.0
    %653 = vmatpush1.msra.mxu0 0.0
    %654 = vmatprep.subr.mxu0 0.0
    %655 = vmatpush1.msra.mxu0 0.0
    %656 = vmatprep.subr.mxu0 0.0
    %657 = vmatpush1.msra.mxu0 0.0
    %658 = vmatprep.subr.mxu0 0.0
    %659 = vmatpush1.msra.mxu0 0.0
    %660 = vmatprep.mubr.f32.mxu0 0.0
    %661 = vmatmul.mubr.f32.gmra.mrb[0].mxu0 %v591
    %v662 = vpop.f32.mrb[0].mxu0
    %v663 = vadd.f32 %v589, %v662
    %v664 = vpop.f32.mrb[0].mxu0
    %665 = vmatprep.mubr.f32.mxu0 0.0
    %666 = vmatmul.mubr.f32.gmra.mrb[0].mxu0 %v594
    %v667 = vpop.f32.mrb[0].mxu0
    %v668 = vadd.f32 %v589, %v667
    %v669 = vpop.f32.mrb[0].mxu0
    %670 = vdwg.mxu0
    %s671 = scalar_lea.vmem [#allocation8], 128
    %v672 = vld [vmem:[%s671] sm:$0xff]
    %v673 = vld [vmem:[%s671 + $0x8] sm:$0xff]
    %v674 = vld [vmem:[%s671 + $0x10] sm:$0xff]
    %v675 = vld [vmem:[%s671 + $0x18] sm:$0xff]
    %v676 = vlaneseq
    %v677 = vshrl.u32 %v676, 7
    %v678 = vlaneseq
    %v679 = vand.u32 %v678, 127
    %vm680 = vcmp.gt.s32.totalorder %v679, %v677
    %vm681 = vcmask 64512
    %v683 = vsel %vm681, %v479, 0
    %v686 = vsel %vm681, %v573, 0
    %688 = vmatprep.subr.mxu0 0.0
    %689 = vmatpush1.xpose.msra.mxu0 %v686
    %690 = vmatprep.subr.mxu0 0.0
    %691 = vmatpush1.xpose.msra.mxu0 0.0
    %692 = vmatprep.subr.mxu0 0.0
    %693 = vmatpush1.xpose.msra.mxu0 0.0
    %694 = vmatprep.subr.mxu0 0.0
    %695 = vmatpush1.xpose.msra.mxu0 0.0
    %696 = vmatprep.subr.mxu0 0.0
    %697 = vmatpush1.xpose.msra.mxu0 0.0
    %698 = vmatprep.subr.mxu0 0.0
    %699 = vmatpush1.xpose.msra.mxu0 0.0
    %700 = vmatprep.subr.mxu0 0.0
    %701 = vmatpush1.xpose.msra.mxu0 0.0
    %702 = vmatprep.subr.mxu0 0.0
    %703 = vmatpush1.xpose.msra.mxu0 0.0
    %704 = vmatprep.subr.mxu0 0.0
    %705 = vmatpush1.xpose.msra.mxu0 0.0
    %706 = vmatprep.subr.mxu0 0.0
    %707 = vmatpush1.xpose.msra.mxu0 0.0
    %708 = vmatprep.subr.mxu0 0.0
    %709 = vmatpush1.xpose.msra.mxu0 0.0
    %710 = vmatprep.subr.mxu0 0.0
    %711 = vmatpush1.xpose.msra.mxu0 0.0
    %712 = vmatprep.subr.mxu0 0.0
    %713 = vmatpush1.xpose.msra.mxu0 0.0
    %714 = vmatprep.subr.mxu0 0.0
    %715 = vmatpush1.xpose.msra.mxu0 0.0
    %716 = vmatprep.subr.mxu0 0.0
    %717 = vmatpush1.xpose.msra.mxu0 0.0
    %718 = vmatprep.subr.mxu0 0.0
    %719 = vmatpush1.xpose.msra.mxu0 0.0
    %720 = vmatprep.subr.mxu0 0.0
    %721 = vmatpush1.xpose.msra.mxu0 0.0
    %722 = vmatprep.subr.mxu0 0.0
    %723 = vmatpush1.xpose.msra.mxu0 0.0
    %724 = vmatprep.subr.mxu0 0.0
    %725 = vmatpush1.xpose.msra.mxu0 0.0
    %726 = vmatprep.subr.mxu0 0.0
    %727 = vmatpush1.xpose.msra.mxu0 0.0
    %728 = vmatprep.subr.mxu0 0.0
    %729 = vmatpush1.xpose.msra.mxu0 0.0
    %730 = vmatprep.subr.mxu0 0.0
    %731 = vmatpush1.xpose.msra.mxu0 0.0
    %732 = vmatprep.subr.mxu0 0.0
    %733 = vmatpush1.xpose.msra.mxu0 0.0
    %734 = vmatprep.subr.mxu0 0.0
    %735 = vmatpush1.xpose.msra.mxu0 0.0
    %736 = vmatprep.subr.mxu0 0.0
    %737 = vmatpush1.xpose.msra.mxu0 0.0
    %738 = vmatprep.subr.mxu0 0.0
    %739 = vmatpush1.xpose.msra.mxu0 0.0
    %740 = vmatprep.subr.mxu0 0.0
    %741 = vmatpush1.xpose.msra.mxu0 0.0
    %742 = vmatprep.subr.mxu0 0.0
    %743 = vmatpush1.xpose.msra.mxu0 0.0
    %744 = vmatprep.subr.mxu0 0.0
    %745 = vmatpush1.xpose.msra.mxu0 0.0
    %746 = vmatprep.subr.mxu0 0.0
    %747 = vmatpush1.xpose.msra.mxu0 0.0
    %748 = vmatprep.subr.mxu0 0.0
    %749 = vmatpush1.xpose.msra.mxu0 0.0
    %750 = vmatprep.subr.mxu0 0.0
    %751 = vmatpush1.xpose.msra.mxu0 0.0
    %752 = vmatprep.mubr.f32.mxu0 0.0
    %753 = vmatmul.mubr.f32.gmra.mrb[0].mxu0 %v683
    %v754 = vpop.f32.mrb[0].mxu0
    %v755 = vadd.f32 0.0, %v754
    %v756 = vpop.f32.mrb[0].mxu0
    %757 = vdwg.mxu0
    %v759 = vsel %vm681, %v484, 0
    %v762 = vsel %vm681, %v578, 0
    %764 = vmatprep.subr.mxu0 0.0
    %765 = vmatpush1.xpose.msra.mxu0 %v762
    %766 = vmatprep.subr.mxu0 0.0
    %767 = vmatpush1.xpose.msra.mxu0 0.0
    %768 = vmatprep.subr.mxu0 0.0
    %769 = vmatpush1.xpose.msra.mxu0 0.0
    %770 = vmatprep.subr.mxu0 0.0
    %771 = vmatpush1.xpose.msra.mxu0 0.0
    %772 = vmatprep.subr.mxu0 0.0
    %773 = vmatpush1.xpose.msra.mxu0 0.0
    %774 = vmatprep.subr.mxu0 0.0
    %775 = vmatpush1.xpose.msra.mxu0 0.0
    %776 = vmatprep.subr.mxu0 0.0
    %777 = vmatpush1.xpose.msra.mxu0 0.0
    %778 = vmatprep.subr.mxu0 0.0
    %779 = vmatpush1.xpose.msra.mxu0 0.0
    %780 = vmatprep.subr.mxu0 0.0
    %781 = vmatpush1.xpose.msra.mxu0 0.0
    %782 = vmatprep.subr.mxu0 0.0
    %783 = vmatpush1.xpose.msra.mxu0 0.0
    %784 = vmatprep.subr.mxu0 0.0
    %785 = vmatpush1.xpose.msra.mxu0 0.0
    %786 = vmatprep.subr.mxu0 0.0
    %787 = vmatpush1.xpose.msra.mxu0 0.0
    %788 = vmatprep.subr.mxu0 0.0
    %789 = vmatpush1.xpose.msra.mxu0 0.0
    %790 = vmatprep.subr.mxu0 0.0
    %791 = vmatpush1.xpose.msra.mxu0 0.0
    %792 = vmatprep.subr.mxu0 0.0
    %793 = vmatpush1.xpose.msra.mxu0 0.0
    %794 = vmatprep.subr.mxu0 0.0
    %795 = vmatpush1.xpose.msra.mxu0 0.0
    %796 = vmatprep.subr.mxu0 0.0
    %797 = vmatpush1.xpose.msra.mxu0 0.0
    %798 = vmatprep.subr.mxu0 0.0
    %799 = vmatpush1.xpose.msra.mxu0 0.0
    %800 = vmatprep.subr.mxu0 0.0
    %801 = vmatpush1.xpose.msra.mxu0 0.0
    %802 = vmatprep.subr.mxu0 0.0
    %803 = vmatpush1.xpose.msra.mxu0 0.0
    %804 = vmatprep.subr.mxu0 0.0
    %805 = vmatpush1.xpose.msra.mxu0 0.0
    %806 = vmatprep.subr.mxu0 0.0
    %807 = vmatpush1.xpose.msra.mxu0 0.0
    %808 = vmatprep.subr.mxu0 0.0
    %809 = vmatpush1.xpose.msra.mxu0 0.0
    %810 = vmatprep.subr.mxu0 0.0
    %811 = vmatpush1.xpose.msra.mxu0 0.0
    %812 = vmatprep.subr.mxu0 0.0
    %813 = vmatpush1.xpose.msra.mxu0 0.0
    %814 = vmatprep.subr.mxu0 0.0
    %815 = vmatpush1.xpose.msra.mxu0 0.0
    %816 = vmatprep.subr.mxu0 0.0
    %817 = vmatpush1.xpose.msra.mxu0 0.0
    %818 = vmatprep.subr.mxu0 0.0
    %819 = vmatpush1.xpose.msra.mxu0 0.0
    %820 = vmatprep.subr.mxu0 0.0
    %821 = vmatpush1.xpose.msra.mxu0 0.0
    %822 = vmatprep.subr.mxu0 0.0
    %823 = vmatpush1.xpose.msra.mxu0 0.0
    %824 = vmatprep.subr.mxu0 0.0
    %825 = vmatpush1.xpose.msra.mxu0 0.0
    %826 = vmatprep.subr.mxu0 0.0
    %827 = vmatpush1.xpose.msra.mxu0 0.0
    %828 = vmatprep.mubr.f32.mxu0 0.0
    %829 = vmatmul.mubr.f32.gmra.mrb[0].mxu0 %v759
    %v830 = vpop.f32.mrb[0].mxu0
    %v831 = vadd.f32 0.0, %v830
    %v832 = vpop.f32.mrb[0].mxu0
    %833 = vdwg.mxu0
    %v834 = vsel %vm680, 1, 0
    %vm835 = vcmp.eq.s32.totalorder %v834, 1
    %v836 = vsel %vm835, -1e+30, %v755
    %v837 = vsel %vm835, -1e+30, %v831
    %v838 = vsel %vm681, %v836, -inf
    %839 = vmax.xlane.f32.xlu0 %v838
    %v840 = vpop.xlane.xlu0 %839
    %v841 = vsel %vm681, %v837, -inf
    %842 = vmax.xlane.f32.xlu0 %v841
    %v843 = vpop.xlane.xlu0 %842
    %v844 = vsub.f32 %v836, %v840
    %v845 = vsub.f32 %v837, %v843
    %v846 = vmul.f32 %v844, 1.442695
    %v847 = vpow.pop %v846
    %v848 = vmul.f32 %v845, 1.442695
    %v849 = vpow.pop %v848
    %v850 = vsel %vm681, %v847, 0.0
    %851 = vadd.xlane.f32.xlu0 %v850
    %v852 = vpop.xlane.xlu0 %851
    %v853 = vsel %vm681, %v849, 0.0
    %854 = vadd.xlane.f32.xlu0 %v853
    %v855 = vpop.xlane.xlu0 %854
    %v856 = vrcp.pop %v852
    %v857 = vrcp.pop %v855
    %v858 = vmul.f32 %v847, %v856
    %v859 = vmul.f32 %v849, %v857
    %v861 = vsel %vm681, %v858, 0
    %863 = vmatprep.subr.mxu0 0.0
    %864 = vmatpush1.msra.mxu0 %v663
    %865 = vmatprep.subr.mxu0 0.0
    %866 = vmatpush1.msra.mxu0 0.0
    %867 = vmatprep.subr.mxu0 0.0
    %868 = vmatpush1.msra.mxu0 0.0
    %869 = vmatprep.subr.mxu0 0.0
    %870 = vmatpush1.msra.mxu0 0.0
    %871 = vmatprep.subr.mxu0 0.0
    %872 = vmatpush1.msra.mxu0 0.0
    %873 = vmatprep.subr.mxu0 0.0
    %874 = vmatpush1.msra.mxu0 0.0
    %875 = vmatprep.subr.mxu0 0.0
    %876 = vmatpush1.msra.mxu0 0.0
    %877 = vmatprep.subr.mxu0 0.0
    %878 = vmatpush1.msra.mxu0 0.0
    %879 = vmatprep.subr.mxu0 0.0
    %880 = vmatpush1.msra.mxu0 0.0
    %881 = vmatprep.subr.mxu0 0.0
    %882 = vmatpush1.msra.mxu0 0.0
    %883 = vmatprep.subr.mxu0 0.0
    %884 = vmatpush1.msra.mxu0 0.0
    %885 = vmatprep.subr.mxu0 0.0
    %886 = vmatpush1.msra.mxu0 0.0
    %887 = vmatprep.subr.mxu0 0.0
    %888 = vmatpush1.msra.mxu0 0.0
    %889 = vmatprep.subr.mxu0 0.0
    %890 = vmatpush1.msra.mxu0 0.0
    %891 = vmatprep.subr.mxu0 0.0
    %892 = vmatpush1.msra.mxu0 0.0
    %893 = vmatprep.subr.mxu0 0.0
    %894 = vmatpush1.msra.mxu0 0.0
    %895 = vmatprep.subr.mxu0 0.0
    %896 = vmatpush1.msra.mxu0 0.0
    %897 = vmatprep.subr.mxu0 0.0
    %898 = vmatpush1.msra.mxu0 0.0
    %899 = vmatprep.subr.mxu0 0.0
    %900 = vmatpush1.msra.mxu0 0.0
    %901 = vmatprep.subr.mxu0 0.0
    %902 = vmatpush1.msra.mxu0 0.0
    %903 = vmatprep.subr.mxu0 0.0
    %904 = vmatpush1.msra.mxu0 0.0
    %905 = vmatprep.subr.mxu0 0.0
    %906 = vmatpush1.msra.mxu0 0.0
    %907 = vmatprep.subr.mxu0 0.0
    %908 = vmatpush1.msra.mxu0 0.0
    %909 = vmatprep.subr.mxu0 0.0
    %910 = vmatpush1.msra.mxu0 0.0
    %911 = vmatprep.subr.mxu0 0.0
    %912 = vmatpush1.msra.mxu0 0.0
    %913 = vmatprep.subr.mxu0 0.0
    %914 = vmatpush1.msra.mxu0 0.0
    %915 = vmatprep.subr.mxu0 0.0
    %916 = vmatpush1.msra.mxu0 0.0
    %917 = vmatprep.subr.mxu0 0.0
    %918 = vmatpush1.msra.mxu0 0.0
    %919 = vmatprep.subr.mxu0 0.0
    %920 = vmatpush1.msra.mxu0 0.0
    %921 = vmatprep.subr.mxu0 0.0
    %922 = vmatpush1.msra.mxu0 0.0
    %923 = vmatprep.subr.mxu0 0.0
    %924 = vmatpush1.msra.mxu0 0.0
    %925 = vmatprep.subr.mxu0 0.0
    %926 = vmatpush1.msra.mxu0 0.0
    %927 = vmatprep.mubr.f32.mxu0 0.0
    %928 = vmatmul.mubr.f32.gmra.mrb[0].mxu0 %v861
    %v929 = vpop.f32.mrb[0].mxu0
    %v930 = vadd.f32 0.0, %v929
    %v931 = vpop.f32.mrb[0].mxu0
    %932 = vdwg.mxu0
    %v934 = vsel %vm681, %v859, 0
    %936 = vmatprep.subr.mxu0 0.0
    %937 = vmatpush1.msra.mxu0 %v668
    %938 = vmatprep.subr.mxu0 0.0
    %939 = vmatpush1.msra.mxu0 0.0
    %940 = vmatprep.subr.mxu0 0.0
    %941 = vmatpush1.msra.mxu0 0.0
    %942 = vmatprep.subr.mxu0 0.0
    %943 = vmatpush1.msra.mxu0 0.0
    %944 = vmatprep.subr.mxu0 0.0
    %945 = vmatpush1.msra.mxu0 0.0
    %946 = vmatprep.subr.mxu0 0.0
    %947 = vmatpush1.msra.mxu0 0.0
    %948 = vmatprep.subr.mxu0 0.0
    %949 = vmatpush1.msra.mxu0 0.0
    %950 = vmatprep.subr.mxu0 0.0
    %951 = vmatpush1.msra.mxu0 0.0
    %952 = vmatprep.subr.mxu0 0.0
    %953 = vmatpush1.msra.mxu0 0.0
    %954 = vmatprep.subr.mxu0 0.0
    %955 = vmatpush1.msra.mxu0 0.0
    %956 = vmatprep.subr.mxu0 0.0
    %957 = vmatpush1.msra.mxu0 0.0
    %958 = vmatprep.subr.mxu0 0.0
    %959 = vmatpush1.msra.mxu0 0.0
    %960 = vmatprep.subr.mxu0 0.0
    %961 = vmatpush1.msra.mxu0 0.0
    %962 = vmatprep.subr.mxu0 0.0
    %963 = vmatpush1.msra.mxu0 0.0
    %964 = vmatprep.subr.mxu0 0.0
    %965 = vmatpush1.msra.mxu0 0.0
    %966 = vmatprep.subr.mxu0 0.0
    %967 = vmatpush1.msra.mxu0 0.0
    %968 = vmatprep.subr.mxu0 0.0
    %969 = vmatpush1.msra.mxu0 0.0
    %970 = vmatprep.subr.mxu0 0.0
    %971 = vmatpush1.msra.mxu0 0.0
    %972 = vmatprep.subr.mxu0 0.0
    %973 = vmatpush1.msra.mxu0 0.0
    %974 = vmatprep.subr.mxu0 0.0
    %975 = vmatpush1.msra.mxu0 0.0
    %976 = vmatprep.subr.mxu0 0.0
    %977 = vmatpush1.msra.mxu0 0.0
    %978 = vmatprep.subr.mxu0 0.0
    %979 = vmatpush1.msra.mxu0 0.0
    %980 = vmatprep.subr.mxu0 0.0
    %981 = vmatpush1.msra.mxu0 0.0
    %982 = vmatprep.subr.mxu0 0.0
    %983 = vmatpush1.msra.mxu0 0.0
    %984 = vmatprep.subr.mxu0 0.0
    %985 = vmatpush1.msra.mxu0 0.0
    %986 = vmatprep.subr.mxu0 0.0
    %987 = vmatpush1.msra.mxu0 0.0
    %988 = vmatprep.subr.mxu0 0.0
    %989 = vmatpush1.msra.mxu0 0.0
    %990 = vmatprep.subr.mxu0 0.0
    %991 = vmatpush1.msra.mxu0 0.0
    %992 = vmatprep.subr.mxu0 0.0
    %993 = vmatpush1.msra.mxu0 0.0
    %994 = vmatprep.subr.mxu0 0.0
    %995 = vmatpush1.msra.mxu0 0.0
    %996 = vmatprep.subr.mxu0 0.0
    %997 = vmatpush1.msra.mxu0 0.0
    %998 = vmatprep.subr.mxu0 0.0
    %999 = vmatpush1.msra.mxu0 0.0
    %1000 = vmatprep.mubr.f32.mxu0 0.0
    %1001 = vmatmul.mubr.f32.gmra.mrb[0].mxu0 %v934
    %v1002 = vpop.f32.mrb[0].mxu0
    %v1003 = vadd.f32 0.0, %v1002
    %v1004 = vpop.f32.mrb[0].mxu0
    %1005 = vdwg.mxu0
    %1006 = vrot.lane.b32.xlu0 %v479, 120
    %v1007 = vpop.permute.xlu0 %1006
    %1008 = vrot.lane.b32.xlu0 %v573, 120
    %v1009 = vpop.permute.xlu0 %1008
    %v1010 = vsel %vm681, %v1007, 0
    %v1012 = vsel %vm681, %v1009, 0
    %1014 = vmatprep.subr.mxu0 0.0
    %1015 = vmatpush1.xpose.msra.mxu0 %v1012
    %1016 = vmatprep.subr.mxu0 0.0
    %1017 = vmatpush1.xpose.msra.mxu0 0.0
    %1018 = vmatprep.subr.mxu0 0.0
    %1019 = vmatpush1.xpose.msra.mxu0 0.0
    %1020 = vmatprep.subr.mxu0 0.0
    %1021 = vmatpush1.xpose.msra.mxu0 0.0
    %1022 = vmatprep.subr.mxu0 0.0
    %1023 = vmatpush1.xpose.msra.mxu0 0.0
    %1024 = vmatprep.subr.mxu0 0.0
    %1025 = vmatpush1.xpose.msra.mxu0 0.0
    %1026 = vmatprep.subr.mxu0 0.0
    %1027 = vmatpush1.xpose.msra.mxu0 0.0
    %1028 = vmatprep.subr.mxu0 0.0
    %1029 = vmatpush1.xpose.msra.mxu0 0.0
    %1030 = vmatprep.subr.mxu0 0.0
    %1031 = vmatpush1.xpose.msra.mxu0 0.0
    %1032 = vmatprep.subr.mxu0 0.0
    %1033 = vmatpush1.xpose.msra.mxu0 0.0
    %1034 = vmatprep.subr.mxu0 0.0
    %1035 = vmatpush1.xpose.msra.mxu0 0.0
    %1036 = vmatprep.subr.mxu0 0.0
    %1037 = vmatpush1.xpose.msra.mxu0 0.0
    %1038 = vmatprep.subr.mxu0 0.0
    %1039 = vmatpush1.xpose.msra.mxu0 0.0
    %1040 = vmatprep.subr.mxu0 0.0
    %1041 = vmatpush1.xpose.msra.mxu0 0.0
    %1042 = vmatprep.subr.mxu0 0.0
    %1043 = vmatpush1.xpose.msra.mxu0 0.0
    %1044 = vmatprep.subr.mxu0 0.0
    %1045 = vmatpush1.xpose.msra.mxu0 0.0
    %1046 = vmatprep.subr.mxu0 0.0
    %1047 = vmatpush1.xpose.msra.mxu0 0.0
    %1048 = vmatprep.subr.mxu0 0.0
    %1049 = vmatpush1.xpose.msra.mxu0 0.0
    %1050 = vmatprep.subr.mxu0 0.0
    %1051 = vmatpush1.xpose.msra.mxu0 0.0
    %1052 = vmatprep.subr.mxu0 0.0
    %1053 = vmatpush1.xpose.msra.mxu0 0.0
    %1054 = vmatprep.subr.mxu0 0.0
    %1055 = vmatpush1.xpose.msra.mxu0 0.0
    %1056 = vmatprep.subr.mxu0 0.0
    %1057 = vmatpush1.xpose.msra.mxu0 0.0
    %1058 = vmatprep.subr.mxu0 0.0
    %1059 = vmatpush1.xpose.msra.mxu0 0.0
    %1060 = vmatprep.subr.mxu0 0.0
    %1061 = vmatpush1.xpose.msra.mxu0 0.0
    %1062 = vmatprep.subr.mxu0 0.0
    %1063 = vmatpush1.xpose.msra.mxu0 0.0
    %1064 = vmatprep.subr.mxu0 0.0
    %1065 = vmatpush1.xpose.msra.mxu0 0.0
    %1066 = vmatprep.subr.mxu0 0.0
    %1067 = vmatpush1.xpose.msra.mxu0 0.0
    %1068 = vmatprep.subr.mxu0 0.0
    %1069 = vmatpush1.xpose.msra.mxu0 0.0
    %1070 = vmatprep.subr.mxu0 0.0
    %1071 = vmatpush1.xpose.msra.mxu0 0.0
    %1072 = vmatprep.subr.mxu0 0.0
    %1073 = vmatpush1.xpose.msra.mxu0 0.0
    %1074 = vmatprep.subr.mxu0 0.0
    %1075 = vmatpush1.xpose.msra.mxu0 0.0
    %1076 = vmatprep.subr.mxu0 0.0
    %1077 = vmatpush1.xpose.msra.mxu0 0.0
    %1078 = vmatprep.mubr.f32.mxu0 0.0
    %1079 = vmatmul.mubr.f32.gmra.mrb[0].mxu0 %v1010
    %v1080 = vpop.f32.mrb[0].mxu0
    %v1081 = vadd.f32 0.0, %v1080
    %v1082 = vpop.f32.mrb[0].mxu0
    %1083 = vdwg.mxu0
    %1084 = vrot.lane.b32.xlu0 %v484, 120
    %v1085 = vpop.permute.xlu0 %1084
    %1086 = vrot.lane.b32.xlu0 %v578, 120
    %v1087 = vpop.permute.xlu0 %1086
    %v1088 = vsel %vm681, %v1085, 0
    %v1090 = vsel %vm681, %v1087, 0
    %1092 = vmatprep.subr.mxu0 0.0
    %1093 = vmatpush1.xpose.msra.mxu0 %v1090
    %1094 = vmatprep.subr.mxu0 0.0
    %1095 = vmatpush1.xpose.msra.mxu0 0.0
    %1096 = vmatprep.subr.mxu0 0.0
    %1097 = vmatpush1.xpose.msra.mxu0 0.0
    %1098 = vmatprep.subr.mxu0 0.0
    %1099 = vmatpush1.xpose.msra.mxu0 0.0
    %1100 = vmatprep.subr.mxu0 0.0
    %1101 = vmatpush1.xpose.msra.mxu0 0.0
    %1102 = vmatprep.subr.mxu0 0.0
    %1103 = vmatpush1.xpose.msra.mxu0 0.0
    %1104 = vmatprep.subr.mxu0 0.0
    %1105 = vmatpush1.xpose.msra.mxu0 0.0
    %1106 = vmatprep.subr.mxu0 0.0
    %1107 = vmatpush1.xpose.msra.mxu0 0.0
    %1108 = vmatprep.subr.mxu0 0.0
    %1109 = vmatpush1.xpose.msra.mxu0 0.0
    %1110 = vmatprep.subr.mxu0 0.0
    %1111 = vmatpush1.xpose.msra.mxu0 0.0
    %1112 = vmatprep.subr.mxu0 0.0
    %1113 = vmatpush1.xpose.msra.mxu0 0.0
    %1114 = vmatprep.subr.mxu0 0.0
    %1115 = vmatpush1.xpose.msra.mxu0 0.0
    %1116 = vmatprep.subr.mxu0 0.0
    %1117 = vmatpush1.xpose.msra.mxu0 0.0
    %1118 = vmatprep.subr.mxu0 0.0
    %1119 = vmatpush1.xpose.msra.mxu0 0.0
    %1120 = vmatprep.subr.mxu0 0.0
    %1121 = vmatpush1.xpose.msra.mxu0 0.0
    %1122 = vmatprep.subr.mxu0 0.0
    %1123 = vmatpush1.xpose.msra.mxu0 0.0
    %1124 = vmatprep.subr.mxu0 0.0
    %1125 = vmatpush1.xpose.msra.mxu0 0.0
    %1126 = vmatprep.subr.mxu0 0.0
    %1127 = vmatpush1.xpose.msra.mxu0 0.0
    %1128 = vmatprep.subr.mxu0 0.0
    %1129 = vmatpush1.xpose.msra.mxu0 0.0
    %1130 = vmatprep.subr.mxu0 0.0
    %1131 = vmatpush1.xpose.msra.mxu0 0.0
    %1132 = vmatprep.subr.mxu0 0.0
    %1133 = vmatpush1.xpose.msra.mxu0 0.0
    %1134 = vmatprep.subr.mxu0 0.0
    %1135 = vmatpush1.xpose.msra.mxu0 0.0
    %1136 = vmatprep.subr.mxu0 0.0
    %1137 = vmatpush1.xpose.msra.mxu0 0.0
    %1138 = vmatprep.subr.mxu0 0.0
    %1139 = vmatpush1.xpose.msra.mxu0 0.0
    %1140 = vmatprep.subr.mxu0 0.0
    %1141 = vmatpush1.xpose.msra.mxu0 0.0
    %1142 = vmatprep.subr.mxu0 0.0
    %1143 = vmatpush1.xpose.msra.mxu0 0.0
    %1144 = vmatprep.subr.mxu0 0.0
    %1145 = vmatpush1.xpose.msra.mxu0 0.0
    %1146 = vmatprep.subr.mxu0 0.0
    %1147 = vmatpush1.xpose.msra.mxu0 0.0
    %1148 = vmatprep.subr.mxu0 0.0
    %1149 = vmatpush1.xpose.msra.mxu0 0.0
    %1150 = vmatprep.subr.mxu0 0.0
    %1151 = vmatpush1.xpose.msra.mxu0 0.0
    %1152 = vmatprep.subr.mxu0 0.0
    %1153 = vmatpush1.xpose.msra.mxu0 0.0
    %1154 = vmatprep.subr.mxu0 0.0
    %1155 = vmatpush1.xpose.msra.mxu0 0.0
    %1156 = vmatprep.mubr.f32.mxu0 0.0
    %1157 = vmatmul.mubr.f32.gmra.mrb[0].mxu0 %v1088
    %v1158 = vpop.f32.mrb[0].mxu0
    %v1159 = vadd.f32 0.0, %v1158
    %v1160 = vpop.f32.mrb[0].mxu0
    %1161 = vdwg.mxu0
    %v1162 = vsel %vm835, -1e+30, %v1081
    %v1163 = vsel %vm835, -1e+30, %v1159
    %v1164 = vsel %vm681, %v1162, -inf
    %1165 = vmax.xlane.f32.xlu0 %v1164
    %v1166 = vpop.xlane.xlu0 %1165
    %v1167 = vsel %vm681, %v1163, -inf
    %1168 = vmax.xlane.f32.xlu0 %v1167
    %v1169 = vpop.xlane.xlu0 %1168
    %v1170 = vsub.f32 %v1162, %v1166
    %v1171 = vsub.f32 %v1163, %v1169
    %v1172 = vmul.f32 %v1170, 1.442695
    %v1173 = vpow.pop %v1172
    %v1174 = vmul.f32 %v1171, 1.442695
    %v1175 = vpow.pop %v1174
    %v1176 = vsel %vm681, %v1173, 0.0
    %1177 = vadd.xlane.f32.xlu0 %v1176
    %v1178 = vpop.xlane.xlu0 %1177
    %v1179 = vsel %vm681, %v1175, 0.0
    %1180 = vadd.xlane.f32.xlu0 %v1179
    %v1181 = vpop.xlane.xlu0 %1180
    %v1182 = vrcp.pop %v1178
    %v1183 = vrcp.pop %v1181
    %v1184 = vmul.f32 %v1173, %v1182
    %v1185 = vmul.f32 %v1175, %v1183
    %1187 = vrot.lane.b32.xlu0 %v663, 120
    %v1188 = vpop.permute.xlu0 %1187
    %v1191 = vsel %vm681, %v1184, 0
    %1193 = vmatprep.subr.mxu0 0.0
    %1194 = vmatpush1.msra.mxu0 %v1188
    %1195 = vmatprep.subr.mxu0 0.0
    %1196 = vmatpush1.msra.mxu0 0.0
    %1197 = vmatprep.subr.mxu0 0.0
    %1198 = vmatpush1.msra.mxu0 0.0
    %1199 = vmatprep.subr.mxu0 0.0
    %1200 = vmatpush1.msra.mxu0 0.0
    %1201 = vmatprep.subr.mxu0 0.0
    %1202 = vmatpush1.msra.mxu0 0.0
    %1203 = vmatprep.subr.mxu0 0.0
    %1204 = vmatpush1.msra.mxu0 0.0
    %1205 = vmatprep.subr.mxu0 0.0
    %1206 = vmatpush1.msra.mxu0 0.0
    %1207 = vmatprep.subr.mxu0 0.0
    %1208 = vmatpush1.msra.mxu0 0.0
    %1209 = vmatprep.subr.mxu0 0.0
    %1210 = vmatpush1.msra.mxu0 0.0
    %1211 = vmatprep.subr.mxu0 0.0
    %1212 = vmatpush1.msra.mxu0 0.0
    %1213 = vmatprep.subr.mxu0 0.0
    %1214 = vmatpush1.msra.mxu0 0.0
    %1215 = vmatprep.subr.mxu0 0.0
    %1216 = vmatpush1.msra.mxu0 0.0
    %1217 = vmatprep.subr.mxu0 0.0
    %1218 = vmatpush1.msra.mxu0 0.0
    %1219 = vmatprep.subr.mxu0 0.0
    %1220 = vmatpush1.msra.mxu0 0.0
    %1221 = vmatprep.subr.mxu0 0.0
    %1222 = vmatpush1.msra.mxu0 0.0
    %1223 = vmatprep.subr.mxu0 0.0
    %1224 = vmatpush1.msra.mxu0 0.0
    %1225 = vmatprep.subr.mxu0 0.0
    %1226 = vmatpush1.msra.mxu0 0.0
    %1227 = vmatprep.subr.mxu0 0.0
    %1228 = vmatpush1.msra.mxu0 0.0
    %1229 = vmatprep.subr.mxu0 0.0
    %1230 = vmatpush1.msra.mxu0 0.0
    %1231 = vmatprep.subr.mxu0 0.0
    %1232 = vmatpush1.msra.mxu0 0.0
    %1233 = vmatprep.subr.mxu0 0.0
    %1234 = vmatpush1.msra.mxu0 0.0
    %1235 = vmatprep.subr.mxu0 0.0
    %1236 = vmatpush1.msra.mxu0 0.0
    %1237 = vmatprep.subr.mxu0 0.0
    %1238 = vmatpush1.msra.mxu0 0.0
    %1239 = vmatprep.subr.mxu0 0.0
    %1240 = vmatpush1.msra.mxu0 0.0
    %1241 = vmatprep.subr.mxu0 0.0
    %1242 = vmatpush1.msra.mxu0 0.0
    %1243 = vmatprep.subr.mxu0 0.0
    %1244 = vmatpush1.msra.mxu0 0.0
    %1245 = vmatprep.subr.mxu0 0.0
    %1246 = vmatpush1.msra.mxu0 0.0
    %1247 = vmatprep.subr.mxu0 0.0
    %1248 = vmatpush1.msra.mxu0 0.0
    %1249 = vmatprep.subr.mxu0 0.0
    %1250 = vmatpush1.msra.mxu0 0.0
    %1251 = vmatprep.subr.mxu0 0.0
    %1252 = vmatpush1.msra.mxu0 0.0
    %1253 = vmatprep.subr.mxu0 0.0
    %1254 = vmatpush1.msra.mxu0 0.0
    %1255 = vmatprep.subr.mxu0 0.0
    %1256 = vmatpush1.msra.mxu0 0.0
    %1257 = vmatprep.mubr.f32.mxu0 0.0
    %1258 = vmatmul.mubr.f32.gmra.mrb[0].mxu0 %v1191
    %v1259 = vpop.f32.mrb[0].mxu0
    %v1260 = vadd.f32 0.0, %v1259
    %v1261 = vpop.f32.mrb[0].mxu0
    %1262 = vdwg.mxu0
    %1264 = vrot.lane.b32.xlu0 %v668, 120
    %v1265 = vpop.permute.xlu0 %1264
    %v1268 = vsel %vm681, %v1185, 0
    %1270 = vmatprep.subr.mxu0 0.0
    %1271 = vmatpush1.msra.mxu0 %v1265
    %1272 = vmatprep.subr.mxu0 0.0
    %1273 = vmatpush1.msra.mxu0 0.0
    %1274 = vmatprep.subr.mxu0 0.0
    %1275 = vmatpush1.msra.mxu0 0.0
    %1276 = vmatprep.subr.mxu0 0.0
    %1277 = vmatpush1.msra.mxu0 0.0
    %1278 = vmatprep.subr.mxu0 0.0
    %1279 = vmatpush1.msra.mxu0 0.0
    %1280 = vmatprep.subr.mxu0 0.0
    %1281 = vmatpush1.msra.mxu0 0.0
    %1282 = vmatprep.subr.mxu0 0.0
    %1283 = vmatpush1.msra.mxu0 0.0
    %1284 = vmatprep.subr.mxu0 0.0
    %1285 = vmatpush1.msra.mxu0 0.0
    %1286 = vmatprep.subr.mxu0 0.0
    %1287 = vmatpush1.msra.mxu0 0.0
    %1288 = vmatprep.subr.mxu0 0.0
    %1289 = vmatpush1.msra.mxu0 0.0
    %1290 = vmatprep.subr.mxu0 0.0
    %1291 = vmatpush1.msra.mxu0 0.0
    %1292 = vmatprep.subr.mxu0 0.0
    %1293 = vmatpush1.msra.mxu0 0.0
    %1294 = vmatprep.subr.mxu0 0.0
    %1295 = vmatpush1.msra.mxu0 0.0
    %1296 = vmatprep.subr.mxu0 0.0
    %1297 = vmatpush1.msra.mxu0 0.0
    %1298 = vmatprep.subr.mxu0 0.0
    %1299 = vmatpush1.msra.mxu0 0.0
    %1300 = vmatprep.subr.mxu0 0.0
    %1301 = vmatpush1.msra.mxu0 0.0
    %1302 = vmatprep.subr.mxu0 0.0
    %1303 = vmatpush1.msra.mxu0 0.0
    %1304 = vmatprep.subr.mxu0 0.0
    %1305 = vmatpush1.msra.mxu0 0.0
    %1306 = vmatprep.subr.mxu0 0.0
    %1307 = vmatpush1.msra.mxu0 0.0
    %1308 = vmatprep.subr.mxu0 0.0
    %1309 = vmatpush1.msra.mxu0 0.0
    %1310 = vmatprep.subr.mxu0 0.0
    %1311 = vmatpush1.msra.mxu0 0.0
    %1312 = vmatprep.subr.mxu0 0.0
    %1313 = vmatpush1.msra.mxu0 0.0
    %1314 = vmatprep.subr.mxu0 0.0
    %1315 = vmatpush1.msra.mxu0 0.0
    %1316 = vmatprep.subr.mxu0 0.0
    %1317 = vmatpush1.msra.mxu0 0.0
    %1318 = vmatprep.subr.mxu0 0.0
    %1319 = vmatpush1.msra.mxu0 0.0
    %1320 = vmatprep.subr.mxu0 0.0
    %1321 = vmatpush1.msra.mxu0 0.0
    %1322 = vmatprep.subr.mxu0 0.0
    %1323 = vmatpush1.msra.mxu0 0.0
    %1324 = vmatprep.subr.mxu0 0.0
    %1325 = vmatpush1.msra.mxu0 0.0
    %1326 = vmatprep.subr.mxu0 0.0
    %1327 = vmatpush1.msra.mxu0 0.0
    %1328 = vmatprep.subr.mxu0 0.0
    %1329 = vmatpush1.msra.mxu0 0.0
    %1330 = vmatprep.subr.mxu0 0.0
    %1331 = vmatpush1.msra.mxu0 0.0
    %1332 = vmatprep.subr.mxu0 0.0
    %1333 = vmatpush1.msra.mxu0 0.0
    %1334 = vmatprep.mubr.f32.mxu0 0.0
    %1335 = vmatmul.mubr.f32.gmra.mrb[0].mxu0 %v1268
    %v1336 = vpop.f32.mrb[0].mxu0
    %v1337 = vadd.f32 0.0, %v1336
    %v1338 = vpop.f32.mrb[0].mxu0
    %1339 = vdwg.mxu0
    %v1341 = vsel %vm681, %v1260, 0
    %v1344 = vsel %vm681, %v1337, 0
    %1346 = vmatprep.subr.mxu0 0.0
    %1347 = vmatpush1.msra.mxu0 %v673
    %1348 = vmatprep.subr.mxu0 0.0
    %1349 = vmatpush1.msra.mxu0 0.0
    %1350 = vmatprep.subr.mxu0 0.0
    %1351 = vmatpush1.msra.mxu0 0.0
    %1352 = vmatprep.subr.mxu0 0.0
    %1353 = vmatpush1.msra.mxu0 0.0
    %1354 = vmatprep.subr.mxu0 0.0
    %1355 = vmatpush1.msra.mxu0 0.0
    %1356 = vmatprep.subr.mxu0 0.0
    %1357 = vmatpush1.msra.mxu0 0.0
    %1358 = vmatprep.subr.mxu0 0.0
    %1359 = vmatpush1.msra.mxu0 0.0
    %1360 = vmatprep.subr.mxu0 0.0
    %1361 = vmatpush1.msra.mxu0 0.0
    %1362 = vmatprep.subr.mxu0 0.0
    %1363 = vmatpush1.msra.mxu0 0.0
    %1364 = vmatprep.subr.mxu0 0.0
    %1365 = vmatpush1.msra.mxu0 0.0
    %1366 = vmatprep.subr.mxu0 0.0
    %1367 = vmatpush1.msra.mxu0 0.0
    %1368 = vmatprep.subr.mxu0 0.0
    %1369 = vmatpush1.msra.mxu0 0.0
    %1370 = vmatprep.subr.mxu0 0.0
    %1371 = vmatpush1.msra.mxu0 0.0
    %1372 = vmatprep.subr.mxu0 0.0
    %1373 = vmatpush1.msra.mxu0 0.0
    %1374 = vmatprep.subr.mxu0 0.0
    %1375 = vmatpush1.msra.mxu0 0.0
    %1376 = vmatprep.subr.mxu0 0.0
    %1377 = vmatpush1.msra.mxu0 0.0
    %1378 = vmatprep.subr.mxu0 0.0
    %1379 = vmatpush1.msra.mxu0 0.0
    %1380 = vmatprep.subr.mxu0 0.0
    %1381 = vmatpush1.msra.mxu0 0.0
    %1382 = vmatprep.subr.mxu0 0.0
    %1383 = vmatpush1.msra.mxu0 0.0
    %1384 = vmatprep.subr.mxu0 0.0
    %1385 = vmatpush1.msra.mxu0 0.0
    %1386 = vmatprep.subr.mxu0 0.0
    %1387 = vmatpush1.msra.mxu0 0.0
    %1388 = vmatprep.subr.mxu0 0.0
    %1389 = vmatpush1.msra.mxu0 0.0
    %1390 = vmatprep.subr.mxu0 0.0
    %1391 = vmatpush1.msra.mxu0 0.0
    %1392 = vmatprep.subr.mxu0 0.0
    %1393 = vmatpush1.msra.mxu0 0.0
    %1394 = vmatprep.subr.mxu0 0.0
    %1395 = vmatpush1.msra.mxu0 0.0
    %1396 = vmatprep.subr.mxu0 0.0
    %1397 = vmatpush1.msra.mxu0 0.0
    %1398 = vmatprep.subr.mxu0 0.0
    %1399 = vmatpush1.msra.mxu0 0.0
    %1400 = vmatprep.subr.mxu0 0.0
    %1401 = vmatpush1.msra.mxu0 0.0
    %1402 = vmatprep.subr.mxu0 0.0
    %1403 = vmatpush1.msra.mxu0 0.0
    %1404 = vmatprep.subr.mxu0 0.0
    %1405 = vmatpush1.msra.mxu0 0.0
    %1406 = vmatprep.subr.mxu0 0.0
    %1407 = vmatpush1.msra.mxu0 0.0
    %1408 = vmatprep.subr.mxu0 0.0
    %1409 = vmatpush1.msra.mxu0 0.0
    %1410 = vmatprep.mubr.f32.mxu0 0.0
    %1411 = vmatmul.mubr.f32.gmra.mrb[0].mxu0 %v1341
    %v1412 = vpop.f32.mrb[0].mxu0
    %v1413 = vadd.f32 0.0, %v1412
    %v1414 = vpop.f32.mrb[0].mxu0
    %1415 = vmatprep.mubr.f32.mxu0 0.0
    %1416 = vmatmul.mubr.f32.gmra.mrb[0].mxu0 %v1344
    %v1417 = vpop.f32.mrb[0].mxu0
    %v1418 = vadd.f32 0.0, %v1417
    %v1419 = vpop.f32.mrb[0].mxu0
    %1420 = vdwg.mxu0
    %v1422 = vsel %vm681, %v930, 0
    %v1425 = vsel %vm681, %v1003, 0
    %1427 = vmatprep.subr.mxu0 0.0
    %1428 = vmatpush1.msra.mxu0 %v672
    %1429 = vmatprep.subr.mxu0 0.0
    %1430 = vmatpush1.msra.mxu0 0.0
    %1431 = vmatprep.subr.mxu0 0.0
    %1432 = vmatpush1.msra.mxu0 0.0
    %1433 = vmatprep.subr.mxu0 0.0
    %1434 = vmatpush1.msra.mxu0 0.0
    %1435 = vmatprep.subr.mxu0 0.0
    %1436 = vmatpush1.msra.mxu0 0.0
    %1437 = vmatprep.subr.mxu0 0.0
    %1438 = vmatpush1.msra.mxu0 0.0
    %1439 = vmatprep.subr.mxu0 0.0
    %1440 = vmatpush1.msra.mxu0 0.0
    %1441 = vmatprep.subr.mxu0 0.0
    %1442 = vmatpush1.msra.mxu0 0.0
    %1443 = vmatprep.subr.mxu0 0.0
    %1444 = vmatpush1.msra.mxu0 0.0
    %1445 = vmatprep.subr.mxu0 0.0
    %1446 = vmatpush1.msra.mxu0 0.0
    %1447 = vmatprep.subr.mxu0 0.0
    %1448 = vmatpush1.msra.mxu0 0.0
    %1449 = vmatprep.subr.mxu0 0.0
    %1450 = vmatpush1.msra.mxu0 0.0
    %1451 = vmatprep.subr.mxu0 0.0
    %1452 = vmatpush1.msra.mxu0 0.0
    %1453 = vmatprep.subr.mxu0 0.0
    %1454 = vmatpush1.msra.mxu0 0.0
    %1455 = vmatprep.subr.mxu0 0.0
    %1456 = vmatpush1.msra.mxu0 0.0
    %1457 = vmatprep.subr.mxu0 0.0
    %1458 = vmatpush1.msra.mxu0 0.0
    %1459 = vmatprep.subr.mxu0 0.0
    %1460 = vmatpush1.msra.mxu0 0.0
    %1461 = vmatprep.subr.mxu0 0.0
    %1462 = vmatpush1.msra.mxu0 0.0
    %1463 = vmatprep.subr.mxu0 0.0
    %1464 = vmatpush1.msra.mxu0 0.0
    %1465 = vmatprep.subr.mxu0 0.0
    %1466 = vmatpush1.msra.mxu0 0.0
    %1467 = vmatprep.subr.mxu0 0.0
    %1468 = vmatpush1.msra.mxu0 0.0
    %1469 = vmatprep.subr.mxu0 0.0
    %1470 = vmatpush1.msra.mxu0 0.0
    %1471 = vmatprep.subr.mxu0 0.0
    %1472 = vmatpush1.msra.mxu0 0.0
    %1473 = vmatprep.subr.mxu0 0.0
    %1474 = vmatpush1.msra.mxu0 0.0
    %1475 = vmatprep.subr.mxu0 0.0
    %1476 = vmatpush1.msra.mxu0 0.0
    %1477 = vmatprep.subr.mxu0 0.0
    %1478 = vmatpush1.msra.mxu0 0.0
    %1479 = vmatprep.subr.mxu0 0.0
    %1480 = vmatpush1.msra.mxu0 0.0
    %1481 = vmatprep.subr.mxu0 0.0
    %1482 = vmatpush1.msra.mxu0 0.0
    %1483 = vmatprep.subr.mxu0 0.0
    %1484 = vmatpush1.msra.mxu0 0.0
    %1485 = vmatprep.subr.mxu0 0.0
    %1486 = vmatpush1.msra.mxu0 0.0
    %1487 = vmatprep.subr.mxu0 0.0
    %1488 = vmatpush1.msra.mxu0 0.0
    %1489 = vmatprep.subr.mxu0 0.0
    %1490 = vmatpush1.msra.mxu0 0.0
    %1491 = vmatprep.mubr.f32.mxu0 0.0
    %1492 = vmatmul.mubr.f32.gmra.mrb[0].mxu0 %v1422
    %v1493 = vpop.f32.mrb[0].mxu0
    %v1494 = vadd.f32 %v1413, %v1493
    %v1495 = vpop.f32.mrb[0].mxu0
    %1496 = vmatprep.mubr.f32.mxu0 0.0
    %1497 = vmatmul.mubr.f32.gmra.mrb[0].mxu0 %v1425
    %v1498 = vpop.f32.mrb[0].mxu0
    %v1499 = vadd.f32 %v1418, %v1498
    %v1500 = vpop.f32.mrb[0].mxu0
    %1501 = vdwg.mxu0
    %1502 = vrot.lane.b32.xlu0 %v479, 112
    %v1503 = vpop.permute.xlu0 %1502
    %1504 = vrot.lane.b32.xlu0 %v573, 112
    %v1505 = vpop.permute.xlu0 %1504
    %v1506 = vsel %vm681, %v1503, 0
    %v1508 = vsel %vm681, %v1505, 0
    %1510 = vmatprep.subr.mxu0 0.0
    %1511 = vmatpush1.xpose.msra.mxu0 %v1508
    %1512 = vmatprep.subr.mxu0 0.0
    %1513 = vmatpush1.xpose.msra.mxu0 0.0
    %1514 = vmatprep.subr.mxu0 0.0
    %1515 = vmatpush1.xpose.msra.mxu0 0.0
    %1516 = vmatprep.subr.mxu0 0.0
    %1517 = vmatpush1.xpose.msra.mxu0 0.0
    %1518 = vmatprep.subr.mxu0 0.0
    %1519 = vmatpush1.xpose.msra.mxu0 0.0
    %1520 = vmatprep.subr.mxu0 0.0
    %1521 = vmatpush1.xpose.msra.mxu0 0.0
    %1522 = vmatprep.subr.mxu0 0.0
    %1523 = vmatpush1.xpose.msra.mxu0 0.0
    %1524 = vmatprep.subr.mxu0 0.0
    %1525 = vmatpush1.xpose.msra.mxu0 0.0
    %1526 = vmatprep.subr.mxu0 0.0
    %1527 = vmatpush1.xpose.msra.mxu0 0.0
    %1528 = vmatprep.subr.mxu0 0.0
    %1529 = vmatpush1.xpose.msra.mxu0 0.0
    %1530 = vmatprep.subr.mxu0 0.0
    %1531 = vmatpush1.xpose.msra.mxu0 0.0
    %1532 = vmatprep.subr.mxu0 0.0
    %1533 = vmatpush1.xpose.msra.mxu0 0.0
    %1534 = vmatprep.subr.mxu0 0.0
    %1535 = vmatpush1.xpose.msra.mxu0 0.0
    %1536 = vmatprep.subr.mxu0 0.0
    %1537 = vmatpush1.xpose.msra.mxu0 0.0
    %1538 = vmatprep.subr.mxu0 0.0
    %1539 = vmatpush1.xpose.msra.mxu0 0.0
    %1540 = vmatprep.subr.mxu0 0.0
    %1541 = vmatpush1.xpose.msra.mxu0 0.0
    %1542 = vmatprep.subr.mxu0 0.0
    %1543 = vmatpush1.xpose.msra.mxu0 0.0
    %1544 = vmatprep.subr.mxu0 0.0
    %1545 = vmatpush1.xpose.msra.mxu0 0.0
    %1546 = vmatprep.subr.mxu0 0.0
    %1547 = vmatpush1.xpose.msra.mxu0 0.0
    %1548 = vmatprep.subr.mxu0 0.0
    %1549 = vmatpush1.xpose.msra.mxu0 0.0
    %1550 = vmatprep.subr.mxu0 0.0
    %1551 = vmatpush1.xpose.msra.mxu0 0.0
    %1552 = vmatprep.subr.mxu0 0.0
    %1553 = vmatpush1.xpose.msra.mxu0 0.0
    %1554 = vmatprep.subr.mxu0 0.0
    %1555 = vmatpush1.xpose.msra.mxu0 0.0
    %1556 = vmatprep.subr.mxu0 0.0
    %1557 = vmatpush1.xpose.msra.mxu0 0.0
    %1558 = vmatprep.subr.mxu0 0.0
    %1559 = vmatpush1.xpose.msra.mxu0 0.0
    %1560 = vmatprep.subr.mxu0 0.0
    %1561 = vmatpush1.xpose.msra.mxu0 0.0
    %1562 = vmatprep.subr.mxu0 0.0
    %1563 = vmatpush1.xpose.msra.mxu0 0.0
    %1564 = vmatprep.subr.mxu0 0.0
    %1565 = vmatpush1.xpose.msra.mxu0 0.0
    %1566 = vmatprep.subr.mxu0 0.0
    %1567 = vmatpush1.xpose.msra.mxu0 0.0
    %1568 = vmatprep.subr.mxu0 0.0
    %1569 = vmatpush1.xpose.msra.mxu0 0.0
    %1570 = vmatprep.subr.mxu0 0.0
    %1571 = vmatpush1.xpose.msra.mxu0 0.0
    %1572 = vmatprep.subr.mxu0 0.0
    %1573 = vmatpush1.xpose.msra.mxu0 0.0
    %1574 = vmatprep.mubr.f32.mxu0 0.0
    %1575 = vmatmul.mubr.f32.gmra.mrb[0].mxu0 %v1506
    %v1576 = vpop.f32.mrb[0].mxu0
    %v1577 = vadd.f32 0.0, %v1576
    %v1578 = vpop.f32.mrb[0].mxu0
    %1579 = vdwg.mxu0
    %1580 = vrot.lane.b32.xlu0 %v484, 112
    %v1581 = vpop.permute.xlu0 %1580
    %1582 = vrot.lane.b32.xlu0 %v578, 112
    %v1583 = vpop.permute.xlu0 %1582
    %v1584 = vsel %vm681, %v1581, 0
    %v1586 = vsel %vm681, %v1583, 0
    %1588 = vmatprep.subr.mxu0 0.0
    %1589 = vmatpush1.xpose.msra.mxu0 %v1586
    %1590 = vmatprep.subr.mxu0 0.0
    %1591 = vmatpush1.xpose.msra.mxu0 0.0
    %1592 = vmatprep.subr.mxu0 0.0
    %1593 = vmatpush1.xpose.msra.mxu0 0.0
    %1594 = vmatprep.subr.mxu0 0.0
    %1595 = vmatpush1.xpose.msra.mxu0 0.0
    %1596 = vmatprep.subr.mxu0 0.0
    %1597 = vmatpush1.xpose.msra.mxu0 0.0
    %1598 = vmatprep.subr.mxu0 0.0
    %1599 = vmatpush1.xpose.msra.mxu0 0.0
    %1600 = vmatprep.subr.mxu0 0.0
    %1601 = vmatpush1.xpose.msra.mxu0 0.0
    %1602 = vmatprep.subr.mxu0 0.0
    %1603 = vmatpush1.xpose.msra.mxu0 0.0
    %1604 = vmatprep.subr.mxu0 0.0
    %1605 = vmatpush1.xpose.msra.mxu0 0.0
    %1606 = vmatprep.subr.mxu0 0.0
    %1607 = vmatpush1.xpose.msra.mxu0 0.0
    %1608 = vmatprep.subr.mxu0 0.0
    %1609 = vmatpush1.xpose.msra.mxu0 0.0
    %1610 = vmatprep.subr.mxu0 0.0
    %1611 = vmatpush1.xpose.msra.mxu0 0.0
    %1612 = vmatprep.subr.mxu0 0.0
    %1613 = vmatpush1.xpose.msra.mxu0 0.0
    %1614 = vmatprep.subr.mxu0 0.0
    %1615 = vmatpush1.xpose.msra.mxu0 0.0
    %1616 = vmatprep.subr.mxu0 0.0
    %1617 = vmatpush1.xpose.msra.mxu0 0.0
    %1618 = vmatprep.subr.mxu0 0.0
    %1619 = vmatpush1.xpose.msra.mxu0 0.0
    %1620 = vmatprep.subr.mxu0 0.0
    %1621 = vmatpush1.xpose.msra.mxu0 0.0
    %1622 = vmatprep.subr.mxu0 0.0
    %1623 = vmatpush1.xpose.msra.mxu0 0.0
    %1624 = vmatprep.subr.mxu0 0.0
    %1625 = vmatpush1.xpose.msra.mxu0 0.0
    %1626 = vmatprep.subr.mxu0 0.0
    %1627 = vmatpush1.xpose.msra.mxu0 0.0
    %1628 = vmatprep.subr.mxu0 0.0
    %1629 = vmatpush1.xpose.msra.mxu0 0.0
    %1630 = vmatprep.subr.mxu0 0.0
    %1631 = vmatpush1.xpose.msra.mxu0 0.0
    %1632 = vmatprep.subr.mxu0 0.0
    %1633 = vmatpush1.xpose.msra.mxu0 0.0
    %1634 = vmatprep.subr.mxu0 0.0
    %1635 = vmatpush1.xpose.msra.mxu0 0.0
    %1636 = vmatprep.subr.mxu0 0.0
    %1637 = vmatpush1.xpose.msra.mxu0 0.0
    %1638 = vmatprep.subr.mxu0 0.0
    %1639 = vmatpush1.xpose.msra.mxu0 0.0
    %1640 = vmatprep.subr.mxu0 0.0
    %1641 = vmatpush1.xpose.msra.mxu0 0.0
    %1642 = vmatprep.subr.mxu0 0.0
    %1643 = vmatpush1.xpose.msra.mxu0 0.0
    %1644 = vmatprep.subr.mxu0 0.0
    %1645 = vmatpush1.xpose.msra.mxu0 0.0
    %1646 = vmatprep.subr.mxu0 0.0
    %1647 = vmatpush1.xpose.msra.mxu0 0.0
    %1648 = vmatprep.subr.mxu0 0.0
    %1649 = vmatpush1.xpose.msra.mxu0 0.0
    %1650 = vmatprep.subr.mxu0 0.0
    %1651 = vmatpush1.xpose.msra.mxu0 0.0
    %1652 = vmatprep.mubr.f32.mxu0 0.0
    %1653 = vmatmul.mubr.f32.gmra.mrb[0].mxu0 %v1584
    %v1654 = vpop.f32.mrb[0].mxu0
    %v1655 = vadd.f32 0.0, %v1654
    %v1656 = vpop.f32.mrb[0].mxu0
    %1657 = vdwg.mxu0
    %v1658 = vsel %vm835, -1e+30, %v1577
    %v1659 = vsel %vm835, -1e+30, %v1655
    %v1660 = vsel %vm681, %v1658, -inf
    %1661 = vmax.xlane.f32.xlu0 %v1660
    %v1662 = vpop.xlane.xlu0 %1661
    %v1663 = vsel %vm681, %v1659, -inf
    %1664 = vmax.xlane.f32.xlu0 %v1663
    %v1665 = vpop.xlane.xlu0 %1664
    %v1666 = vsub.f32 %v1658, %v1662
    %v1667 = vsub.f32 %v1659, %v1665
    %v1668 = vmul.f32 %v1666, 1.442695
    %v1669 = vpow.pop %v1668
    %v1670 = vmul.f32 %v1667, 1.442695
    %v1671 = vpow.pop %v1670
    %v1672 = vsel %vm681, %v1669, 0.0
    %1673 = vadd.xlane.f32.xlu0 %v1672
    %v1674 = vpop.xlane.xlu0 %1673
    %v1675 = vsel %vm681, %v1671, 0.0
    %1676 = vadd.xlane.f32.xlu0 %v1675
    %v1677 = vpop.xlane.xlu0 %1676
    %v1678 = vrcp.pop %v1674
    %v1679 = vrcp.pop %v1677
    %v1680 = vmul.f32 %v1669, %v1678
    %v1681 = vmul.f32 %v1671, %v1679
    %1682 = vrot.lane.b32.xlu0 %v663, 112
    %v1683 = vpop.permute.xlu0 %1682
    %v1686 = vsel %vm681, %v1680, 0
    %1688 = vmatprep.subr.mxu0 0.0
    %1689 = vmatpush1.msra.mxu0 %v1683
    %1690 = vmatprep.subr.mxu0 0.0
    %1691 = vmatpush1.msra.mxu0 0.0
    %1692 = vmatprep.subr.mxu0 0.0
    %1693 = vmatpush1.msra.mxu0 0.0
    %1694 = vmatprep.subr.mxu0 0.0
    %1695 = vmatpush1.msra.mxu0 0.0
    %1696 = vmatprep.subr.mxu0 0.0
    %1697 = vmatpush1.msra.mxu0 0.0
    %1698 = vmatprep.subr.mxu0 0.0
    %1699 = vmatpush1.msra.mxu0 0.0
    %1700 = vmatprep.subr.mxu0 0.0
    %1701 = vmatpush1.msra.mxu0 0.0
    %1702 = vmatprep.subr.mxu0 0.0
    %1703 = vmatpush1.msra.mxu0 0.0
    %1704 = vmatprep.subr.mxu0 0.0
    %1705 = vmatpush1.msra.mxu0 0.0
    %1706 = vmatprep.subr.mxu0 0.0
    %1707 = vmatpush1.msra.mxu0 0.0
    %1708 = vmatprep.subr.mxu0 0.0
    %1709 = vmatpush1.msra.mxu0 0.0
    %1710 = vmatprep.subr.mxu0 0.0
    %1711 = vmatpush1.msra.mxu0 0.0
    %1712 = vmatprep.subr.mxu0 0.0
    %1713 = vmatpush1.msra.mxu0 0.0
    %1714 = vmatprep.subr.mxu0 0.0
    %1715 = vmatpush1.msra.mxu0 0.0
    %1716 = vmatprep.subr.mxu0 0.0
    %1717 = vmatpush1.msra.mxu0 0.0
    %1718 = vmatprep.subr.mxu0 0.0
    %1719 = vmatpush1.msra.mxu0 0.0
    %1720 = vmatprep.subr.mxu0 0.0
    %1721 = vmatpush1.msra.mxu0 0.0
    %1722 = vmatprep.subr.mxu0 0.0
    %1723 = vmatpush1.msra.mxu0 0.0
    %1724 = vmatprep.subr.mxu0 0.0
    %1725 = vmatpush1.msra.mxu0 0.0
    %1726 = vmatprep.subr.mxu0 0.0
    %1727 = vmatpush1.msra.mxu0 0.0
    %1728 = vmatprep.subr.mxu0 0.0
    %1729 = vmatpush1.msra.mxu0 0.0
    %1730 = vmatprep.subr.mxu0 0.0
    %1731 = vmatpush1.msra.mxu0 0.0
    %1732 = vmatprep.subr.mxu0 0.0
    %1733 = vmatpush1.msra.mxu0 0.0
    %1734 = vmatprep.subr.mxu0 0.0
    %1735 = vmatpush1.msra.mxu0 0.0
    %1736 = vmatprep.subr.mxu0 0.0
    %1737 = vmatpush1.msra.mxu0 0.0
    %1738 = vmatprep.subr.mxu0 0.0
    %1739 = vmatpush1.msra.mxu0 0.0
    %1740 = vmatprep.subr.mxu0 0.0
    %1741 = vmatpush1.msra.mxu0 0.0
    %1742 = vmatprep.subr.mxu0 0.0
    %1743 = vmatpush1.msra.mxu0 0.0
    %1744 = vmatprep.subr.mxu0 0.0
    %1745 = vmatpush1.msra.mxu0 0.0
    %1746 = vmatprep.subr.mxu0 0.0
    %1747 = vmatpush1.msra.mxu0 0.0
    %1748 = vmatprep.subr.mxu0 0.0
    %1749 = vmatpush1.msra.mxu0 0.0
    %1750 = vmatprep.subr.mxu0 0.0
    %1751 = vmatpush1.msra.mxu0 0.0
    %1752 = vmatprep.mubr.f32.mxu0 0.0
    %1753 = vmatmul.mubr.f32.gmra.mrb[0].mxu0 %v1686
    %v1754 = vpop.f32.mrb[0].mxu0
    %v1755 = vadd.f32 0.0, %v1754
    %v1756 = vpop.f32.mrb[0].mxu0
    %1757 = vdwg.mxu0
    %1758 = vrot.lane.b32.xlu0 %v668, 112
    %v1759 = vpop.permute.xlu0 %1758
    %v1762 = vsel %vm681, %v1681, 0
    %1764 = vmatprep.subr.mxu0 0.0
    %1765 = vmatpush1.msra.mxu0 %v1759
    %1766 = vmatprep.subr.mxu0 0.0
    %1767 = vmatpush1.msra.mxu0 0.0
    %1768 = vmatprep.subr.mxu0 0.0
    %1769 = vmatpush1.msra.mxu0 0.0
    %1770 = vmatprep.subr.mxu0 0.0
    %1771 = vmatpush1.msra.mxu0 0.0
    %1772 = vmatprep.subr.mxu0 0.0
    %1773 = vmatpush1.msra.mxu0 0.0
    %1774 = vmatprep.subr.mxu0 0.0
    %1775 = vmatpush1.msra.mxu0 0.0
    %1776 = vmatprep.subr.mxu0 0.0
    %1777 = vmatpush1.msra.mxu0 0.0
    %1778 = vmatprep.subr.mxu0 0.0
    %1779 = vmatpush1.msra.mxu0 0.0
    %1780 = vmatprep.subr.mxu0 0.0
    %1781 = vmatpush1.msra.mxu0 0.0
    %1782 = vmatprep.subr.mxu0 0.0
    %1783 = vmatpush1.msra.mxu0 0.0
    %1784 = vmatprep.subr.mxu0 0.0
    %1785 = vmatpush1.msra.mxu0 0.0
    %1786 = vmatprep.subr.mxu0 0.0
    %1787 = vmatpush1.msra.mxu0 0.0
    %1788 = vmatprep.subr.mxu0 0.0
    %1789 = vmatpush1.msra.mxu0 0.0
    %1790 = vmatprep.subr.mxu0 0.0
    %1791 = vmatpush1.msra.mxu0 0.0
    %1792 = vmatprep.subr.mxu0 0.0
    %1793 = vmatpush1.msra.mxu0 0.0
    %1794 = vmatprep.subr.mxu0 0.0
    %1795 = vmatpush1.msra.mxu0 0.0
    %1796 = vmatprep.subr.mxu0 0.0
    %1797 = vmatpush1.msra.mxu0 0.0
    %1798 = vmatprep.subr.mxu0 0.0
    %1799 = vmatpush1.msra.mxu0 0.0
    %1800 = vmatprep.subr.mxu0 0.0
    %1801 = vmatpush1.msra.mxu0 0.0
    %1802 = vmatprep.subr.mxu0 0.0
    %1803 = vmatpush1.msra.mxu0 0.0
    %1804 = vmatprep.subr.mxu0 0.0
    %1805 = vmatpush1.msra.mxu0 0.0
    %1806 = vmatprep.subr.mxu0 0.0
    %1807 = vmatpush1.msra.mxu0 0.0
    %1808 = vmatprep.subr.mxu0 0.0
    %1809 = vmatpush1.msra.mxu0 0.0
    %1810 = vmatprep.subr.mxu0 0.0
    %1811 = vmatpush1.msra.mxu0 0.0
    %1812 = vmatprep.subr.mxu0 0.0
    %1813 = vmatpush1.msra.mxu0 0.0
    %1814 = vmatprep.subr.mxu0 0.0
    %1815 = vmatpush1.msra.mxu0 0.0
    %1816 = vmatprep.subr.mxu0 0.0
    %1817 = vmatpush1.msra.mxu0 0.0
    %1818 = vmatprep.subr.mxu0 0.0
    %1819 = vmatpush1.msra.mxu0 0.0
    %1820 = vmatprep.subr.mxu0 0.0
    %1821 = vmatpush1.msra.mxu0 0.0
    %1822 = vmatprep.subr.mxu0 0.0
    %1823 = vmatpush1.msra.mxu0 0.0
    %1824 = vmatprep.subr.mxu0 0.0
    %1825 = vmatpush1.msra.mxu0 0.0
    %1826 = vmatprep.subr.mxu0 0.0
    %1827 = vmatpush1.msra.mxu0 0.0
    %1828 = vmatprep.mubr.f32.mxu0 0.0
    %1829 = vmatmul.mubr.f32.gmra.mrb[0].mxu0 %v1762
    %v1830 = vpop.f32.mrb[0].mxu0
    %v1831 = vadd.f32 0.0, %v1830
    %v1832 = vpop.f32.mrb[0].mxu0
    %1833 = vdwg.mxu0
    %v1835 = vsel %vm681, %v1755, 0
    %v1838 = vsel %vm681, %v1831, 0
    %1840 = vmatprep.subr.mxu0 0.0
    %1841 = vmatpush1.msra.mxu0 %v674
    %1842 = vmatprep.subr.mxu0 0.0
    %1843 = vmatpush1.msra.mxu0 0.0
    %1844 = vmatprep.subr.mxu0 0.0
    %1845 = vmatpush1.msra.mxu0 0.0
    %1846 = vmatprep.subr.mxu0 0.0
    %1847 = vmatpush1.msra.mxu0 0.0
    %1848 = vmatprep.subr.mxu0 0.0
    %1849 = vmatpush1.msra.mxu0 0.0
    %1850 = vmatprep.subr.mxu0 0.0
    %1851 = vmatpush1.msra.mxu0 0.0
    %1852 = vmatprep.subr.mxu0 0.0
    %1853 = vmatpush1.msra.mxu0 0.0
    %1854 = vmatprep.subr.mxu0 0.0
    %1855 = vmatpush1.msra.mxu0 0.0
    %1856 = vmatprep.subr.mxu0 0.0
    %1857 = vmatpush1.msra.mxu0 0.0
    %1858 = vmatprep.subr.mxu0 0.0
    %1859 = vmatpush1.msra.mxu0 0.0
    %1860 = vmatprep.subr.mxu0 0.0
    %1861 = vmatpush1.msra.mxu0 0.0
    %1862 = vmatprep.subr.mxu0 0.0
    %1863 = vmatpush1.msra.mxu0 0.0
    %1864 = vmatprep.subr.mxu0 0.0
    %1865 = vmatpush1.msra.mxu0 0.0
    %1866 = vmatprep.subr.mxu0 0.0
    %1867 = vmatpush1.msra.mxu0 0.0
    %1868 = vmatprep.subr.mxu0 0.0
    %1869 = vmatpush1.msra.mxu0 0.0
    %1870 = vmatprep.subr.mxu0 0.0
    %1871 = vmatpush1.msra.mxu0 0.0
    %1872 = vmatprep.subr.mxu0 0.0
    %1873 = vmatpush1.msra.mxu0 0.0
    %1874 = vmatprep.subr.mxu0 0.0
    %1875 = vmatpush1.msra.mxu0 0.0
    %1876 = vmatprep.subr.mxu0 0.0
    %1877 = vmatpush1.msra.mxu0 0.0
    %1878 = vmatprep.subr.mxu0 0.0
    %1879 = vmatpush1.msra.mxu0 0.0
    %1880 = vmatprep.subr.mxu0 0.0
    %1881 = vmatpush1.msra.mxu0 0.0
    %1882 = vmatprep.subr.mxu0 0.0
    %1883 = vmatpush1.msra.mxu0 0.0
    %1884 = vmatprep.subr.mxu0 0.0
    %1885 = vmatpush1.msra.mxu0 0.0
    %1886 = vmatprep.subr.mxu0 0.0
    %1887 = vmatpush1.msra.mxu0 0.0
    %1888 = vmatprep.subr.mxu0 0.0
    %1889 = vmatpush1.msra.mxu0 0.0
    %1890 = vmatprep.subr.mxu0 0.0
    %1891 = vmatpush1.msra.mxu0 0.0
    %1892 = vmatprep.subr.mxu0 0.0
    %1893 = vmatpush1.msra.mxu0 0.0
    %1894 = vmatprep.subr.mxu0 0.0
    %1895 = vmatpush1.msra.mxu0 0.0
    %1896 = vmatprep.subr.mxu0 0.0
    %1897 = vmatpush1.msra.mxu0 0.0
    %1898 = vmatprep.subr.mxu0 0.0
    %1899 = vmatpush1.msra.mxu0 0.0
    %1900 = vmatprep.subr.mxu0 0.0
    %1901 = vmatpush1.msra.mxu0 0.0
    %1902 = vmatprep.subr.mxu0 0.0
    %1903 = vmatpush1.msra.mxu0 0.0
    %1904 = vmatprep.mubr.f32.mxu0 0.0
    %1905 = vmatmul.mubr.f32.gmra.mrb[0].mxu0 %v1835
    %v1906 = vpop.f32.mrb[0].mxu0
    %v1907 = vadd.f32 0.0, %v1906
    %v1908 = vpop.f32.mrb[0].mxu0
    %1909 = vmatprep.mubr.f32.mxu0 0.0
    %1910 = vmatmul.mubr.f32.gmra.mrb[0].mxu0 %v1838
    %v1911 = vpop.f32.mrb[0].mxu0
    %v1912 = vadd.f32 0.0, %v1911
    %v1913 = vpop.f32.mrb[0].mxu0
    %1914 = vdwg.mxu0
    %v1915 = vadd.f32 %v1494, %v1907
    %v1916 = vadd.f32 %v1499, %v1912
    %1917 = vrot.lane.b32.xlu0 %v479, 104
    %v1918 = vpop.permute.xlu0 %1917
    %1919 = vrot.lane.b32.xlu0 %v573, 104
    %v1920 = vpop.permute.xlu0 %1919
    %v1921 = vsel %vm681, %v1918, 0
    %v1923 = vsel %vm681, %v1920, 0
    %1925 = vmatprep.subr.mxu0 0.0
    %1926 = vmatpush1.xpose.msra.mxu0 %v1923
    %1927 = vmatprep.subr.mxu0 0.0
    %1928 = vmatpush1.xpose.msra.mxu0 0.0
    %1929 = vmatprep.subr.mxu0 0.0
    %1930 = vmatpush1.xpose.msra.mxu0 0.0
    %1931 = vmatprep.subr.mxu0 0.0
    %1932 = vmatpush1.xpose.msra.mxu0 0.0
    %1933 = vmatprep.subr.mxu0 0.0
    %1934 = vmatpush1.xpose.msra.mxu0 0.0
    %1935 = vmatprep.subr.mxu0 0.0
    %1936 = vmatpush1.xpose.msra.mxu0 0.0
    %1937 = vmatprep.subr.mxu0 0.0
    %1938 = vmatpush1.xpose.msra.mxu0 0.0
    %1939 = vmatprep.subr.mxu0 0.0
    %1940 = vmatpush1.xpose.msra.mxu0 0.0
    %1941 = vmatprep.subr.mxu0 0.0
    %1942 = vmatpush1.xpose.msra.mxu0 0.0
    %1943 = vmatprep.subr.mxu0 0.0
    %1944 = vmatpush1.xpose.msra.mxu0 0.0
    %1945 = vmatprep.subr.mxu0 0.0
    %1946 = vmatpush1.xpose.msra.mxu0 0.0
    %1947 = vmatprep.subr.mxu0 0.0
    %1948 = vmatpush1.xpose.msra.mxu0 0.0
    %1949 = vmatprep.subr.mxu0 0.0
    %1950 = vmatpush1.xpose.msra.mxu0 0.0
    %1951 = vmatprep.subr.mxu0 0.0
    %1952 = vmatpush1.xpose.msra.mxu0 0.0
    %1953 = vmatprep.subr.mxu0 0.0
    %1954 = vmatpush1.xpose.msra.mxu0 0.0
    %1955 = vmatprep.subr.mxu0 0.0
    %1956 = vmatpush1.xpose.msra.mxu0 0.0
    %1957 = vmatprep.subr.mxu0 0.0
    %1958 = vmatpush1.xpose.msra.mxu0 0.0
    %1959 = vmatprep.subr.mxu0 0.0
    %1960 = vmatpush1.xpose.msra.mxu0 0.0
    %1961 = vmatprep.subr.mxu0 0.0
    %1962 = vmatpush1.xpose.msra.mxu0 0.0
    %1963 = vmatprep.subr.mxu0 0.0
    %1964 = vmatpush1.xpose.msra.mxu0 0.0
    %1965 = vmatprep.subr.mxu0 0.0
    %1966 = vmatpush1.xpose.msra.mxu0 0.0
    %1967 = vmatprep.subr.mxu0 0.0
    %1968 = vmatpush1.xpose.msra.mxu0 0.0
    %1969 = vmatprep.subr.mxu0 0.0
    %1970 = vmatpush1.xpose.msra.mxu0 0.0
    %1971 = vmatprep.subr.mxu0 0.0
    %1972 = vmatpush1.xpose.msra.mxu0 0.0
    %1973 = vmatprep.subr.mxu0 0.0
    %1974 = vmatpush1.xpose.msra.mxu0 0.0
    %1975 = vmatprep.subr.mxu0 0.0
    %1976 = vmatpush1.xpose.msra.mxu0 0.0
    %1977 = vmatprep.subr.mxu0 0.0
    %1978 = vmatpush1.xpose.msra.mxu0 0.0
    %1979 = vmatprep.subr.mxu0 0.0
    %1980 = vmatpush1.xpose.msra.mxu0 0.0
    %1981 = vmatprep.subr.mxu0 0.0
    %1982 = vmatpush1.xpose.msra.mxu0 0.0
    %1983 = vmatprep.subr.mxu0 0.0
    %1984 = vmatpush1.xpose.msra.mxu0 0.0
    %1985 = vmatprep.subr.mxu0 0.0
    %1986 = vmatpush1.xpose.msra.mxu0 0.0
    %1987 = vmatprep.subr.mxu0 0.0
    %1988 = vmatpush1.xpose.msra.mxu0 0.0
    %1989 = vmatprep.mubr.f32.mxu0 0.0
    %1990 = vmatmul.mubr.f32.gmra.mrb[0].mxu0 %v1921
    %v1991 = vpop.f32.mrb[0].mxu0
    %v1992 = vadd.f32 0.0, %v1991
    %v1993 = vpop.f32.mrb[0].mxu0
    %1994 = vdwg.mxu0
    %1995 = vrot.lane.b32.xlu0 %v484, 104
    %v1996 = vpop.permute.xlu0 %1995
    %1997 = vrot.lane.b32.xlu0 %v578, 104
    %v1998 = vpop.permute.xlu0 %1997
    %v1999 = vsel %vm681, %v1996, 0
    %v2001 = vsel %vm681, %v1998, 0
    %2003 = vmatprep.subr.mxu0 0.0
    %2004 = vmatpush1.xpose.msra.mxu0 %v2001
    %2005 = vmatprep.subr.mxu0 0.0
    %2006 = vmatpush1.xpose.msra.mxu0 0.0
    %2007 = vmatprep.subr.mxu0 0.0
    %2008 = vmatpush1.xpose.msra.mxu0 0.0
    %2009 = vmatprep.subr.mxu0 0.0
    %2010 = vmatpush1.xpose.msra.mxu0 0.0
    %2011 = vmatprep.subr.mxu0 0.0
    %2012 = vmatpush1.xpose.msra.mxu0 0.0
    %2013 = vmatprep.subr.mxu0 0.0
    %2014 = vmatpush1.xpose.msra.mxu0 0.0
    %2015 = vmatprep.subr.mxu0 0.0
    %2016 = vmatpush1.xpose.msra.mxu0 0.0
    %2017 = vmatprep.subr.mxu0 0.0
    %2018 = vmatpush1.xpose.msra.mxu0 0.0
    %2019 = vmatprep.subr.mxu0 0.0
    %2020 = vmatpush1.xpose.msra.mxu0 0.0
    %2021 = vmatprep.subr.mxu0 0.0
    %2022 = vmatpush1.xpose.msra.mxu0 0.0
    %2023 = vmatprep.subr.mxu0 0.0
    %2024 = vmatpush1.xpose.msra.mxu0 0.0
    %2025 = vmatprep.subr.mxu0 0.0
    %2026 = vmatpush1.xpose.msra.mxu0 0.0
    %2027 = vmatprep.subr.mxu0 0.0
    %2028 = vmatpush1.xpose.msra.mxu0 0.0
    %2029 = vmatprep.subr.mxu0 0.0
    %2030 = vmatpush1.xpose.msra.mxu0 0.0
    %2031 = vmatprep.subr.mxu0 0.0
    %2032 = vmatpush1.xpose.msra.mxu0 0.0
    %2033 = vmatprep.subr.mxu0 0.0
    %2034 = vmatpush1.xpose.msra.mxu0 0.0
    %2035 = vmatprep.subr.mxu0 0.0
    %2036 = vmatpush1.xpose.msra.mxu0 0.0
    %2037 = vmatprep.subr.mxu0 0.0
    %2038 = vmatpush1.xpose.msra.mxu0 0.0
    %2039 = vmatprep.subr.mxu0 0.0
    %2040 = vmatpush1.xpose.msra.mxu0 0.0
    %2041 = vmatprep.subr.mxu0 0.0
    %2042 = vmatpush1.xpose.msra.mxu0 0.0
    %2043 = vmatprep.subr.mxu0 0.0
    %2044 = vmatpush1.xpose.msra.mxu0 0.0
    %2045 = vmatprep.subr.mxu0 0.0
    %2046 = vmatpush1.xpose.msra.mxu0 0.0
    %2047 = vmatprep.subr.mxu0 0.0
    %2048 = vmatpush1.xpose.msra.mxu0 0.0
    %2049 = vmatprep.subr.mxu0 0.0
    %2050 = vmatpush1.xpose.msra.mxu0 0.0
    %2051 = vmatprep.subr.mxu0 0.0
    %2052 = vmatpush1.xpose.msra.mxu0 0.0
    %2053 = vmatprep.subr.mxu0 0.0
    %2054 = vmatpush1.xpose.msra.mxu0 0.0
    %2055 = vmatprep.subr.mxu0 0.0
    %2056 = vmatpush1.xpose.msra.mxu0 0.0
    %2057 = vmatprep.subr.mxu0 0.0
    %2058 = vmatpush1.xpose.msra.mxu0 0.0
    %2059 = vmatprep.subr.mxu0 0.0
    %2060 = vmatpush1.xpose.msra.mxu0 0.0
    %2061 = vmatprep.subr.mxu0 0.0
    %2062 = vmatpush1.xpose.msra.mxu0 0.0
    %2063 = vmatprep.subr.mxu0 0.0
    %2064 = vmatpush1.xpose.msra.mxu0 0.0
    %2065 = vmatprep.subr.mxu0 0.0
    %2066 = vmatpush1.xpose.msra.mxu0 0.0
    %2067 = vmatprep.mubr.f32.mxu0 0.0
    %2068 = vmatmul.mubr.f32.gmra.mrb[0].mxu0 %v1999
    %v2069 = vpop.f32.mrb[0].mxu0
    %v2070 = vadd.f32 0.0, %v2069
    %v2071 = vpop.f32.mrb[0].mxu0
    %2072 = vdwg.mxu0
    %v2073 = vsel %vm835, -1e+30, %v1992
    %v2074 = vsel %vm835, -1e+30, %v2070
    %v2075 = vsel %vm681, %v2073, -inf
    %2076 = vmax.xlane.f32.xlu0 %v2075
    %v2077 = vpop.xlane.xlu0 %2076
    %v2078 = vsel %vm681, %v2074, -inf
    %2079 = vmax.xlane.f32.xlu0 %v2078
    %v2080 = vpop.xlane.xlu0 %2079
    %v2081 = vsub.f32 %v2073, %v2077
    %v2082 = vsub.f32 %v2074, %v2080
    %v2083 = vmul.f32 %v2081, 1.442695
    %v2084 = vpow.pop %v2083
    %v2085 = vmul.f32 %v2082, 1.442695
    %v2086 = vpow.pop %v2085
    %v2087 = vsel %vm681, %v2084, 0.0
    %2088 = vadd.xlane.f32.xlu0 %v2087
    %v2089 = vpop.xlane.xlu0 %2088
    %v2090 = vsel %vm681, %v2086, 0.0
    %2091 = vadd.xlane.f32.xlu0 %v2090
    %v2092 = vpop.xlane.xlu0 %2091
    %v2093 = vrcp.pop %v2089
    %v2094 = vrcp.pop %v2092
    %v2095 = vmul.f32 %v2084, %v2093
    %v2096 = vmul.f32 %v2086, %v2094
    %2097 = vrot.lane.b32.xlu0 %v663, 104
    %v2098 = vpop.permute.xlu0 %2097
    %v2101 = vsel %vm681, %v2095, 0
    %2103 = vmatprep.subr.mxu0 0.0
    %2104 = vmatpush1.msra.mxu0 %v2098
    %2105 = vmatprep.subr.mxu0 0.0
    %2106 = vmatpush1.msra.mxu0 0.0
    %2107 = vmatprep.subr.mxu0 0.0
    %2108 = vmatpush1.msra.mxu0 0.0
    %2109 = vmatprep.subr.mxu0 0.0
    %2110 = vmatpush1.msra.mxu0 0.0
    %2111 = vmatprep.subr.mxu0 0.0
    %2112 = vmatpush1.msra.mxu0 0.0
    %2113 = vmatprep.subr.mxu0 0.0
    %2114 = vmatpush1.msra.mxu0 0.0
    %2115 = vmatprep.subr.mxu0 0.0
    %2116 = vmatpush1.msra.mxu0 0.0
    %2117 = vmatprep.subr.mxu0 0.0
    %2118 = vmatpush1.msra.mxu0 0.0
    %2119 = vmatprep.subr.mxu0 0.0
    %2120 = vmatpush1.msra.mxu0 0.0
    %2121 = vmatprep.subr.mxu0 0.0
    %2122 = vmatpush1.msra.mxu0 0.0
    %2123 = vmatprep.subr.mxu0 0.0
    %2124 = vmatpush1.msra.mxu0 0.0
    %2125 = vmatprep.subr.mxu0 0.0
    %2126 = vmatpush1.msra.mxu0 0.0
    %2127 = vmatprep.subr.mxu0 0.0
    %2128 = vmatpush1.msra.mxu0 0.0
    %2129 = vmatprep.subr.mxu0 0.0
    %2130 = vmatpush1.msra.mxu0 0.0
    %2131 = vmatprep.subr.mxu0 0.0
    %2132 = vmatpush1.msra.mxu0 0.0
    %2133 = vmatprep.subr.mxu0 0.0
    %2134 = vmatpush1.msra.mxu0 0.0
    %2135 = vmatprep.subr.mxu0 0.0
    %2136 = vmatpush1.msra.mxu0 0.0
    %2137 = vmatprep.subr.mxu0 0.0
    %2138 = vmatpush1.msra.mxu0 0.0
    %2139 = vmatprep.subr.mxu0 0.0
    %2140 = vmatpush1.msra.mxu0 0.0
    %2141 = vmatprep.subr.mxu0 0.0
    %2142 = vmatpush1.msra.mxu0 0.0
    %2143 = vmatprep.subr.mxu0 0.0
    %2144 = vmatpush1.msra.mxu0 0.0
    %2145 = vmatprep.subr.mxu0 0.0
    %2146 = vmatpush1.msra.mxu0 0.0
    %2147 = vmatprep.subr.mxu0 0.0
    %2148 = vmatpush1.msra.mxu0 0.0
    %2149 = vmatprep.subr.mxu0 0.0
    %2150 = vmatpush1.msra.mxu0 0.0
    %2151 = vmatprep.subr.mxu0 0.0
    %2152 = vmatpush1.msra.mxu0 0.0
    %2153 = vmatprep.subr.mxu0 0.0
    %2154 = vmatpush1.msra.mxu0 0.0
    %2155 = vmatprep.subr.mxu0 0.0
    %2156 = vmatpush1.msra.mxu0 0.0
    %2157 = vmatprep.subr.mxu0 0.0
    %2158 = vmatpush1.msra.mxu0 0.0
    %2159 = vmatprep.subr.mxu0 0.0
    %2160 = vmatpush1.msra.mxu0 0.0
    %2161 = vmatprep.subr.mxu0 0.0
    %2162 = vmatpush1.msra.mxu0 0.0
    %2163 = vmatprep.subr.mxu0 0.0
    %2164 = vmatpush1.msra.mxu0 0.0
    %2165 = vmatprep.subr.mxu0 0.0
    %2166 = vmatpush1.msra.mxu0 0.0
    %2167 = vmatprep.mubr.f32.mxu0 0.0
    %2168 = vmatmul.mubr.f32.gmra.mrb[0].mxu0 %v2101
    %v2169 = vpop.f32.mrb[0].mxu0
    %v2170 = vadd.f32 0.0, %v2169
    %v2171 = vpop.f32.mrb[0].mxu0
    %2172 = vdwg.mxu0
    %2173 = vrot.lane.b32.xlu0 %v668, 104
    %v2174 = vpop.permute.xlu0 %2173
    %v2177 = vsel %vm681, %v2096, 0
    %2179 = vmatprep.subr.mxu0 0.0
    %2180 = vmatpush1.msra.mxu0 %v2174
    %2181 = vmatprep.subr.mxu0 0.0
    %2182 = vmatpush1.msra.mxu0 0.0
    %2183 = vmatprep.subr.mxu0 0.0
    %2184 = vmatpush1.msra.mxu0 0.0
    %2185 = vmatprep.subr.mxu0 0.0
    %2186 = vmatpush1.msra.mxu0 0.0
    %2187 = vmatprep.subr.mxu0 0.0
    %2188 = vmatpush1.msra.mxu0 0.0
    %2189 = vmatprep.subr.mxu0 0.0
    %2190 = vmatpush1.msra.mxu0 0.0
    %2191 = vmatprep.subr.mxu0 0.0
    %2192 = vmatpush1.msra.mxu0 0.0
    %2193 = vmatprep.subr.mxu0 0.0
    %2194 = vmatpush1.msra.mxu0 0.0
    %2195 = vmatprep.subr.mxu0 0.0
    %2196 = vmatpush1.msra.mxu0 0.0
    %2197 = vmatprep.subr.mxu0 0.0
    %2198 = vmatpush1.msra.mxu0 0.0
    %2199 = vmatprep.subr.mxu0 0.0
    %2200 = vmatpush1.msra.mxu0 0.0
    %2201 = vmatprep.subr.mxu0 0.0
    %2202 = vmatpush1.msra.mxu0 0.0
    %2203 = vmatprep.subr.mxu0 0.0
    %2204 = vmatpush1.msra.mxu0 0.0
    %2205 = vmatprep.subr.mxu0 0.0
    %2206 = vmatpush1.msra.mxu0 0.0
    %2207 = vmatprep.subr.mxu0 0.0
    %2208 = vmatpush1.msra.mxu0 0.0
    %2209 = vmatprep.subr.mxu0 0.0
    %2210 = vmatpush1.msra.mxu0 0.0
    %2211 = vmatprep.subr.mxu0 0.0
    %2212 = vmatpush1.msra.mxu0 0.0
    %2213 = vmatprep.subr.mxu0 0.0
    %2214 = vmatpush1.msra.mxu0 0.0
    %2215 = vmatprep.subr.mxu0 0.0
    %2216 = vmatpush1.msra.mxu0 0.0
    %2217 = vmatprep.subr.mxu0 0.0
    %2218 = vmatpush1.msra.mxu0 0.0
    %2219 = vmatprep.subr.mxu0 0.0
    %2220 = vmatpush1.msra.mxu0 0.0
    %2221 = vmatprep.subr.mxu0 0.0
    %2222 = vmatpush1.msra.mxu0 0.0
    %2223 = vmatprep.subr.mxu0 0.0
    %2224 = vmatpush1.msra.mxu0 0.0
    %2225 = vmatprep.subr.mxu0 0.0
    %2226 = vmatpush1.msra.mxu0 0.0
    %2227 = vmatprep.subr.mxu0 0.0
    %2228 = vmatpush1.msra.mxu0 0.0
    %2229 = vmatprep.subr.mxu0 0.0
    %2230 = vmatpush1.msra.mxu0 0.0
    %2231 = vmatprep.subr.mxu0 0.0
    %2232 = vmatpush1.msra.mxu0 0.0
    %2233 = vmatprep.subr.mxu0 0.0
    %2234 = vmatpush1.msra.mxu0 0.0
    %2235 = vmatprep.subr.mxu0 0.0
    %2236 = vmatpush1.msra.mxu0 0.0
    %2237 = vmatprep.subr.mxu0 0.0
    %2238 = vmatpush1.msra.mxu0 0.0
    %2239 = vmatprep.subr.mxu0 0.0
    %2240 = vmatpush1.msra.mxu0 0.0
    %2241 = vmatprep.subr.mxu0 0.0
    %2242 = vmatpush1.msra.mxu0 0.0
    %2243 = vmatprep.mubr.f32.mxu0 0.0
    %2244 = vmatmul.mubr.f32.gmra.mrb[0].mxu0 %v2177
    %v2245 = vpop.f32.mrb[0].mxu0
    %v2246 = vadd.f32 0.0, %v2245
    %v2247 = vpop.f32.mrb[0].mxu0
    %2248 = vdwg.mxu0
    %v2250 = vsel %vm681, %v2170, 0
    %v2253 = vsel %vm681, %v2246, 0
    %2255 = vmatprep.subr.mxu0 0.0
    %2256 = vmatpush1.msra.mxu0 %v675
    %2257 = vmatprep.subr.mxu0 0.0
    %2258 = vmatpush1.msra.mxu0 0.0
    %2259 = vmatprep.subr.mxu0 0.0
    %2260 = vmatpush1.msra.mxu0 0.0
    %2261 = vmatprep.subr.mxu0 0.0
    %2262 = vmatpush1.msra.mxu0 0.0
    %2263 = vmatprep.subr.mxu0 0.0
    %2264 = vmatpush1.msra.mxu0 0.0
    %2265 = vmatprep.subr.mxu0 0.0
    %2266 = vmatpush1.msra.mxu0 0.0
    %2267 = vmatprep.subr.mxu0 0.0
    %2268 = vmatpush1.msra.mxu0 0.0
    %2269 = vmatprep.subr.mxu0 0.0
    %2270 = vmatpush1.msra.mxu0 0.0
    %2271 = vmatprep.subr.mxu0 0.0
    %2272 = vmatpush1.msra.mxu0 0.0
    %2273 = vmatprep.subr.mxu0 0.0
    %2274 = vmatpush1.msra.mxu0 0.0
    %2275 = vmatprep.subr.mxu0 0.0
    %2276 = vmatpush1.msra.mxu0 0.0
    %2277 = vmatprep.subr.mxu0 0.0
    %2278 = vmatpush1.msra.mxu0 0.0
    %2279 = vmatprep.subr.mxu0 0.0
    %2280 = vmatpush1.msra.mxu0 0.0
    %2281 = vmatprep.subr.mxu0 0.0
    %2282 = vmatpush1.msra.mxu0 0.0
    %2283 = vmatprep.subr.mxu0 0.0
    %2284 = vmatpush1.msra.mxu0 0.0
    %2285 = vmatprep.subr.mxu0 0.0
    %2286 = vmatpush1.msra.mxu0 0.0
    %2287 = vmatprep.subr.mxu0 0.0
    %2288 = vmatpush1.msra.mxu0 0.0
    %2289 = vmatprep.subr.mxu0 0.0
    %2290 = vmatpush1.msra.mxu0 0.0
    %2291 = vmatprep.subr.mxu0 0.0
    %2292 = vmatpush1.msra.mxu0 0.0
    %2293 = vmatprep.subr.mxu0 0.0
    %2294 = vmatpush1.msra.mxu0 0.0
    %2295 = vmatprep.subr.mxu0 0.0
    %2296 = vmatpush1.msra.mxu0 0.0
    %2297 = vmatprep.subr.mxu0 0.0
    %2298 = vmatpush1.msra.mxu0 0.0
    %2299 = vmatprep.subr.mxu0 0.0
    %2300 = vmatpush1.msra.mxu0 0.0
    %2301 = vmatprep.subr.mxu0 0.0
    %2302 = vmatpush1.msra.mxu0 0.0
    %2303 = vmatprep.subr.mxu0 0.0
    %2304 = vmatpush1.msra.mxu0 0.0
    %2305 = vmatprep.subr.mxu0 0.0
    %2306 = vmatpush1.msra.mxu0 0.0
    %2307 = vmatprep.subr.mxu0 0.0
    %2308 = vmatpush1.msra.mxu0 0.0
    %2309 = vmatprep.subr.mxu0 0.0
    %2310 = vmatpush1.msra.mxu0 0.0
    %2311 = vmatprep.subr.mxu0 0.0
    %2312 = vmatpush1.msra.mxu0 0.0
    %2313 = vmatprep.subr.mxu0 0.0
    %2314 = vmatpush1.msra.mxu0 0.0
    %2315 = vmatprep.subr.mxu0 0.0
    %2316 = vmatpush1.msra.mxu0 0.0
    %2317 = vmatprep.subr.mxu0 0.0
    %2318 = vmatpush1.msra.mxu0 0.0
    %2319 = vmatprep.mubr.f32.mxu0 0.0
    %2320 = vmatmul.mubr.f32.gmra.mrb[0].mxu0 %v2250
    %v2321 = vpop.f32.mrb[0].mxu0
    %v2322 = vadd.f32 0.0, %v2321
    %v2323 = vpop.f32.mrb[0].mxu0
    %2324 = vmatprep.mubr.f32.mxu0 0.0
    %2325 = vmatmul.mubr.f32.gmra.mrb[0].mxu0 %v2253
    %v2326 = vpop.f32.mrb[0].mxu0
    %v2327 = vadd.f32 0.0, %v2326
    %v2328 = vpop.f32.mrb[0].mxu0
    %2329 = vdwg.mxu0
    %v2330 = vadd.f32 %v1915, %v2322
    %v2331 = vadd.f32 %v1916, %v2327
    %v2332 = vlaneseq
    %v2333 = vshrl.u32 %v2332, 7
    %v2334 = vsub.s32 0, %v2333
    %v2335 = vrot.slane %v98, %v2334
    %v2336 = vadd.f32 %v2330, %v2335
    %v2337 = vadd.f32 %v2331, %v2335
    %v2338 = vsel %vm107, %v2336, 0.0
    %2339 = vadd.xlane.f32.xlu0 %v2338
    %v2340 = vpop.xlane.xlu0 %2339
    %v2341 = vsel %vm107, %v2337, 0.0
    %2342 = vadd.xlane.f32.xlu0 %v2341
    %v2343 = vpop.xlane.xlu0 %2342
    %v2344 = vmul.f32 %v2340, %v195
    %v2345 = vmul.f32 %v2343, %v195
    %v2346 = vsub.f32 %v2336, %v2344
    %v2347 = vsub.f32 %v2337, %v2345
    %v2348 = vmul.f32 %v2346, %v2346
    %v2349 = vmul.f32 %v2347, %v2347
    %v2350 = vsel %vm107, %v2348, 0.0
    %2351 = vadd.xlane.f32.xlu0 %v2350
    %v2352 = vpop.xlane.xlu0 %2351
    %v2353 = vsel %vm107, %v2349, 0.0
    %2354 = vadd.xlane.f32.xlu0 %v2353
    %v2355 = vpop.xlane.xlu0 %2354
    %v2356 = vmul.f32 %v2352, %v195
    %v2357 = vmul.f32 %v2355, %v195
    %v2358 = vadd.f32 %v2356, 1e-05
    %v2359 = vadd.f32 %v2357, 1e-05
    %v2360 = vrsqrt.pop %v2358
    %v2361 = vrsqrt.pop %v2359
    %v2362 = vmul.f32 %v2346, %v2360
    %v2363 = vmul.f32 %v2347, %v2361
    %v2364 = vmul.f32 %v2362, %v219
    %v2365 = vmul.f32 %v2363, %v219
    %v2366 = vadd.f32 %v2364, %v225
    %v2367 = vadd.f32 %v2365, %v225
    %v2368 = vadd.f32 %v2366, %v395
    %v2369 = vadd.f32 %v2367, %v396
    %s2370 = scalar_lea.vmem [#allocation8], 160
    %v2371 = vld [vmem:[%s2370] sm:$0xff]
    %v2372 = vld [vmem:[%s2370 + $0x8] sm:$0xff]
    %v2373 = vld [vmem:[%s2370 + $0x10] sm:$0xff]
    %v2374 = vld [vmem:[%s2370 + $0x18] sm:$0xff]
    %v2375 = vlaneseq
    %v2376 = vshrl.u32 %v2375, 7
    %v2377 = vsub.s32 0, %v2376
    %v2378 = vrot.slane %v99, %v2377
    %v2380 = vsel %vm107, %v2368, 0
    %v2383 = vsel %vm107, %v2369, 0
    %2385 = vmatprep.subr.mxu0 0.0
    %2386 = vmatpush1.msra.mxu0 %v2371
    %2387 = vmatprep.subr.mxu0 0.0
    %2388 = vmatpush1.msra.mxu0 %v2372
    %2389 = vmatprep.subr.mxu0 0.0
    %2390 = vmatpush1.msra.mxu0 %v2373
    %2391 = vmatprep.subr.mxu0 0.0
    %2392 = vmatpush1.msra.mxu0 %v2374
    %2393 = vmatprep.subr.mxu0 0.0
    %2394 = vmatpush1.msra.mxu0 0.0
    %2395 = vmatprep.subr.mxu0 0.0
    %2396 = vmatpush1.msra.mxu0 0.0
    %2397 = vmatprep.subr.mxu0 0.0
    %2398 = vmatpush1.msra.mxu0 0.0
    %2399 = vmatprep.subr.mxu0 0.0
    %2400 = vmatpush1.msra.mxu0 0.0
    %2401 = vmatprep.subr.mxu0 0.0
    %2402 = vmatpush1.msra.mxu0 0.0
    %2403 = vmatprep.subr.mxu0 0.0
    %2404 = vmatpush1.msra.mxu0 0.0
    %2405 = vmatprep.subr.mxu0 0.0
    %2406 = vmatpush1.msra.mxu0 0.0
    %2407 = vmatprep.subr.mxu0 0.0
    %2408 = vmatpush1.msra.mxu0 0.0
    %2409 = vmatprep.subr.mxu0 0.0
    %2410 = vmatpush1.msra.mxu0 0.0
    %2411 = vmatprep.subr.mxu0 0.0
    %2412 = vmatpush1.msra.mxu0 0.0
    %2413 = vmatprep.subr.mxu0 0.0
    %2414 = vmatpush1.msra.mxu0 0.0
    %2415 = vmatprep.subr.mxu0 0.0
    %2416 = vmatpush1.msra.mxu0 0.0
    %2417 = vmatprep.subr.mxu0 0.0
    %2418 = vmatpush1.msra.mxu0 0.0
    %2419 = vmatprep.subr.mxu0 0.0
    %2420 = vmatpush1.msra.mxu0 0.0
    %2421 = vmatprep.subr.mxu0 0.0
    %2422 = vmatpush1.msra.mxu0 0.0
    %2423 = vmatprep.subr.mxu0 0.0
    %2424 = vmatpush1.msra.mxu0 0.0
    %2425 = vmatprep.subr.mxu0 0.0
    %2426 = vmatpush1.msra.mxu0 0.0
    %2427 = vmatprep.subr.mxu0 0.0
    %2428 = vmatpush1.msra.mxu0 0.0
    %2429 = vmatprep.subr.mxu0 0.0
    %2430 = vmatpush1.msra.mxu0 0.0
    %2431 = vmatprep.subr.mxu0 0.0
    %2432 = vmatpush1.msra.mxu0 0.0
    %2433 = vmatprep.subr.mxu0 0.0
    %2434 = vmatpush1.msra.mxu0 0.0
    %2435 = vmatprep.subr.mxu0 0.0
    %2436 = vmatpush1.msra.mxu0 0.0
    %2437 = vmatprep.subr.mxu0 0.0
    %2438 = vmatpush1.msra.mxu0 0.0
    %2439 = vmatprep.subr.mxu0 0.0
    %2440 = vmatpush1.msra.mxu0 0.0
    %2441 = vmatprep.subr.mxu0 0.0
    %2442 = vmatpush1.msra.mxu0 0.0
    %2443 = vmatprep.subr.mxu0 0.0
    %2444 = vmatpush1.msra.mxu0 0.0
    %2445 = vmatprep.subr.mxu0 0.0
    %2446 = vmatpush1.msra.mxu0 0.0
    %2447 = vmatprep.subr.mxu0 0.0
    %2448 = vmatpush1.msra.mxu0 0.0
    %2449 = vmatprep.mubr.f32.mxu0 0.0
    %2450 = vmatmul.mubr.f32.gmra.mrb[0].mxu0 %v2380
    %v2451 = vpop.f32.mrb[0].mxu0
    %v2452 = vadd.f32 %v2378, %v2451
    %v2453 = vpop.f32.mrb[0].mxu0
    %2454 = vmatprep.mubr.f32.mxu0 0.0
    %2455 = vmatmul.mubr.f32.gmra.mrb[0].mxu0 %v2383
    %v2456 = vpop.f32.mrb[0].mxu0
    %v2457 = vadd.f32 %v2378, %v2456
    %v2458 = vpop.f32.mrb[0].mxu0
    %2459 = vdwg.mxu0
    %v2460 = vmax.f32 %v2452, 0.0
    %v2461 = vmax.f32 %v2457, 0.0
    %s2462 = scalar_lea.vmem [#allocation8], 192
    %v2463 = vld [vmem:[%s2462] sm:$0xff]
    %v2464 = vld [vmem:[%s2462 + $0x8] sm:$0xff]
    %v2465 = vld [vmem:[%s2462 + $0x10] sm:$0xff]
    %v2466 = vld [vmem:[%s2462 + $0x18] sm:$0xff]
    %v2467 = vlaneseq
    %v2468 = vshrl.u32 %v2467, 7
    %v2469 = vsub.s32 0, %v2468
    %v2470 = vrot.slane %v100, %v2469
    %v2472 = vsel %vm107, %v2460, 0
    %v2475 = vsel %vm107, %v2461, 0
    %2477 = vmatprep.subr.mxu0 0.0
    %2478 = vmatpush1.msra.mxu0 %v2463
    %2479 = vmatprep.subr.mxu0 0.0
    %2480 = vmatpush1.msra.mxu0 %v2464
    %2481 = vmatprep.subr.mxu0 0.0
    %2482 = vmatpush1.msra.mxu0 %v2465
    %2483 = vmatprep.subr.mxu0 0.0
    %2484 = vmatpush1.msra.mxu0 %v2466
    %2485 = vmatprep.subr.mxu0 0.0
    %2486 = vmatpush1.msra.mxu0 0.0
    %2487 = vmatprep.subr.mxu0 0.0
    %2488 = vmatpush1.msra.mxu0 0.0
    %2489 = vmatprep.subr.mxu0 0.0
    %2490 = vmatpush1.msra.mxu0 0.0
    %2491 = vmatprep.subr.mxu0 0.0
    %2492 = vmatpush1.msra.mxu0 0.0
    %2493 = vmatprep.subr.mxu0 0.0
    %2494 = vmatpush1.msra.mxu0 0.0
    %2495 = vmatprep.subr.mxu0 0.0
    %2496 = vmatpush1.msra.mxu0 0.0
    %2497 = vmatprep.subr.mxu0 0.0
    %2498 = vmatpush1.msra.mxu0 0.0
    %2499 = vmatprep.subr.mxu0 0.0
    %2500 = vmatpush1.msra.mxu0 0.0
    %2501 = vmatprep.subr.mxu0 0.0
    %2502 = vmatpush1.msra.mxu0 0.0
    %2503 = vmatprep.subr.mxu0 0.0
    %2504 = vmatpush1.msra.mxu0 0.0
    %2505 = vmatprep.subr.mxu0 0.0
    %2506 = vmatpush1.msra.mxu0 0.0
    %2507 = vmatprep.subr.mxu0 0.0
    %2508 = vmatpush1.msra.mxu0 0.0
    %2509 = vmatprep.subr.mxu0 0.0
    %2510 = vmatpush1.msra.mxu0 0.0
    %2511 = vmatprep.subr.mxu0 0.0
    %2512 = vmatpush1.msra.mxu0 0.0
    %2513 = vmatprep.subr.mxu0 0.0
    %2514 = vmatpush1.msra.mxu0 0.0
    %2515 = vmatprep.subr.mxu0 0.0
    %2516 = vmatpush1.msra.mxu0 0.0
    %2517 = vmatprep.subr.mxu0 0.0
    %2518 = vmatpush1.msra.mxu0 0.0
    %2519 = vmatprep.subr.mxu0 0.0
    %2520 = vmatpush1.msra.mxu0 0.0
    %2521 = vmatprep.subr.mxu0 0.0
    %2522 = vmatpush1.msra.mxu0 0.0
    %2523 = vmatprep.subr.mxu0 0.0
    %2524 = vmatpush1.msra.mxu0 0.0
    %2525 = vmatprep.subr.mxu0 0.0
    %2526 = vmatpush1.msra.mxu0 0.0
    %2527 = vmatprep.subr.mxu0 0.0
    %2528 = vmatpush1.msra.mxu0 0.0
    %2529 = vmatprep.subr.mxu0 0.0
    %2530 = vmatpush1.msra.mxu0 0.0
    %2531 = vmatprep.subr.mxu0 0.0
    %2532 = vmatpush1.msra.mxu0 0.0
    %2533 = vmatprep.subr.mxu0 0.0
    %2534 = vmatpush1.msra.mxu0 0.0
    %2535 = vmatprep.subr.mxu0 0.0
    %2536 = vmatpush1.msra.mxu0 0.0
    %2537 = vmatprep.subr.mxu0 0.0
    %2538 = vmatpush1.msra.mxu0 0.0
    %2539 = vmatprep.subr.mxu0 0.0
    %2540 = vmatpush1.msra.mxu0 0.0
    %2541 = vmatprep.mubr.f32.mxu0 0.0
    %2542 = vmatmul.mubr.f32.gmra.mrb[0].mxu0 %v2472
    %v2543 = vpop.f32.mrb[0].mxu0
    %v2544 = vadd.f32 %v2470, %v2543
    %v2545 = vpop.f32.mrb[0].mxu0
    %2546 = vmatprep.mubr.f32.mxu0 0.0
    %2547 = vmatmul.mubr.f32.gmra.mrb[0].mxu0 %v2475
    %v2548 = vpop.f32.mrb[0].mxu0
    %v2549 = vadd.f32 %v2470, %v2548
    %v2550 = vpop.f32.mrb[0].mxu0
    %2551 = vdwg.mxu0
    %v2552 = vadd.f32 %v2544, %v2368
    %v2553 = vadd.f32 %v2549, %v2369
    %v2554 = vlaneseq
    %v2555 = vshrl.u32 %v2554, 7
    %v2556 = vsub.s32 0, %v2555
    %v2557 = vrot.slane %v101, %v2556
    %v2558 = vmul.f32 %v2552, %v2557
    %v2559 = vmul.f32 %v2553, %v2557
    %v2560 = vsel %vm107, %v2558, 0.0
    %2561 = vadd.xlane.f32.xlu0 %v2560
    %v2562 = vpop.xlane.xlu0 %2561
    %v2563 = vsel %vm107, %v2559, 0.0
    %2564 = vadd.xlane.f32.xlu0 %v2563
    %v2565 = vpop.xlane.xlu0 %2564
    %s2567 = vtos %v102
    %v2568 = vstv %s2567
    %v2570 = vadd.f32 %v2562, %v2568
    %v2571 = vadd.f32 %v2565, %v2568
    %v2572 = vxor.u32 %v2570, 2147483648
    %v2573 = vxor.u32 %v2571, 2147483648
    %v2574 = vmul.f32 %v2572, 1.442695
    %v2575 = vpow.pop %v2574
    %v2576 = vmul.f32 %v2573, 1.442695
    %v2577 = vpow.pop %v2576
    %v2578 = vadd.f32 %v2575, 1.0
    %v2579 = vadd.f32 %v2577, 1.0
    %v2580 = vrcp.pop %v2578
    %v2581 = vmul.f32 1.0, %v2580
    %v2582 = vrcp.pop %v2579
    %v2583 = vmul.f32 1.0, %v2582
    %v2586 = vlaneseq
    %v2587 = vshrl.u32 %v2586, 7
    %v2588 = vsub.s32 %v679, %v2587
    %v2589 = vrot.slane %v2581, %v2588
    %v2590 = vlaneseq
    %v2591 = vshrl.u32 %v2590, 7
    %v2592 = vsub.s32 %v679, %v2591
    %v2593 = vrot.slane %v2583, %v2592
    %vm2594 = vcmask 1041409
    %v2595 = vsel %vm2594, %v2593, %v2589
    %vm2597 = vcmask 58368
    %2598 = vst.msk [vmem:[#allocation11] sm:$0x3] %vm2597, %v2595
    // Predicated region
    $region42: #{tpu_custom_call.1} parent=1 // pred_check
      _
    $region43: #{tpu_custom_call.1} parent=1 // pred_check_branch
      %2600 = sbr.rel (0) target = $region45
    $region44: #{tpu_custom_call.1} parent=1 // pred_region
      %s2602 = ssub.s32 32, 32
      %2603 = vsyncadd [#allocation4], %s2602
      %s2605 = sshll.u32 [#allocation11], 4
      %s2606 = int_to_ptr.vmem [resolvable:$true] %s2605
      %2608 = dma.vmem_to_hbm [thread:$0]  %s2606, 32, %s5, [#allocation4]
    $region45: #{tpu_custom_call.1} parent=1 // pred_fallthru
      _
    // Predicated region
    $region46: #{tpu_custom_call.1} parent=1 // pred_check
      _
    $region47: #{tpu_custom_call.1} parent=1 // pred_check_branch
      %2610 = sbr.rel (0) target = $region49
    $region48: #{tpu_custom_call.1} parent=1 // pred_region
      %2611 = dma.done [#allocation4], 32
    $region49: #{tpu_custom_call.1} parent=1 // pred_fallthru
      _
    %2612 = vsyncpa [#allocation3], 1
    %2613 = vsyncpa [#allocation6], 1
    %2614 = vsyncpa [#allocation9], 1
    %2615 = vsyncpa [#allocation4], 1

</llo_original>
